<compile_context>
chip_gen: v7x
topology: tpu7x:2x2x1
jax: 0.10.0
libtpu: 0.0.40
codegen_flags: <defaults>
</compile_context>

<pallas_src>
import jax
import jax.numpy as jnp
import numpy as np
from jax.experimental import pallas as pl
from jax.experimental.pallas import tpu as pltpu

EPS = 1e-5


def _round_up(x, m):
    return ((x + m - 1) // m) * m


# ----------------------------------------------------------------------------
# Parameter construction (deterministic, BN folded into scale/shift)
# ----------------------------------------------------------------------------
def _bn_fold(key, c):
    k1, k2, k3, k4 = jax.random.split(key, 4)
    gamma = 1.0 + 0.1 * jax.random.normal(k1, (c,), jnp.float32)
    beta = 0.1 * jax.random.normal(k2, (c,), jnp.float32)
    mean = 0.1 * jax.random.normal(k3, (c,), jnp.float32)
    var = 1.0 + 0.1 * jax.random.uniform(k4, (c,), jnp.float32)
    scale = gamma / jnp.sqrt(var + EPS)
    shift = beta - mean * scale
    return scale, shift


def _linear(key, cin, cout, bias=True):
    kw, kb = jax.random.split(key)
    w = 0.1 * jax.random.normal(kw, (cin, cout), jnp.float32)
    b = (0.1 * jax.random.normal(kb, (cout,), jnp.float32)
         if bias else jnp.zeros((cout,), jnp.float32))
    return w, b


def init_params(key, C, G):
    keys = jax.random.split(key, 24)
    p = {}
    # fc1 (bias=False) + norm1 folded
    w, _ = _linear(keys[0], C, C, bias=False)
    s, sh = _bn_fold(keys[1], C)
    p["w_fc1"], p["b_fc1"] = w * s[None, :], sh
    # linear_q = Linear + BN + ReLU (BN folded)
    w, b = _linear(keys[2], C, C)
    s, sh = _bn_fold(keys[3], C)
    p["w_q"], p["b_q"] = w * s[None, :], b * s + sh
    # linear_k
    w, b = _linear(keys[4], C, C)
    s, sh = _bn_fold(keys[5], C)
    p["w_k"], p["b_k"] = w * s[None, :], b * s + sh
    # linear_v (plain linear)
    p["w_v"], p["b_v"] = _linear(keys[6], C, C)
    # linear_p_multiplier: Linear(3,C)+BN folded, ReLU, Linear(C,C)
    w, b = _linear(keys[7], 3, C)
    s, sh = _bn_fold(keys[8], C)
    p["w_pm1"], p["b_pm1"] = w * s[None, :], b * s + sh
    p["w_pm2"], p["b_pm2"] = _linear(keys[9], C, C)
    # linear_p_bias
    w, b = _linear(keys[10], 3, C)
    s, sh = _bn_fold(keys[11], C)
    p["w_pb1"], p["b_pb1"] = w * s[None, :], b * s + sh
    p["w_pb2"], p["b_pb2"] = _linear(keys[12], C, C)
    # weight_encoding: Linear(C,G)+BN folded, ReLU, Linear(G,G)
    w, b = _linear(keys[13], C, G)
    s, sh = _bn_fold(keys[14], G)
    p["w_we1"], p["b_we1"] = w * s[None, :], b * s + sh
    p["w_we2"], p["b_we2"] = _linear(keys[15], G, G)
    # norm2 (applied to attention output)
    p["bn2_scale"], p["bn2_shift"] = _bn_fold(keys[16], C)
    # fc3 (bias=False) + norm3 folded
    w, _ = _linear(keys[17], C, C, bias=False)
    s, sh = _bn_fold(keys[18], C)
    p["w_fc3"], p["b_fc3"] = w * s[None, :], sh
    return p


# ----------------------------------------------------------------------------
# Host-side packing / fusion of parameters for the kernels
# ----------------------------------------------------------------------------
def _pack_params(p, C, G):
    I = C // G
    pk = {}
    # kernel A: fc1(+norm1) and fused [k | v] projection
    pk["w_fc1"] = p["w_fc1"]
    pk["b_fc1"] = p["b_fc1"].reshape(1, C)
    pk["w_kv"] = jnp.concatenate([p["w_k"], p["w_v"]], axis=1)            # [C, 2C]
    pk["b_kv"] = jnp.concatenate([p["b_k"], p["b_v"]]).reshape(1, 2 * C)
    # kernel B per-point f32 weights (cheap, T rows only): [fc1, q, fc3]
    pk["w_f32"] = jnp.stack([p["w_fc1"], p["w_q"], p["w_fc3"]])           # [3, C, C]
    # PE layer-1 weight rows (used as VPU FMAs) + both PE biases, packed (5, 2C) f32
    w_pe1 = jnp.concatenate([p["w_pm1"], p["w_pb1"]], axis=1)             # [3, 2C]
    b_pe1 = jnp.concatenate([p["b_pm1"], p["b_pb1"]]).reshape(1, 2 * C)
    b_pe2 = jnp.concatenate([p["b_pm2"], p["b_pb2"]]).reshape(1, 2 * C)
    pk["pe_pack"] = jnp.concatenate([w_pe1, b_pe1, b_pe2], axis=0)        # [5, 2C]
    # PE layer-2 block-diagonal weight [pm2 | pb2], bf16 MXU operand
    z = jnp.zeros((C, C), jnp.float32)
    pk["w_pe2"] = jnp.block([[p["w_pm2"], z], [z, p["w_pb2"]]]).astype(jnp.bfloat16)
    # weight-encoding with the group dim pre-expanded to C lanes, bf16 MXU operands
    # TODO(synk): for C > 128 keep the G-wide (padded) form instead of expanding.
    w_we1x = jnp.repeat(p["w_we1"], I, axis=1)                            # [C, C]
    b_we1x = jnp.repeat(p["b_we1"], I)                                    # [C]
    w_we2x = jnp.repeat(jnp.repeat(p["w_we2"], I, axis=1), I, axis=0) / I  # [C, C]
    b_we2x = jnp.repeat(p["b_we2"], I)                                    # [C]
    pk["w_bf16"] = jnp.stack([w_we1x, w_we2x]).astype(jnp.bfloat16)       # [2, C, C]
    # channel-wide bias/scale rows: [b_fc1, b_q, b_we1x, b_we2x, bn2_s, bn2_b, b_fc3]
    pk["bias_c"] = jnp.stack([p["b_fc1"], p["b_q"], b_we1x, b_we2x,
                              p["bn2_scale"], p["bn2_shift"], p["b_fc3"]])  # [7, C]
    return pk


def _pick_vmem_limit():
    # ~96 MiB usable on 128-MiB VMEM parts (v5e/v6e), ~48 MiB on v7x (64 MiB VMEM).
    try:
        cap = int(pltpu.get_tpu_info().vmem_capacity_bytes)
    except Exception:
        cap = 64 * 1024 * 1024
    return int(min(cap * 3 // 4, 100 * 1024 * 1024))


def _pick_tile(N, S, C, B, vmem_limit):
    """Largest row tile (multiple of 8, <=512) whose kernel-B footprint fits VMEM."""
    tn = min(512, _round_up(N, 8))
    if B == 1 and N > 8:
        # v7x has 2 TensorCores: keep >= 2 row tiles per batch when B == 1.
        tn = min(tn, max(8, _round_up((N + 1) // 2, 8)))

    def footprint(t):
        # double-buffered inputs/outputs + ~12 f32 (t, S, C) temps + weights (2 bufs)
        io = 2 * (t * C * 4 + t * S * 2 * C * 2 + t * S * 3 * 4 + t * C * 4)
        temps = 12 * t * S * C * 4
        wts = 2 * (3 * C * C * 4 + 2 * C * C * 2 + 4 * C * C * 2 + 17 * C * 4)
        return io + temps + wts

    while tn > 8 and footprint(tn) > int(0.6 * vmem_limit):
        tn = max(8, _round_up(tn // 2, 8))
    return tn


# ----------------------------------------------------------------------------
# Kernel A: fused  relu(norm1(fc1(x)))  ->  single bf16 [relu(k) | v] slab
# ----------------------------------------------------------------------------
def _kv_kernel(x_ref, wf_ref, bf_ref, wkv_ref, bkv_ref, kv_ref):
    C = x_ref.shape[-1]
    x = x_ref[...]                                                    # (tn, C) f32
    h = jnp.maximum(
        jnp.dot(x, wf_ref[...], preferred_element_type=jnp.float32) + bf_ref[...], 0.0)
    z = jnp.dot(h, wkv_ref[...], preferred_element_type=jnp.float32) + bkv_ref[...]
    col = jax.lax.broadcasted_iota(jnp.int32, z.shape, 1)
    kv_ref[...] = jnp.where(col < C, jnp.maximum(z, 0.0), z).astype(kv_ref.dtype)


def _kv_call(feats_p, pk, tn, vmem_limit):
    B, Np, C = feats_p.shape
    grid = (B, Np // tn)
    row = lambda b, i: (b, i, 0)
    cw = lambda b, i: (0, 0)
    return pl.pallas_call(
        _kv_kernel,
        out_shape=jax.ShapeDtypeStruct((B, Np, 2 * C), jnp.bfloat16),
        grid=grid,
        in_specs=[pl.BlockSpec((None, tn, C), row),
                  pl.BlockSpec((C, C), cw), pl.BlockSpec((1, C), cw),
                  pl.BlockSpec((C, 2 * C), cw), pl.BlockSpec((1, 2 * C), cw)],
        out_specs=pl.BlockSpec((None, tn, 2 * C), row),
        compiler_params=pltpu.CompilerParams(
            dimension_semantics=("parallel", "parallel"),
            vmem_limit_bytes=vmem_limit),
    )(feats_p, pk["w_fc1"], pk["b_fc1"], pk["w_kv"], pk["b_kv"])


# ----------------------------------------------------------------------------
# Kernel B: q recompute + grouped vector attention + norm2/relu + fc3/norm3
#           + residual/relu  (consumes XLA-gathered neighbor k|v and rel-coords)
# ----------------------------------------------------------------------------
def _attn_kernel(x_ref, kvg_ref, rp_ref, wf_ref, wb_ref, pe1_ref, wpe2_ref,
                 bch_ref, out_ref):
    T, C = x_ref.shape
    S = kvg_ref.shape[1]

    x = x_ref[...]                                                    # (T, C) f32
    # recompute h = relu(norm1(fc1(x))) and q from the identity tile (no q HBM trip)
    h = jnp.maximum(
        jnp.dot(x, wf_ref[0], preferred_element_type=jnp.float32) + bch_ref[0:1, :], 0.0)
    q = jnp.maximum(
        jnp.dot(h, wf_ref[1], preferred_element_type=jnp.float32) + bch_ref[1:2, :], 0.0)

    kvf = kvg_ref[...].reshape(T * S, 2 * C).astype(jnp.float32)      # gathered [k|v]
    kg = kvf[:, :C].reshape(T, S, C)
    vg = kvf[:, C:].reshape(T, S, C)

    # positional-encoding layer 1 (K=3): three broadcast FMAs on the VPU
    rpf = rp_ref[...].reshape(T * S, 3)
    pe = (rpf[:, 0:1] * pe1_ref[0:1, :] + rpf[:, 1:2] * pe1_ref[1:2, :]
          + rpf[:, 2:3] * pe1_ref[2:3, :] + pe1_ref[3:4, :])
    pe = jnp.maximum(pe, 0.0)                                         # (T*S, 2C)
    # layer 2: block-diagonal [pm2 | pb2], bf16 operands, f32 accumulate
    pe = jnp.dot(pe.astype(jnp.bfloat16), wpe2_ref[...],
                 preferred_element_type=jnp.float32) + pe1_ref[4:5, :]
    pem = pe[:, :C].reshape(T, S, C)
    peb = pe[:, C:].reshape(T, S, C)

    rel = (kg - q[:, None, :]) * pem + peb                            # (T, S, C)

    # weight encoding (group dim pre-expanded to C lanes host-side), bf16 MXU
    relf = rel.reshape(T * S, C).astype(jnp.bfloat16)
    hw = jnp.maximum(
        jnp.dot(relf, wb_ref[0], preferred_element_type=jnp.float32) + bch_ref[2:3, :],
        0.0)
    wgt = (jnp.dot(hw.astype(jnp.bfloat16), wb_ref[1],
                   preferred_element_type=jnp.float32)
           + bch_ref[3:4, :]).reshape(T, S, C)

    # softmax over the neighbor axis
    wgt = wgt - jnp.max(wgt, axis=1, keepdims=True)
    e = jnp.exp(wgt)
    wgt = e * pl.reciprocal(jnp.sum(e, axis=1, keepdims=True), approx=True)

    # grouped weighted sum: one multiply + one reduction
    attn = jnp.sum((vg + peb) * wgt, axis=1)                          # (T, C)

    # norm2 + relu, fc3 (+folded norm3), residual + relu
    y = jnp.maximum(attn * bch_ref[4:5, :] + bch_ref[5:6, :], 0.0)
    y = jnp.dot(y, wf_ref[2], preferred_element_type=jnp.float32) + bch_ref[6:7, :]
    out_ref[...] = jnp.maximum(x + y, 0.0)


def _attn_call(feats_p, kvg, rp, pk, tn, vmem_limit):
    B, Np, C = feats_p.shape
    S = kvg.shape[2]
    grid = (B, Np // tn)
    row = lambda b, i: (b, i, 0)
    row4 = lambda b, i: (b, i, 0, 0)
    cw2 = lambda b, i: (0, 0)
    cw3 = lambda b, i: (0, 0, 0)
    in_specs = [
        pl.BlockSpec((None, tn, C), row),            # identity feats tile (f32)
        pl.BlockSpec((None, tn, S, 2 * C), row4),    # gathered [k | v] (bf16)
        pl.BlockSpec((None, tn, S, 3), row4),        # relative coords (f32)
        pl.BlockSpec((3, C, C), cw3),                # f32 per-point weights [fc1,q,fc3]
        pl.BlockSpec((2, C, C), cw3),                # bf16 weight-encoding [we1x,we2x]
        pl.BlockSpec((5, 2 * C), cw2),               # PE layer-1 rows + PE biases
        pl.BlockSpec((2 * C, 2 * C), cw2),           # PE layer-2 block-diag (bf16)
        pl.BlockSpec((7, C), cw2),                   # channel bias/scale rows
    ]
    return pl.pallas_call(
        _attn_kernel,
        out_shape=jax.ShapeDtypeStruct((B, Np, C), jnp.float32),
        grid=grid,
        in_specs=in_specs,
        out_specs=pl.BlockSpec((None, tn, C), row),
        compiler_params=pltpu.CompilerParams(
            dimension_semantics=("parallel", "parallel"),
            vmem_limit_bytes=vmem_limit),
    )(feats_p, kvg, rp, pk["w_f32"], pk["w_bf16"], pk["pe_pack"], pk["w_pe2"],
      pk["bias_c"])


# ----------------------------------------------------------------------------
# Full SABlock forward
# ----------------------------------------------------------------------------
def sablock_forward(feats, coords, index, params):
    B, N, C = feats.shape
    S = index.shape[2]
    G = params["w_we2"].shape[0]

    vmem_limit = _pick_vmem_limit()
    tn = _pick_tile(N, S, C, B, vmem_limit)
    Np = _round_up(N, tn)
    pk = _pack_params(params, C, G)

    @jax.jit
    def run(feats, coords, index, pk):
        pad = Np - N
        feats_p = jnp.pad(feats, ((0, 0), (0, pad), (0, 0)))
        coords_p = jnp.pad(coords, ((0, 0), (0, pad), (0, 0)))
        index_p = jnp.pad(index.astype(jnp.int32), ((0, 0), (0, pad), (0, 0)))

        # kernel A: per-point bf16 [relu(k) | v] table
        kv = _kv_call(feats_p, pk, tn, vmem_limit)                     # (B, Np, 2C) bf16

        # neighbor gather (linear in N*S; padded rows gather index 0 and are sliced off;
        # real indices are < N so they never reference padded table rows)
        idx_flat = index_p.reshape(B, Np * S)
        kvg = jnp.take_along_axis(kv, idx_flat[:, :, None], axis=1)
        kvg = kvg.reshape(B, Np, S, 2 * C)
        cg = jnp.take_along_axis(coords_p, idx_flat[:, :, None], axis=1)
        rp = coords_p[:, :, None, :] - cg.reshape(B, Np, S, 3)         # (B, Np, S, 3)

        out = _attn_call(feats_p, kvg, rp, pk, tn, vmem_limit)
        return out[:, :N, :]

    return run(feats, coords, index, pk)


# ----------------------------------------------------------------------------
# Pure-JAX f32 reference (same folded params) for correctness check
# ----------------------------------------------------------------------------
def reference(feats, coords, index, p, G):
    B, N, C = feats.shape
    S = index.shape[2]
    h = jax.nn.relu(feats @ p["w_fc1"] + p["b_fc1"])
    q = jax.nn.relu(h @ p["w_q"] + p["b_q"])
    k = jax.nn.relu(h @ p["w_k"] + p["b_k"])
    v = h @ p["w_v"] + p["b_v"]
    idx = index.reshape(B, N * S)
    gat = jax.vmap(lambda a, i: a[i])
    kg = gat(k, idx).reshape(B, N, S, C)
    vg = gat(v, idx).reshape(B, N, S, C)
    cg = gat(coords, idx).reshape(B, N, S, 3)
    rp = coords[:, :, None, :] - cg
    rel = kg - q[:, :, None, :]
    pem = jax.nn.relu(rp @ p["w_pm1"] + p["b_pm1"]) @ p["w_pm2"] + p["b_pm2"]
    rel = rel * pem
    peb = jax.nn.relu(rp @ p["w_pb1"] + p["b_pb1"]) @ p["w_pb2"] + p["b_pb2"]
    rel = rel + peb
    vg = vg + peb
    w = jax.nn.relu(rel @ p["w_we1"] + p["b_we1"]) @ p["w_we2"] + p["b_we2"]
    w = jax.nn.softmax(w, axis=2)
    I = C // G
    attn = jnp.einsum("bnsgi,bnsg->bngi", vg.reshape(B, N, S, G, I), w).reshape(B, N, C)
    y = jax.nn.relu(attn * p["bn2_scale"] + p["bn2_shift"])
    y = y @ p["w_fc3"] + p["b_fc3"]
    return jax.nn.relu(feats + y)


if __name__ == "__main__":
    # embed_channels=32, groups=4, 8 neighbors, N=20 exercises the remainder/padding path
    B, N, S, C, G = 2, 20, 8, 32, 4
    key = jax.random.PRNGKey(0)
    kf, kc, ki, kp = jax.random.split(key, 4)
    feats = jax.random.normal(kf, (B, N, C), jnp.float32)
    coords = jax.random.normal(kc, (B, N, 3), jnp.float32)
    index = jax.random.randint(ki, (B, N, S), 0, N, jnp.int32)
    params = init_params(kp, C, G)

    out = jax.block_until_ready(sablock_forward(feats, coords, index, params))

    ref = reference(feats, coords, index, params, G)
    # bf16 storage of the k/v table + bf16 MXU operands -> slightly looser tolerance
    np.testing.assert_allclose(np.asarray(out), np.asarray(ref), rtol=2e-2, atol=2e-2)
    print("KERNEL_OK")
</pallas_src>

<mosaic_0001>
module attributes {stable_mosaic.version = 11 : i64} {
  func.func @_kv_kernel(%arg0: i32, %arg1: i32, %arg2: memref<1x24x32xf32, #tpu.memory_space<vmem>>, %arg3: memref<32x32xf32, #tpu.memory_space<vmem>>, %arg4: memref<1x32xf32, #tpu.memory_space<vmem>>, %arg5: memref<32x64xf32, #tpu.memory_space<vmem>>, %arg6: memref<1x64xf32, #tpu.memory_space<vmem>>, %arg7: memref<1x24x64xbf16, #tpu.memory_space<vmem>>) attributes {dimension_semantics = [#tpu.dimension_semantics<parallel>, #tpu.dimension_semantics<parallel>], iteration_bounds = array<i64: 2, 1>, scalar_prefetch = 0 : i64, scratch_operands = 0 : i64, tpu.core_type = #tpu.core_type<tc>, window_params = [{transform_indices = @transform_0, window_bounds = array<i64: 1, 24, 32>}, {pipeline_mode = #tpu.pipeline_mode<synchronous>, transform_indices = @transform_1, window_bounds = array<i64: 32, 32>}, {pipeline_mode = #tpu.pipeline_mode<synchronous>, transform_indices = @transform_2, window_bounds = array<i64: 1, 32>}, {pipeline_mode = #tpu.pipeline_mode<synchronous>, transform_indices = @transform_3, window_bounds = array<i64: 32, 64>}, {pipeline_mode = #tpu.pipeline_mode<synchronous>, transform_indices = @transform_4, window_bounds = array<i64: 1, 64>}, {transform_indices = @transform_5, window_bounds = array<i64: 1, 24, 64>}]} {
    %c0 = arith.constant 0 : index
    %c0_0 = arith.constant 0 : index
    %c0_1 = arith.constant 0 : index
    %0 = vector.load %arg2[%c0, %c0_0, %c0_1] : memref<1x24x32xf32, #tpu.memory_space<vmem>>, vector<1x24x32xf32>
    %1 = vector.shape_cast %0 : vector<1x24x32xf32> to vector<24x32xf32>
    %c0_2 = arith.constant 0 : index
    %c0_3 = arith.constant 0 : index
    %2 = vector.load %arg3[%c0_2, %c0_3] : memref<32x32xf32, #tpu.memory_space<vmem>>, vector<32x32xf32>
    %cst = arith.constant dense<0.000000e+00> : vector<24x32xf32>
    %3 = tpu.matmul %1, %2, %cst {dimension_numbers = #tpu.dot_dimension_numbers<[1], [0], [0], [1], [0, 0, 1, 1], [], []>} : vector<24x32xf32>, vector<32x32xf32>, vector<24x32xf32> -> vector<24x32xf32>
    %c0_4 = arith.constant 0 : index
    %c0_5 = arith.constant 0 : index
    %4 = vector.load %arg4[%c0_4, %c0_5] : memref<1x32xf32, #tpu.memory_space<vmem>>, vector<1x32xf32>
    %5 = vector.broadcast %4 : vector<1x32xf32> to vector<24x32xf32>
    %6 = arith.addf %3, %5 : vector<24x32xf32>
    %cst_6 = arith.constant 0.000000e+00 : f32
    %7 = vector.broadcast %cst_6 : f32 to vector<24x32xf32>
    %8 = arith.maximumf %6, %7 : vector<24x32xf32>
    %c0_7 = arith.constant 0 : index
    %c0_8 = arith.constant 0 : index
    %9 = vector.load %arg5[%c0_7, %c0_8] : memref<32x64xf32, #tpu.memory_space<vmem>>, vector<32x64xf32>
    %cst_9 = arith.constant dense<0.000000e+00> : vector<24x64xf32>
    %10 = tpu.matmul %8, %9, %cst_9 {dimension_numbers = #tpu.dot_dimension_numbers<[1], [0], [0], [1], [0, 0, 1, 1], [], []>} : vector<24x32xf32>, vector<32x64xf32>, vector<24x64xf32> -> vector<24x64xf32>
    %c0_10 = arith.constant 0 : index
    %c0_11 = arith.constant 0 : index
    %11 = vector.load %arg6[%c0_10, %c0_11] : memref<1x64xf32, #tpu.memory_space<vmem>>, vector<1x64xf32>
    %12 = vector.broadcast %11 : vector<1x64xf32> to vector<24x64xf32>
    %13 = arith.addf %10, %12 : vector<24x64xf32>
    %14 = tpu.iota {dimensions = array<i32: 1>} : vector<24x64xi32>
    %c32_i32 = arith.constant 32 : i32
    %15 = vector.broadcast %c32_i32 : i32 to vector<24x64xi32>
    %16 = arith.cmpi slt, %14, %15 : vector<24x64xi32>
    %cst_12 = arith.constant 0.000000e+00 : f32
    %17 = vector.broadcast %cst_12 : f32 to vector<24x64xf32>
    %18 = arith.maximumf %13, %17 : vector<24x64xf32>
    %19 = arith.select %16, %18, %13 : vector<24x64xi1>, vector<24x64xf32>
    %20 = arith.truncf %19 : vector<24x64xf32> to vector<24x64xbf16>
    %c0_13 = arith.constant 0 : index
    %c0_14 = arith.constant 0 : index
    %c0_15 = arith.constant 0 : index
    %21 = vector.load %arg7[%c0_13, %c0_14, %c0_15] : memref<1x24x64xbf16, #tpu.memory_space<vmem>>, vector<1x24x64xbf16>
    %22 = vector.shape_cast %21 : vector<1x24x64xbf16> to vector<24x64xbf16>
    %23 = vector.shape_cast %20 : vector<24x64xbf16> to vector<1x24x64xbf16>
    tpu.vector_store %arg7[%c0_13, %c0_14, %c0_15], %23 {strides = array<i32>} : memref<1x24x64xbf16, #tpu.memory_space<vmem>>, vector<1x24x64xbf16>,
    return
  }
  func.func @transform_0(%arg0: i32, %arg1: i32) -> (i32, i32, i32) {
    %c0_i32 = arith.constant 0 : i32
    %c0_i32_0 = arith.constant 0 : i32
    return %arg0, %arg1, %c0_i32 : i32, i32, i32
  }
  func.func @transform_1(%arg0: i32, %arg1: i32) -> (i32, i32) {
    %c0_i32 = arith.constant 0 : i32
    %c0_i32_0 = arith.constant 0 : i32
    %c0_i32_1 = arith.constant 0 : i32
    return %c0_i32, %c0_i32_0 : i32, i32
  }
  func.func @transform_2(%arg0: i32, %arg1: i32) -> (i32, i32) {
    %c0_i32 = arith.constant 0 : i32
    %c0_i32_0 = arith.constant 0 : i32
    %c0_i32_1 = arith.constant 0 : i32
    return %c0_i32, %c0_i32_0 : i32, i32
  }
  func.func @transform_3(%arg0: i32, %arg1: i32) -> (i32, i32) {
    %c0_i32 = arith.constant 0 : i32
    %c0_i32_0 = arith.constant 0 : i32
    %c0_i32_1 = arith.constant 0 : i32
    return %c0_i32, %c0_i32_0 : i32, i32
  }
  func.func @transform_4(%arg0: i32, %arg1: i32) -> (i32, i32) {
    %c0_i32 = arith.constant 0 : i32
    %c0_i32_0 = arith.constant 0 : i32
    %c0_i32_1 = arith.constant 0 : i32
    return %c0_i32, %c0_i32_0 : i32, i32
  }
  func.func @transform_5(%arg0: i32, %arg1: i32) -> (i32, i32, i32) {
    %c0_i32 = arith.constant 0 : i32
    %c0_i32_0 = arith.constant 0 : i32
    return %arg0, %arg1, %c0_i32 : i32, i32, i32
  }
}

module attributes {stable_mosaic.version = 11 : i64} {
  func.func @_attn_kernel(%arg0: i32, %arg1: i32, %arg2: memref<1x24x32xf32, #tpu.memory_space<vmem>>, %arg3: memref<1x24x8x64xbf16, #tpu.memory_space<vmem>>, %arg4: memref<1x24x8x3xf32, #tpu.memory_space<vmem>>, %arg5: memref<3x32x32xf32, #tpu.memory_space<vmem>>, %arg6: memref<2x32x32xbf16, #tpu.memory_space<vmem>>, %arg7: memref<5x64xf32, #tpu.memory_space<vmem>>, %arg8: memref<64x64xbf16, #tpu.memory_space<vmem>>, %arg9: memref<7x32xf32, #tpu.memory_space<vmem>>, %arg10: memref<1x24x32xf32, #tpu.memory_space<vmem>>) attributes {dimension_semantics = [#tpu.dimension_semantics<parallel>, #tpu.dimension_semantics<parallel>], iteration_bounds = array<i64: 2, 1>, scalar_prefetch = 0 : i64, scratch_operands = 0 : i64, tpu.core_type = #tpu.core_type<tc>, window_params = [{transform_indices = @transform_0, window_bounds = array<i64: 1, 24, 32>}, {transform_indices = @transform_1, window_bounds = array<i64: 1, 24, 8, 64>}, {transform_indices = @transform_2, window_bounds = array<i64: 1, 24, 8, 3>}, {pipeline_mode = #tpu.pipeline_mode<synchronous>, transform_indices = @transform_3, window_bounds = array<i64: 3, 32, 32>}, {pipeline_mode = #tpu.pipeline_mode<synchronous>, transform_indices = @transform_4, window_bounds = array<i64: 2, 32, 32>}, {pipeline_mode = #tpu.pipeline_mode<synchronous>, transform_indices = @transform_5, window_bounds = array<i64: 5, 64>}, {pipeline_mode = #tpu.pipeline_mode<synchronous>, transform_indices = @transform_6, window_bounds = array<i64: 64, 64>}, {pipeline_mode = #tpu.pipeline_mode<synchronous>, transform_indices = @transform_7, window_bounds = array<i64: 7, 32>}, {transform_indices = @transform_8, window_bounds = array<i64: 1, 24, 32>}]} {
    %c0 = arith.constant 0 : index
    %c0_0 = arith.constant 0 : index
    %c0_1 = arith.constant 0 : index
    %0 = vector.load %arg2[%c0, %c0_0, %c0_1] : memref<1x24x32xf32, #tpu.memory_space<vmem>>, vector<1x24x32xf32>
    %1 = vector.shape_cast %0 : vector<1x24x32xf32> to vector<24x32xf32>
    %c0_2 = arith.constant 0 : index
    %c0_3 = arith.constant 0 : index
    %c0_4 = arith.constant 0 : index
    %2 = vector.load %arg5[%c0_2, %c0_3, %c0_4] : memref<3x32x32xf32, #tpu.memory_space<vmem>>, vector<1x32x32xf32>
    %3 = vector.shape_cast %2 : vector<1x32x32xf32> to vector<32x32xf32>
    %cst = arith.constant dense<0.000000e+00> : vector<24x32xf32>
    %4 = tpu.matmul %1, %3, %cst {dimension_numbers = #tpu.dot_dimension_numbers<[1], [0], [0], [1], [0, 0, 1, 1], [], []>} : vector<24x32xf32>, vector<32x32xf32>, vector<24x32xf32> -> vector<24x32xf32>
    %c0_5 = arith.constant 0 : index
    %c0_6 = arith.constant 0 : index
    %5 = vector.load %arg9[%c0_5, %c0_6] : memref<7x32xf32, #tpu.memory_space<vmem>>, vector<1x32xf32>
    %6 = vector.broadcast %5 : vector<1x32xf32> to vector<24x32xf32>
    %7 = arith.addf %4, %6 : vector<24x32xf32>
    %cst_7 = arith.constant 0.000000e+00 : f32
    %8 = vector.broadcast %cst_7 : f32 to vector<24x32xf32>
    %9 = arith.maximumf %7, %8 : vector<24x32xf32>
    %c1 = arith.constant 1 : index
    %c0_8 = arith.constant 0 : index
    %c0_9 = arith.constant 0 : index
    %10 = vector.load %arg5[%c1, %c0_8, %c0_9] : memref<3x32x32xf32, #tpu.memory_space<vmem>>, vector<1x32x32xf32>
    %11 = vector.shape_cast %10 : vector<1x32x32xf32> to vector<32x32xf32>
    %cst_10 = arith.constant dense<0.000000e+00> : vector<24x32xf32>
    %12 = tpu.matmul %9, %11, %cst_10 {dimension_numbers = #tpu.dot_dimension_numbers<[1], [0], [0], [1], [0, 0, 1, 1], [], []>} : vector<24x32xf32>, vector<32x32xf32>, vector<24x32xf32> -> vector<24x32xf32>
    %c1_11 = arith.constant 1 : index
    %c0_12 = arith.constant 0 : index
    %13 = vector.load %arg9[%c1_11, %c0_12] : memref<7x32xf32, #tpu.memory_space<vmem>>, vector<1x32xf32>
    %14 = vector.broadcast %13 : vector<1x32xf32> to vector<24x32xf32>
    %15 = arith.addf %12, %14 : vector<24x32xf32>
    %cst_13 = arith.constant 0.000000e+00 : f32
    %16 = vector.broadcast %cst_13 : f32 to vector<24x32xf32>
    %17 = arith.maximumf %15, %16 : vector<24x32xf32>
    %c0_14 = arith.constant 0 : index
    %c0_15 = arith.constant 0 : index
    %c0_16 = arith.constant 0 : index
    %c0_17 = arith.constant 0 : index
    %18 = vector.load %arg3[%c0_14, %c0_15, %c0_16, %c0_17] : memref<1x24x8x64xbf16, #tpu.memory_space<vmem>>, vector<1x24x8x64xbf16>
    %19 = vector.shape_cast %18 : vector<1x24x8x64xbf16> to vector<24x8x64xbf16>
    %20 = vector.shape_cast %19 : vector<24x8x64xbf16> to vector<192x64xbf16>
    %21 = arith.extf %20 : vector<192x64xbf16> to vector<192x64xf32>
    %22 = vector.extract_strided_slice %21 {offsets = [0, 0], sizes = [192, 32], strides = [1, 1]} : vector<192x64xf32> to vector<192x32xf32>
    %23 = vector.shape_cast %22 : vector<192x32xf32> to vector<24x8x32xf32>
    %24 = vector.extract_strided_slice %21 {offsets = [0, 32], sizes = [192, 32], strides = [1, 1]} : vector<192x64xf32> to vector<192x32xf32>
    %25 = vector.shape_cast %24 : vector<192x32xf32> to vector<24x8x32xf32>
    %c0_18 = arith.constant 0 : index
    %c0_19 = arith.constant 0 : index
    %c0_20 = arith.constant 0 : index
    %c0_21 = arith.constant 0 : index
    %26 = vector.load %arg4[%c0_18, %c0_19, %c0_20, %c0_21] : memref<1x24x8x3xf32, #tpu.memory_space<vmem>>, vector<1x24x8x3xf32>
    %27 = vector.shape_cast %26 : vector<1x24x8x3xf32> to vector<24x8x3xf32>
    %28 = vector.shape_cast %27 : vector<24x8x3xf32> to vector<192x3xf32>
    %29 = vector.extract_strided_slice %28 {offsets = [0, 0], sizes = [192, 1], strides = [1, 1]} : vector<192x3xf32> to vector<192x1xf32>
    %c0_22 = arith.constant 0 : index
    %c0_23 = arith.constant 0 : index
    %30 = vector.load %arg7[%c0_22, %c0_23] : memref<5x64xf32, #tpu.memory_space<vmem>>, vector<1x64xf32>
    %31 = vector.broadcast %29 : vector<192x1xf32> to vector<192x64xf32>
    %32 = vector.broadcast %30 : vector<1x64xf32> to vector<192x64xf32>
    %33 = arith.mulf %31, %32 : vector<192x64xf32>
    %34 = vector.extract_strided_slice %28 {offsets = [0, 1], sizes = [192, 1], strides = [1, 1]} : vector<192x3xf32> to vector<192x1xf32>
    %c1_24 = arith.constant 1 : index
    %c0_25 = arith.constant 0 : index
    %35 = vector.load %arg7[%c1_24, %c0_25] : memref<5x64xf32, #tpu.memory_space<vmem>>, vector<1x64xf32>
    %36 = vector.broadcast %34 : vector<192x1xf32> to vector<192x64xf32>
    %37 = vector.broadcast %35 : vector<1x64xf32> to vector<192x64xf32>
    %38 = arith.mulf %36, %37 : vector<192x64xf32>
    %39 = arith.addf %33, %38 : vector<192x64xf32>
    %40 = vector.extract_strided_slice %28 {offsets = [0, 2], sizes = [192, 1], strides = [1, 1]} : vector<192x3xf32> to vector<192x1xf32>
    %c2 = arith.constant 2 : index
    %c0_26 = arith.constant 0 : index
    %41 = vector.load %arg7[%c2, %c0_26] : memref<5x64xf32, #tpu.memory_space<vmem>>, vector<1x64xf32>
    %42 = vector.broadcast %40 : vector<192x1xf32> to vector<192x64xf32>
    %43 = vector.broadcast %41 : vector<1x64xf32> to vector<192x64xf32>
    %44 = arith.mulf %42, %43 : vector<192x64xf32>
    %45 = arith.addf %39, %44 : vector<192x64xf32>
    %c3 = arith.constant 3 : index
    %c0_27 = arith.constant 0 : index
    %46 = vector.load %arg7[%c3, %c0_27] : memref<5x64xf32, #tpu.memory_space<vmem>>, vector<1x64xf32>
    %47 = vector.broadcast %46 : vector<1x64xf32> to vector<192x64xf32>
    %48 = arith.addf %45, %47 : vector<192x64xf32>
    %cst_28 = arith.constant 0.000000e+00 : f32
    %49 = vector.broadcast %cst_28 : f32 to vector<192x64xf32>
    %50 = arith.maximumf %48, %49 : vector<192x64xf32>
    %51 = arith.truncf %50 : vector<192x64xf32> to vector<192x64xbf16>
    %c0_29 = arith.constant 0 : index
    %c0_30 = arith.constant 0 : index
    %52 = vector.load %arg8[%c0_29, %c0_30] : memref<64x64xbf16, #tpu.memory_space<vmem>>, vector<64x64xbf16>
    %cst_31 = arith.constant dense<0.000000e+00> : vector<192x64xf32>
    %53 = tpu.matmul %51, %52, %cst_31 {dimension_numbers = #tpu.dot_dimension_numbers<[1], [0], [0], [1], [0, 0, 1, 1], [], []>} : vector<192x64xbf16>, vector<64x64xbf16>, vector<192x64xf32> -> vector<192x64xf32>
    %c4 = arith.constant 4 : index
    %c0_32 = arith.constant 0 : index
    %54 = vector.load %arg7[%c4, %c0_32] : memref<5x64xf32, #tpu.memory_space<vmem>>, vector<1x64xf32>
    %55 = vector.broadcast %54 : vector<1x64xf32> to vector<192x64xf32>
    %56 = arith.addf %53, %55 : vector<192x64xf32>
    %57 = vector.extract_strided_slice %56 {offsets = [0, 0], sizes = [192, 32], strides = [1, 1]} : vector<192x64xf32> to vector<192x32xf32>
    %58 = vector.shape_cast %57 : vector<192x32xf32> to vector<24x8x32xf32>
    %59 = vector.extract_strided_slice %56 {offsets = [0, 32], sizes = [192, 32], strides = [1, 1]} : vector<192x64xf32> to vector<192x32xf32>
    %60 = vector.shape_cast %59 : vector<192x32xf32> to vector<24x8x32xf32>
    %61 = vector.shape_cast %17 : vector<24x32xf32> to vector<24x1x32xf32>
    %62 = vector.broadcast %61 : vector<24x1x32xf32> to vector<24x8x32xf32>
    %63 = arith.subf %23, %62 : vector<24x8x32xf32>
    %64 = arith.mulf %63, %58 : vector<24x8x32xf32>
    %65 = arith.addf %64, %60 : vector<24x8x32xf32>
    %66 = vector.shape_cast %65 : vector<24x8x32xf32> to vector<192x32xf32>
    %67 = arith.truncf %66 : vector<192x32xf32> to vector<192x32xbf16>
    %c0_33 = arith.constant 0 : index
    %c0_34 = arith.constant 0 : index
    %c0_35 = arith.constant 0 : index
    %68 = vector.load %arg6[%c0_33, %c0_34, %c0_35] : memref<2x32x32xbf16, #tpu.memory_space<vmem>>, vector<1x32x32xbf16>
    %69 = vector.shape_cast %68 : vector<1x32x32xbf16> to vector<32x32xbf16>
    %cst_36 = arith.constant dense<0.000000e+00> : vector<192x32xf32>
    %70 = tpu.matmul %67, %69, %cst_36 {dimension_numbers = #tpu.dot_dimension_numbers<[1], [0], [0], [1], [0, 0, 1, 1], [], []>} : vector<192x32xbf16>, vector<32x32xbf16>, vector<192x32xf32> -> vector<192x32xf32>
    %c2_37 = arith.constant 2 : index
    %c0_38 = arith.constant 0 : index
    %71 = vector.load %arg9[%c2_37, %c0_38] : memref<7x32xf32, #tpu.memory_space<vmem>>, vector<1x32xf32>
    %72 = vector.broadcast %71 : vector<1x32xf32> to vector<192x32xf32>
    %73 = arith.addf %70, %72 : vector<192x32xf32>
    %cst_39 = arith.constant 0.000000e+00 : f32
    %74 = vector.broadcast %cst_39 : f32 to vector<192x32xf32>
    %75 = arith.maximumf %73, %74 : vector<192x32xf32>
    %76 = arith.truncf %75 : vector<192x32xf32> to vector<192x32xbf16>
    %c1_40 = arith.constant 1 : index
    %c0_41 = arith.constant 0 : index
    %c0_42 = arith.constant 0 : index
    %77 = vector.load %arg6[%c1_40, %c0_41, %c0_42] : memref<2x32x32xbf16, #tpu.memory_space<vmem>>, vector<1x32x32xbf16>
    %78 = vector.shape_cast %77 : vector<1x32x32xbf16> to vector<32x32xbf16>
    %cst_43 = arith.constant dense<0.000000e+00> : vector<192x32xf32>
    %79 = tpu.matmul %76, %78, %cst_43 {dimension_numbers = #tpu.dot_dimension_numbers<[1], [0], [0], [1], [0, 0, 1, 1], [], []>} : vector<192x32xbf16>, vector<32x32xbf16>, vector<192x32xf32> -> vector<192x32xf32>
    %c3_44 = arith.constant 3 : index
    %c0_45 = arith.constant 0 : index
    %80 = vector.load %arg9[%c3_44, %c0_45] : memref<7x32xf32, #tpu.memory_space<vmem>>, vector<1x32xf32>
    %81 = vector.broadcast %80 : vector<1x32xf32> to vector<192x32xf32>
    %82 = arith.addf %79, %81 : vector<192x32xf32>
    %83 = vector.shape_cast %82 : vector<192x32xf32> to vector<24x8x32xf32>
    %cst_46 = arith.constant dense<0xFF800000> : vector<24x32xf32>
    %84 = vector.multi_reduction <maximumf>, %83, %cst_46 [1] : vector<24x8x32xf32> to vector<24x32xf32>
    %85 = vector.shape_cast %84 : vector<24x32xf32> to vector<24x1x32xf32>
    %86 = vector.broadcast %85 : vector<24x1x32xf32> to vector<24x8x32xf32>
    %87 = arith.subf %83, %86 : vector<24x8x32xf32>
    %88 = math.exp %87 : vector<24x8x32xf32>
    %cst_47 = arith.constant dense<0.000000e+00> : vector<24x32xf32>
    %89 = vector.multi_reduction <add>, %88, %cst_47 [1] : vector<24x8x32xf32> to vector<24x32xf32>
    %90 = vector.shape_cast %89 : vector<24x32xf32> to vector<24x1x32xf32>
    %91 = tpu.reciprocal %90 {approx = true} : vector<24x1x32xf32> -> vector<24x1x32xf32>
    %92 = vector.broadcast %91 : vector<24x1x32xf32> to vector<24x8x32xf32>
    %93 = arith.mulf %88, %92 : vector<24x8x32xf32>
    %94 = arith.addf %25, %60 : vector<24x8x32xf32>
    %95 = arith.mulf %94, %93 : vector<24x8x32xf32>
    %cst_48 = arith.constant dense<0.000000e+00> : vector<24x32xf32>
    %96 = vector.multi_reduction <add>, %95, %cst_48 [1] : vector<24x8x32xf32> to vector<24x32xf32>
    %c4_49 = arith.constant 4 : index
    %c0_50 = arith.constant 0 : index
    %97 = vector.load %arg9[%c4_49, %c0_50] : memref<7x32xf32, #tpu.memory_space<vmem>>, vector<1x32xf32>
    %98 = vector.broadcast %97 : vector<1x32xf32> to vector<24x32xf32>
    %99 = arith.mulf %96, %98 : vector<24x32xf32>
    %c5 = arith.constant 5 : index
    %c0_51 = arith.constant 0 : index
    %100 = vector.load %arg9[%c5, %c0_51] : memref<7x32xf32, #tpu.memory_space<vmem>>, vector<1x32xf32>
    %101 = vector.broadcast %100 : vector<1x32xf32> to vector<24x32xf32>
    %102 = arith.addf %99, %101 : vector<24x32xf32>
    %cst_52 = arith.constant 0.000000e+00 : f32
    %103 = vector.broadcast %cst_52 : f32 to vector<24x32xf32>
    %104 = arith.maximumf %102, %103 : vector<24x32xf32>
    %c2_53 = arith.constant 2 : index
    %c0_54 = arith.constant 0 : index
    %c0_55 = arith.constant 0 : index
    %105 = vector.load %arg5[%c2_53, %c0_54, %c0_55] : memref<3x32x32xf32, #tpu.memory_space<vmem>>, vector<1x32x32xf32>
    %106 = vector.shape_cast %105 : vector<1x32x32xf32> to vector<32x32xf32>
    %cst_56 = arith.constant dense<0.000000e+00> : vector<24x32xf32>
    %107 = tpu.matmul %104, %106, %cst_56 {dimension_numbers = #tpu.dot_dimension_numbers<[1], [0], [0], [1], [0, 0, 1, 1], [], []>} : vector<24x32xf32>, vector<32x32xf32>, vector<24x32xf32> -> vector<24x32xf32>
    %c6 = arith.constant 6 : index
    %c0_57 = arith.constant 0 : index
    %108 = vector.load %arg9[%c6, %c0_57] : memref<7x32xf32, #tpu.memory_space<vmem>>, vector<1x32xf32>
    %109 = vector.broadcast %108 : vector<1x32xf32> to vector<24x32xf32>
    %110 = arith.addf %107, %109 : vector<24x32xf32>
    %111 = arith.addf %1, %110 : vector<24x32xf32>
    %cst_58 = arith.constant 0.000000e+00 : f32
    %112 = vector.broadcast %cst_58 : f32 to vector<24x32xf32>
    %113 = arith.maximumf %111, %112 : vector<24x32xf32>
    %c0_59 = arith.constant 0 : index
    %c0_60 = arith.constant 0 : index
    %c0_61 = arith.constant 0 : index
    %114 = vector.load %arg10[%c0_59, %c0_60, %c0_61] : memref<1x24x32xf32, #tpu.memory_space<vmem>>, vector<1x24x32xf32>
    %115 = vector.shape_cast %114 : vector<1x24x32xf32> to vector<24x32xf32>
    %116 = vector.shape_cast %113 : vector<24x32xf32> to vector<1x24x32xf32>
    tpu.vector_store %arg10[%c0_59, %c0_60, %c0_61], %116 {strides = array<i32>} : memref<1x24x32xf32, #tpu.memory_space<vmem>>, vector<1x24x32xf32>,
    return
  }
  func.func @transform_0(%arg0: i32, %arg1: i32) -> (i32, i32, i32) {
    %c0_i32 = arith.constant 0 : i32
    %c0_i32_0 = arith.constant 0 : i32
    return %arg0, %arg1, %c0_i32 : i32, i32, i32
  }
  func.func @transform_1(%arg0: i32, %arg1: i32) -> (i32, i32, i32, i32) {
    %c0_i32 = arith.constant 0 : i32
    %c0_i32_0 = arith.constant 0 : i32
    %c0_i32_1 = arith.constant 0 : i32
    return %arg0, %arg1, %c0_i32, %c0_i32_0 : i32, i32, i32, i32
  }
  func.func @transform_2(%arg0: i32, %arg1: i32) -> (i32, i32, i32, i32) {
    %c0_i32 = arith.constant 0 : i32
    %c0_i32_0 = arith.constant 0 : i32
    %c0_i32_1 = arith.constant 0 : i32
    return %arg0, %arg1, %c0_i32, %c0_i32_0 : i32, i32, i32, i32
  }
  func.func @transform_3(%arg0: i32, %arg1: i32) -> (i32, i32, i32) {
    %c0_i32 = arith.constant 0 : i32
    %c0_i32_0 = arith.constant 0 : i32
    %c0_i32_1 = arith.constant 0 : i32
    %c0_i32_2 = arith.constant 0 : i32
    return %c0_i32, %c0_i32_0, %c0_i32_1 : i32, i32, i32
  }
  func.func @transform_4(%arg0: i32, %arg1: i32) -> (i32, i32, i32) {
    %c0_i32 = arith.constant 0 : i32
    %c0_i32_0 = arith.constant 0 : i32
    %c0_i32_1 = arith.constant 0 : i32
    %c0_i32_2 = arith.constant 0 : i32
    return %c0_i32, %c0_i32_0, %c0_i32_1 : i32, i32, i32
  }
  func.func @transform_5(%arg0: i32, %arg1: i32) -> (i32, i32) {
    %c0_i32 = arith.constant 0 : i32
    %c0_i32_0 = arith.constant 0 : i32
    %c0_i32_1 = arith.constant 0 : i32
    return %c0_i32, %c0_i32_0 : i32, i32
  }
  func.func @transform_6(%arg0: i32, %arg1: i32) -> (i32, i32) {
    %c0_i32 = arith.constant 0 : i32
    %c0_i32_0 = arith.constant 0 : i32
    %c0_i32_1 = arith.constant 0 : i32
    return %c0_i32, %c0_i32_0 : i32, i32
  }
  func.func @transform_7(%arg0: i32, %arg1: i32) -> (i32, i32) {
    %c0_i32 = arith.constant 0 : i32
    %c0_i32_0 = arith.constant 0 : i32
    %c0_i32_1 = arith.constant 0 : i32
    return %c0_i32, %c0_i32_0 : i32, i32
  }
  func.func @transform_8(%arg0: i32, %arg1: i32) -> (i32, i32, i32) {
    %c0_i32 = arith.constant 0 : i32
    %c0_i32_0 = arith.constant 0 : i32
    return %arg0, %arg1, %c0_i32 : i32, i32, i32
  }
}

</mosaic_0001>

<llo_original>
// kernel: run.2
$region0: #{run.2}
  #allocation0 [shape = 'u32[]', space=smem, size = 0x4, offset = 0x4, fixed_abs, tag = 'smem constant byte address 0x4 - core index']
  #allocation1 [shape = 'u32[144,128]{1,0:T(1,128)}', space=vmem, size = 0x12000, scoped, tag = 'internal scratch']
  %s0 = inlined_call_operand.vmem [shape: f32[2,24,32], index: 0, kind: input, shape index: {}]
  %s1 = inlined_call_operand.vmem [shape: f32[32,32], index: 1, kind: input, shape index: {}]
  %s2 = inlined_call_operand.vmem [shape: f32[1,32], index: 2, kind: input, shape index: {}]
  %s3 = inlined_call_operand.vmem [shape: f32[32,64], index: 3, kind: input, shape index: {}]
  %s4 = inlined_call_operand.vmem [shape: f32[1,64], index: 4, kind: input, shape index: {}]
  %s5 = inlined_call_operand.vmem [shape: bf16[2,24,64], index: 5, kind: output, shape index: {}]
  %s6 = sld [smem:[#allocation0]]
  $region53: #{run.2} parent=0
    _
  %s8 = ssub.s32 1, %s6
  %s9 = scalar_select 0, %s8, %s6
  loop: start=0, step=1, limit=4
  $region2: #{run.2} parent=0 // loop_pre_header
    _
  $region3: #{run.2} parent=0 // loop_header
    %s11 = sphi 0, %s15
    %p12 = scmp.ge.s32.totalorder %s11, 4
    %s18 = sphi 0, %s30
    %s19 = sphi 0, %s26
    %s20 = sphi 0, %s18
    %s21 = sphi 0, %s19
    %s22 = sphi 0, %s20
    %s23 = sphi 0, %s21
    %s35 = sphi 0, %s37
    %s38 = sphi 0, %s35
    %s39 = sphi 0, %s38
    %s55 = sphi 0, %s39
    %s59 = sphi 0, %s59
    %s61 = sphi 0, %s59
    %s62 = sphi 0, %s61
    %s76 = sphi 0, %s62
    %s80 = sphi 0, %s80
    %s82 = sphi 0, %s80
    %s83 = sphi 0, %s82
    %s97 = sphi 0, %s83
    %s101 = sphi 0, %s101
    %s103 = sphi 0, %s101
    %s104 = sphi 0, %s103
    %s118 = sphi 0, %s104
    %s122 = sphi 0, %s122
    %s124 = sphi 0, %s122
    %s125 = sphi 0, %s124
    %s139 = sphi 0, %s125
    %s147 = sphi 0, %s149
    %s150 = sphi 0, %s147
    %s151 = sphi 0, %s150
    %s167 = sphi 0, %s151
  $region4: #{run.2} parent=0 // loop_header_branch
    %14 = sbr.rel (%p12) target = $region8
  $region5: #{run.2} parent=0 // loop_body
    %s16 = ssub.s32 %s11, 1
    %s17 = ssub.s32 %s11, 2
    %s24 = sadd.s32 1, %s19
    %p25 = scmp.ge.s32.totalorder %s24, 1
    %s26 = scalar_select %p25, 0, %s24
    %s27 = sadd.s32 1, %s18
    %s28 = scalar_select %p25, %s27, %s18
    %p29 = scmp.ge.s32.totalorder %s28, 2
    %s30 = scalar_select %p29, 0, %s28
    %s31 = ssub.s32 %s18, %s30
    %s32 = ssub.s32 %s19, %s26
    %s33 = sor.u32 %s31, %s32
    %p34 = scmp.eq.s32.totalorder %s33, 0
    %s36 = sadd.s32 %s35, 1
    %s37 = scalar_select %p34, %s35, %s36
    %p40 = pneg %p34
    %p41 = scmp.eq.s32.totalorder %s11, 1
    %p42 = por %p40, %p41
    %p43 = scmp.ne.s32.totalorder %s35, %s38
    %p44 = scmp.eq.s32.totalorder %s11, 0
    %p45 = por %p43, %p44
    %p46 = scmp.ne.s32.totalorder %s35, %s38
    %p47 = scmp.eq.s32.totalorder %s16, 1
    %p48 = por %p46, %p47
    %p49 = scmp.ne.s32.totalorder %s38, %s39
    %p50 = scmp.eq.s32.totalorder %s16, 0
    %p51 = por %p49, %p50
    %p52 = scmp.ne.s32.totalorder %s38, %s39
    %p53 = scmp.eq.s32.totalorder %s17, 1
    %p54 = por %p52, %p53
    %p56 = scmp.ne.s32.totalorder %s39, %s55
    %p57 = scmp.eq.s32.totalorder %s17, 0
    %p58 = por %p56, %p57
    %s60 = sadd.s32 %s59, 1
    %p63 = scmp.eq.s32.totalorder %s11, 1
    %p64 = scmp.ne.s32.totalorder %s59, %s61
    %p65 = scmp.eq.s32.totalorder %s11, 0
    %p66 = por %p64, %p65
    %p67 = scmp.ne.s32.totalorder %s59, %s61
    %p68 = scmp.eq.s32.totalorder %s16, 1
    %p69 = por %p67, %p68
    %p70 = scmp.ne.s32.totalorder %s61, %s62
    %p71 = scmp.eq.s32.totalorder %s16, 0
    %p72 = por %p70, %p71
    %p73 = scmp.ne.s32.totalorder %s61, %s62
    %p74 = scmp.eq.s32.totalorder %s17, 1
    %p75 = por %p73, %p74
    %p77 = scmp.ne.s32.totalorder %s62, %s76
    %p78 = scmp.eq.s32.totalorder %s17, 0
    %p79 = por %p77, %p78
    %s81 = sadd.s32 %s80, 1
    %p84 = scmp.eq.s32.totalorder %s11, 1
    %p85 = scmp.ne.s32.totalorder %s80, %s82
    %p86 = scmp.eq.s32.totalorder %s11, 0
    %p87 = por %p85, %p86
    %p88 = scmp.ne.s32.totalorder %s80, %s82
    %p89 = scmp.eq.s32.totalorder %s16, 1
    %p90 = por %p88, %p89
    %p91 = scmp.ne.s32.totalorder %s82, %s83
    %p92 = scmp.eq.s32.totalorder %s16, 0
    %p93 = por %p91, %p92
    %p94 = scmp.ne.s32.totalorder %s82, %s83
    %p95 = scmp.eq.s32.totalorder %s17, 1
    %p96 = por %p94, %p95
    %p98 = scmp.ne.s32.totalorder %s83, %s97
    %p99 = scmp.eq.s32.totalorder %s17, 0
    %p100 = por %p98, %p99
    %s102 = sadd.s32 %s101, 1
    %p105 = scmp.eq.s32.totalorder %s11, 1
    %p106 = scmp.ne.s32.totalorder %s101, %s103
    %p107 = scmp.eq.s32.totalorder %s11, 0
    %p108 = por %p106, %p107
    %p109 = scmp.ne.s32.totalorder %s101, %s103
    %p110 = scmp.eq.s32.totalorder %s16, 1
    %p111 = por %p109, %p110
    %p112 = scmp.ne.s32.totalorder %s103, %s104
    %p113 = scmp.eq.s32.totalorder %s16, 0
    %p114 = por %p112, %p113
    %p115 = scmp.ne.s32.totalorder %s103, %s104
    %p116 = scmp.eq.s32.totalorder %s17, 1
    %p117 = por %p115, %p116
    %p119 = scmp.ne.s32.totalorder %s104, %s118
    %p120 = scmp.eq.s32.totalorder %s17, 0
    %p121 = por %p119, %p120
    %s123 = sadd.s32 %s122, 1
    %p126 = scmp.eq.s32.totalorder %s11, 1
    %p127 = scmp.ne.s32.totalorder %s122, %s124
    %p128 = scmp.eq.s32.totalorder %s11, 0
    %p129 = por %p127, %p128
    %p130 = scmp.ne.s32.totalorder %s122, %s124
    %p131 = scmp.eq.s32.totalorder %s16, 1
    %p132 = por %p130, %p131
    %p133 = scmp.ne.s32.totalorder %s124, %s125
    %p134 = scmp.eq.s32.totalorder %s16, 0
    %p135 = por %p133, %p134
    %p136 = scmp.ne.s32.totalorder %s124, %s125
    %p137 = scmp.eq.s32.totalorder %s17, 1
    %p138 = por %p136, %p137
    %p140 = scmp.ne.s32.totalorder %s125, %s139
    %p141 = scmp.eq.s32.totalorder %s17, 0
    %p142 = por %p140, %p141
    %s143 = ssub.s32 %s18, %s30
    %s144 = ssub.s32 %s19, %s26
    %s145 = sor.u32 %s143, %s144
    %p146 = scmp.eq.s32.totalorder %s145, 0
    %s148 = sadd.s32 %s147, 1
    %s149 = scalar_select %p146, %s147, %s148
    %p152 = pneg %p146
    %p153 = scmp.eq.s32.totalorder %s11, 1
    %p154 = por %p152, %p153
    %p155 = scmp.ne.s32.totalorder %s147, %s150
    %p156 = scmp.eq.s32.totalorder %s11, 0
    %p157 = por %p155, %p156
    %p158 = scmp.ne.s32.totalorder %s147, %s150
    %p159 = scmp.eq.s32.totalorder %s16, 1
    %p160 = por %p158, %p159
    %p161 = scmp.ne.s32.totalorder %s150, %s151
    %p162 = scmp.eq.s32.totalorder %s16, 0
    %p163 = por %p161, %p162
    %p164 = scmp.ne.s32.totalorder %s150, %s151
    %p165 = scmp.eq.s32.totalorder %s17, 1
    %p166 = por %p164, %p165
    %p168 = scmp.ne.s32.totalorder %s151, %s167
    %p169 = scmp.eq.s32.totalorder %s17, 0
    %p170 = por %p168, %p169
    %p171 = scmp.le.s32.totalorder 1, %s11
    %p172 = scmp.lt.s32.totalorder %s11, 3
    %p173 = pnand %p171, %p172
    %p174 = pneg %p173
    // Predicated region
    $region9: #{run.2} parent=5 // pred_check
      _
    $region10: #{run.2} parent=5 // pred_check_branch
      %176 = sbr.rel (%p173) target = $region12
    $region11: #{run.2} parent=5 // pred_region
      %s177 = ssub.s32 %s11, 1
      // Predicated region
      $region13: #{run.2} parent=11 // pred_check
        %p178 = pneg %p72
      $region14: #{run.2} parent=11 // pred_check_branch
        %180 = sbr.rel (%p178) target = $region16
      $region15: #{run.2} parent=11 // pred_region
        _
      $region16: #{run.2} parent=11 // pred_fallthru
        _
      // Predicated region
      $region17: #{run.2} parent=11 // pred_check
        %p181 = pneg %p93
      $region18: #{run.2} parent=11 // pred_check_branch
        %183 = sbr.rel (%p181) target = $region20
      $region19: #{run.2} parent=11 // pred_region
        _
      $region20: #{run.2} parent=11 // pred_fallthru
        _
      // Predicated region
      $region21: #{run.2} parent=11 // pred_check
        %p184 = pneg %p114
      $region22: #{run.2} parent=11 // pred_check_branch
        %186 = sbr.rel (%p184) target = $region24
      $region23: #{run.2} parent=11 // pred_region
        _
      $region24: #{run.2} parent=11 // pred_fallthru
        _
      // Predicated region
      $region25: #{run.2} parent=11 // pred_check
        %p187 = pneg %p135
      $region26: #{run.2} parent=11 // pred_check_branch
        %189 = sbr.rel (%p187) target = $region28
      $region27: #{run.2} parent=11 // pred_region
        _
      $region28: #{run.2} parent=11 // pred_fallthru
        _
    $region12: #{run.2} parent=5 // pred_fallthru
      _
    %p190 = scmp.lt.s32.totalorder %s11, 2
    // Predicated region
    $region29: #{run.2} parent=5 // pred_check
      %p191 = pneg %p190
    $region30: #{run.2} parent=5 // pred_check_branch
      %193 = sbr.rel (%p191) target = $region32
    $region31: #{run.2} parent=5 // pred_region
      // Predicated region
      $region33: #{run.2} parent=31 // pred_check
        %p194 = pneg %p45
      $region34: #{run.2} parent=31 // pred_check_branch
        %196 = sbr.rel (%p194) target = $region36
      $region35: #{run.2} parent=31 // pred_region
        %s197 = smul.u32 3, %s19
        %p198 = scmp.lt.s32.totalorder %s18, 1
        %s199 = scalar_select %p198, %s18, 1
        %p200 = scmp.lt.s32.totalorder %s197, 2
        %s201 = scalar_select %p200, %s197, 2
        %s202 = smul.addr %s199, 3
        %s203 = sadd.s32 %s201, %s202
        %s204 = smul.addr %s203, 8
        %s205 = scalar_lea.vmem %s0, %s204
        %s206 = smul.u32 3, %s19
      $region36: #{run.2} parent=31 // pred_fallthru
        _
    $region32: #{run.2} parent=5 // pred_fallthru
      _
    %p207 = scmp.le.s32.totalorder 1, %s11
    %p208 = scmp.lt.s32.totalorder %s11, 3
    %p209 = pnand %p207, %p208
    %p210 = pneg %p209
    // Predicated region
    $region37: #{run.2} parent=5 // pred_check
      _
    $region38: #{run.2} parent=5 // pred_check_branch
      %212 = sbr.rel (%p209) target = $region40
    $region39: #{run.2} parent=5 // pred_region
      %s213 = ssub.s32 %s11, 1
      %s214 = smul.u32 3, %s21
      %p215 = scmp.lt.s32.totalorder %s20, 1
      %s216 = scalar_select %p215, %s20, 1
      %p217 = scmp.lt.s32.totalorder %s214, 2
      %s218 = scalar_select %p217, %s214, 2
      %s219 = smul.addr %s216, 3
      %s220 = sadd.s32 %s218, %s219
      %s221 = smul.addr %s220, 8
      %s222 = scalar_lea.vmem %s0, %s221
      %p223 = pneg %p51
      %p224 = pneg %p48
      %p225 = pneg %p72
      %p226 = pneg %p69
      %p227 = pneg %p93
      %p228 = pneg %p90
      %p229 = pneg %p114
      %p230 = pneg %p111
      %p231 = pneg %p135
      %p232 = pneg %p132
      %p233 = pneg %p163
      %p234 = pneg %p160
      %s235 = smul.u32 3, %s21
      %p236 = scmp.lt.s32.totalorder %s20, 1
      %s237 = scalar_select %p236, %s20, 1
      %p238 = scmp.lt.s32.totalorder %s235, 2
      %s239 = scalar_select %p238, %s235, 2
      %s240 = smul.addr %s237, 3
      %s241 = sadd.s32 %s239, %s240
      %s242 = smul.addr %s241, 4
      %s243 = scalar_lea.vmem %s5, %s242
      %s244 = smul.u32 3, %s21
      %p245 = scmp.lt.s32.totalorder %s20, 1
      %s246 = scalar_select %p245, %s20, 1
      %p247 = scmp.lt.s32.totalorder %s244, 2
      %s248 = scalar_select %p247, %s244, 2
      %s249 = smul.addr %s246, 3
      %s250 = sadd.s32 %s248, %s249
      %s251 = smul.addr %s250, 8
      %s252 = scalar_lea.vmem %s0, %s251
      %s253 = smul.u32 3, %s21
      %s254 = smul.u32 3, %s21
      %p255 = scmp.lt.s32.totalorder %s20, 1
      %s256 = scalar_select %p255, %s20, 1
      %p257 = scmp.lt.s32.totalorder %s254, 2
      %s258 = scalar_select %p257, %s254, 2
      %s259 = smul.addr %s256, 3
      %s260 = sadd.s32 %s258, %s259
      %s261 = smul.addr %s260, 4
      %s262 = scalar_lea.vmem %s5, %s261
      %s263 = smul.u32 3, %s21
      %v264 = vld [vmem:[%s252] sm:$0xff]
      %v265 = vld [vmem:[%s252 + $0x8] sm:$0xff]
      %v266 = vld [vmem:[%s252 + $0x10] sm:$0xff]
      %v267 = vld [vmem:[%s1] sm:$0xff]
      %v268 = vld [vmem:[%s1 + $0x8] sm:$0xff]
      %v269 = vld [vmem:[%s1 + $0x10] sm:$0xff]
      %v270 = vld [vmem:[%s1 + $0x18] sm:$0xff]
      %v271 = vld [vmem:[%s2] sm:$0x1]
      %v273 = vlaneseq
      %v274 = vshrl.u32 %v273, 7
      %v275 = vsub.s32 0, %v274
      %v276 = vrot.slane %v271, %v275
      %vm278 = vcmask 261120
      %v280 = vsel %vm278, %v264, 0
      %v283 = vsel %vm278, %v265, 0
      %v286 = vsel %vm278, %v266, 0
      %288 = vmatprep.subr.mxu0 0.0
      %289 = vmatpush1.msra.mxu0 %v267
      %290 = vmatprep.subr.mxu0 0.0
      %291 = vmatpush1.msra.mxu0 %v268
      %292 = vmatprep.subr.mxu0 0.0
      %293 = vmatpush1.msra.mxu0 %v269
      %294 = vmatprep.subr.mxu0 0.0
      %295 = vmatpush1.msra.mxu0 %v270
      %296 = vmatprep.subr.mxu0 0.0
      %297 = vmatpush1.msra.mxu0 0.0
      %298 = vmatprep.subr.mxu0 0.0
      %299 = vmatpush1.msra.mxu0 0.0
      %300 = vmatprep.subr.mxu0 0.0
      %301 = vmatpush1.msra.mxu0 0.0
      %302 = vmatprep.subr.mxu0 0.0
      %303 = vmatpush1.msra.mxu0 0.0
      %304 = vmatprep.subr.mxu0 0.0
      %305 = vmatpush1.msra.mxu0 0.0
      %306 = vmatprep.subr.mxu0 0.0
      %307 = vmatpush1.msra.mxu0 0.0
      %308 = vmatprep.subr.mxu0 0.0
      %309 = vmatpush1.msra.mxu0 0.0
      %310 = vmatprep.subr.mxu0 0.0
      %311 = vmatpush1.msra.mxu0 0.0
      %312 = vmatprep.subr.mxu0 0.0
      %313 = vmatpush1.msra.mxu0 0.0
      %314 = vmatprep.subr.mxu0 0.0
      %315 = vmatpush1.msra.mxu0 0.0
      %316 = vmatprep.subr.mxu0 0.0
      %317 = vmatpush1.msra.mxu0 0.0
      %318 = vmatprep.subr.mxu0 0.0
      %319 = vmatpush1.msra.mxu0 0.0
      %320 = vmatprep.subr.mxu0 0.0
      %321 = vmatpush1.msra.mxu0 0.0
      %322 = vmatprep.subr.mxu0 0.0
      %323 = vmatpush1.msra.mxu0 0.0
      %324 = vmatprep.subr.mxu0 0.0
      %325 = vmatpush1.msra.mxu0 0.0
      %326 = vmatprep.subr.mxu0 0.0
      %327 = vmatpush1.msra.mxu0 0.0
      %328 = vmatprep.subr.mxu0 0.0
      %329 = vmatpush1.msra.mxu0 0.0
      %330 = vmatprep.subr.mxu0 0.0
      %331 = vmatpush1.msra.mxu0 0.0
      %332 = vmatprep.subr.mxu0 0.0
      %333 = vmatpush1.msra.mxu0 0.0
      %334 = vmatprep.subr.mxu0 0.0
      %335 = vmatpush1.msra.mxu0 0.0
      %336 = vmatprep.subr.mxu0 0.0
      %337 = vmatpush1.msra.mxu0 0.0
      %338 = vmatprep.subr.mxu0 0.0
      %339 = vmatpush1.msra.mxu0 0.0
      %340 = vmatprep.subr.mxu0 0.0
      %341 = vmatpush1.msra.mxu0 0.0
      %342 = vmatprep.subr.mxu0 0.0
      %343 = vmatpush1.msra.mxu0 0.0
      %344 = vmatprep.subr.mxu0 0.0
      %345 = vmatpush1.msra.mxu0 0.0
      %346 = vmatprep.subr.mxu0 0.0
      %347 = vmatpush1.msra.mxu0 0.0
      %348 = vmatprep.subr.mxu0 0.0
      %349 = vmatpush1.msra.mxu0 0.0
      %350 = vmatprep.subr.mxu0 0.0
      %351 = vmatpush1.msra.mxu0 0.0
      %352 = vmatprep.mubr.f32.mxu0 0.0
      %353 = vmatmul.mubr.f32.gmra.mrb[0].mxu0 %v280
      %v354 = vpop.f32.mrb[0].mxu0
      %v355 = vadd.f32 %v276, %v354
      %v356 = vpop.f32.mrb[0].mxu0
      %357 = vmatprep.mubr.f32.mxu0 0.0
      %358 = vmatmul.mubr.f32.gmra.mrb[0].mxu0 %v283
      %v359 = vpop.f32.mrb[0].mxu0
      %v360 = vadd.f32 %v276, %v359
      %v361 = vpop.f32.mrb[0].mxu0
      %362 = vmatprep.mubr.f32.mxu0 0.0
      %363 = vmatmul.mubr.f32.gmra.mrb[0].mxu0 %v286
      %v364 = vpop.f32.mrb[0].mxu0
      %v365 = vadd.f32 %v276, %v364
      %v366 = vpop.f32.mrb[0].mxu0
      %367 = vdwg.mxu0
      %v368 = vmax.f32 %v355, 0.0
      %v369 = vmax.f32 %v360, 0.0
      %v370 = vmax.f32 %v365, 0.0
      %v371 = vld [vmem:[%s3] sm:$0xff]
      %v372 = vld [vmem:[%s3 + $0x8] sm:$0xff]
      %v373 = vld [vmem:[%s3 + $0x10] sm:$0xff]
      %v374 = vld [vmem:[%s3 + $0x18] sm:$0xff]
      %v375 = vld [vmem:[%s4] sm:$0x1]
      %v377 = vlaneseq
      %v378 = vshrl.u32 %v377, 7
      %v379 = vsub.s32 0, %v378
      %v380 = vrot.slane %v375, %v379
      %v383 = vsel %vm278, %v368, 0
      %v386 = vsel %vm278, %v369, 0
      %v389 = vsel %vm278, %v370, 0
      %391 = vmatprep.subr.mxu0 0.0
      %392 = vmatpush1.msra.mxu0 %v371
      %393 = vmatprep.subr.mxu0 0.0
      %394 = vmatpush1.msra.mxu0 %v372
      %395 = vmatprep.subr.mxu0 0.0
      %396 = vmatpush1.msra.mxu0 %v373
      %397 = vmatprep.subr.mxu0 0.0
      %398 = vmatpush1.msra.mxu0 %v374
      %399 = vmatprep.subr.mxu0 0.0
      %400 = vmatpush1.msra.mxu0 0.0
      %401 = vmatprep.subr.mxu0 0.0
      %402 = vmatpush1.msra.mxu0 0.0
      %403 = vmatprep.subr.mxu0 0.0
      %404 = vmatpush1.msra.mxu0 0.0
      %405 = vmatprep.subr.mxu0 0.0
      %406 = vmatpush1.msra.mxu0 0.0
      %407 = vmatprep.subr.mxu0 0.0
      %408 = vmatpush1.msra.mxu0 0.0
      %409 = vmatprep.subr.mxu0 0.0
      %410 = vmatpush1.msra.mxu0 0.0
      %411 = vmatprep.subr.mxu0 0.0
      %412 = vmatpush1.msra.mxu0 0.0
      %413 = vmatprep.subr.mxu0 0.0
      %414 = vmatpush1.msra.mxu0 0.0
      %415 = vmatprep.subr.mxu0 0.0
      %416 = vmatpush1.msra.mxu0 0.0
      %417 = vmatprep.subr.mxu0 0.0
      %418 = vmatpush1.msra.mxu0 0.0
      %419 = vmatprep.subr.mxu0 0.0
      %420 = vmatpush1.msra.mxu0 0.0
      %421 = vmatprep.subr.mxu0 0.0
      %422 = vmatpush1.msra.mxu0 0.0
      %423 = vmatprep.subr.mxu0 0.0
      %424 = vmatpush1.msra.mxu0 0.0
      %425 = vmatprep.subr.mxu0 0.0
      %426 = vmatpush1.msra.mxu0 0.0
      %427 = vmatprep.subr.mxu0 0.0
      %428 = vmatpush1.msra.mxu0 0.0
      %429 = vmatprep.subr.mxu0 0.0
      %430 = vmatpush1.msra.mxu0 0.0
      %431 = vmatprep.subr.mxu0 0.0
      %432 = vmatpush1.msra.mxu0 0.0
      %433 = vmatprep.subr.mxu0 0.0
      %434 = vmatpush1.msra.mxu0 0.0
      %435 = vmatprep.subr.mxu0 0.0
      %436 = vmatpush1.msra.mxu0 0.0
      %437 = vmatprep.subr.mxu0 0.0
      %438 = vmatpush1.msra.mxu0 0.0
      %439 = vmatprep.subr.mxu0 0.0
      %440 = vmatpush1.msra.mxu0 0.0
      %441 = vmatprep.subr.mxu0 0.0
      %442 = vmatpush1.msra.mxu0 0.0
      %443 = vmatprep.subr.mxu0 0.0
      %444 = vmatpush1.msra.mxu0 0.0
      %445 = vmatprep.subr.mxu0 0.0
      %446 = vmatpush1.msra.mxu0 0.0
      %447 = vmatprep.subr.mxu0 0.0
      %448 = vmatpush1.msra.mxu0 0.0
      %449 = vmatprep.subr.mxu0 0.0
      %450 = vmatpush1.msra.mxu0 0.0
      %451 = vmatprep.subr.mxu0 0.0
      %452 = vmatpush1.msra.mxu0 0.0
      %453 = vmatprep.subr.mxu0 0.0
      %454 = vmatpush1.msra.mxu0 0.0
      %455 = vmatprep.mubr.f32.mxu0 0.0
      %456 = vmatmul.mubr.f32.gmra.mrb[0].mxu0 %v383
      %v457 = vpop.f32.mrb[0].mxu0
      %v458 = vadd.f32 %v380, %v457
      %v459 = vpop.f32.mrb[0].mxu0
      %460 = vmatprep.mubr.f32.mxu0 0.0
      %461 = vmatmul.mubr.f32.gmra.mrb[0].mxu0 %v386
      %v462 = vpop.f32.mrb[0].mxu0
      %v463 = vadd.f32 %v380, %v462
      %v464 = vpop.f32.mrb[0].mxu0
      %465 = vmatprep.mubr.f32.mxu0 0.0
      %466 = vmatmul.mubr.f32.gmra.mrb[0].mxu0 %v389
      %v467 = vpop.f32.mrb[0].mxu0
      %v468 = vadd.f32 %v380, %v467
      %v469 = vpop.f32.mrb[0].mxu0
      %470 = vdwg.mxu0
      %v471 = vlaneseq
      %v472 = vand.u32 %v471, 127
      %vm473 = vcmp.lt.s32.totalorder %v472, 32
      %v474 = vmax.f32 %v458, 0.0
      %v475 = vmax.f32 %v463, 0.0
      %v476 = vmax.f32 %v468, 0.0
      %v477 = vsel %vm473, %v474, %v458
      %v478 = vsel %vm473, %v475, %v463
      %v479 = vsel %vm473, %v476, %v468
      %v480 = vpack.c.bf16 %v478, %v477
      %v481 = vpack.c.bf16 %v479, %v479
      %v484 = vunpack.c.l.b16 %v480
      %v485 = vunpack.c.h.b16 %v480
      %v486 = vunpack.c.l.b16 %v481
      %v487 = vpack.c.b16 %v484, %v484
      %v488 = vpack.c.b16 %v485, %v485
      %v489 = vpack.c.b16 %v486, %v486
      %vm493 = vcmask 519168
      %494 = vst.msk [vmem:[%s262] sm:$0xf] %vm493, %v487
      %495 = vst.msk [vmem:[%s262 + $0x4] sm:$0xf] %vm493, %v488
      %496 = vst.msk [vmem:[%s262 + $0x8] sm:$0xf] %vm493, %v489
      %s497 = smul.u32 3, %s21
      %p498 = scmp.lt.s32.totalorder %s20, 1
      %s499 = scalar_select %p498, %s20, 1
      %p500 = scmp.lt.s32.totalorder %s497, 2
      %s501 = scalar_select %p500, %s497, 2
      %s502 = smul.addr %s499, 3
      %s503 = sadd.s32 %s501, %s502
      %s504 = smul.addr %s503, 4
      %s505 = scalar_lea.vmem %s5, %s504
      // Predicated region
      $region41: #{run.2} parent=39 // pred_check
        %p506 = pneg %p160
      $region42: #{run.2} parent=39 // pred_check_branch
        %508 = sbr.rel (%p506) target = $region44
      $region43: #{run.2} parent=39 // pred_region
        %s509 = smul.u32 3, %s21
      $region44: #{run.2} parent=39 // pred_fallthru
        _
    $region40: #{run.2} parent=5 // pred_fallthru
      _
    %p510 = scmp.le.s32.totalorder 2, %s11
    // Predicated region
    $region45: #{run.2} parent=5 // pred_check
      %p511 = pneg %p510
    $region46: #{run.2} parent=5 // pred_check_branch
      %513 = sbr.rel (%p511) target = $region48
    $region47: #{run.2} parent=5 // pred_region
      %s514 = ssub.s32 %s11, 2
      // Predicated region
      $region49: #{run.2} parent=47 // pred_check
        %p515 = pneg %p166
      $region50: #{run.2} parent=47 // pred_check_branch
        %517 = sbr.rel (%p515) target = $region52
      $region51: #{run.2} parent=47 // pred_region
        %s518 = smul.u32 3, %s23
        %p519 = scmp.lt.s32.totalorder %s22, 1
        %s520 = scalar_select %p519, %s22, 1
        %p521 = scmp.lt.s32.totalorder %s518, 2
        %s522 = scalar_select %p521, %s518, 2
        %s523 = smul.addr %s520, 3
        %s524 = sadd.s32 %s522, %s523
        %s525 = smul.addr %s524, 4
        %s526 = scalar_lea.vmem %s5, %s525
      $region52: #{run.2} parent=47 // pred_fallthru
        _
    $region48: #{run.2} parent=5 // pred_fallthru
      _
  $region6: #{run.2} parent=0 // loop_footer
    %s15 = sadd.s32 1, %s11
  $region7: #{run.2} parent=0 // loop_footer_branch
    %10 = sbr.rel target = $region3
  $region8: #{run.2} parent=0 // loop_exit
    _

// kernel: run.3
$region0: #{run.3}
  #allocation0 [shape = 'u32[]', space=smem, size = 0x4, offset = 0x4, fixed_abs, tag = 'smem constant byte address 0x4 - core index']
  #allocation1 [shape = 'u32[144,128]{1,0:T(1,128)}', space=vmem, size = 0x12000, scoped, tag = 'internal scratch']
  %s0 = inlined_call_operand.vmem [shape: f32[2,24,32], index: 0, kind: input, shape index: {}]
  %s1 = inlined_call_operand.vmem [shape: bf16[2,24,8,64], index: 1, kind: input, shape index: {}]
  %s2 = inlined_call_operand.vmem [shape: f32[2,24,8,3], index: 2, kind: input, shape index: {}]
  %s3 = inlined_call_operand.vmem [shape: f32[3,32,32], index: 3, kind: input, shape index: {}]
  %s4 = inlined_call_operand.vmem [shape: bf16[2,32,32], index: 4, kind: input, shape index: {}]
  %s5 = inlined_call_operand.vmem [shape: f32[5,64], index: 5, kind: input, shape index: {}]
  %s6 = inlined_call_operand.vmem [shape: bf16[64,64], index: 6, kind: input, shape index: {}]
  %s7 = inlined_call_operand.vmem [shape: f32[7,32], index: 7, kind: input, shape index: {}]
  %s8 = inlined_call_operand.vmem [shape: f32[2,24,32], index: 8, kind: output, shape index: {}]
  %s9 = sld [smem:[#allocation0]]
  $region65: #{run.3} parent=0
    _
  %s11 = ssub.s32 1, %s9
  %s12 = scalar_select 0, %s11, %s9
  loop: start=0, step=1, limit=4
  $region2: #{run.3} parent=0 // loop_pre_header
    _
  $region3: #{run.3} parent=0 // loop_header
    %s14 = sphi 0, %s18
    %p15 = scmp.ge.s32.totalorder %s14, 4
    %s21 = sphi 0, %s33
    %s22 = sphi 0, %s29
    %s23 = sphi 0, %s21
    %s24 = sphi 0, %s22
    %s25 = sphi 0, %s23
    %s26 = sphi 0, %s24
    %s38 = sphi 0, %s40
    %s41 = sphi 0, %s38
    %s42 = sphi 0, %s41
    %s58 = sphi 0, %s42
    %s66 = sphi 0, %s68
    %s69 = sphi 0, %s66
    %s70 = sphi 0, %s69
    %s86 = sphi 0, %s70
    %s94 = sphi 0, %s96
    %s97 = sphi 0, %s94
    %s98 = sphi 0, %s97
    %s114 = sphi 0, %s98
    %s118 = sphi 0, %s118
    %s120 = sphi 0, %s118
    %s121 = sphi 0, %s120
    %s135 = sphi 0, %s121
    %s139 = sphi 0, %s139
    %s141 = sphi 0, %s139
    %s142 = sphi 0, %s141
    %s156 = sphi 0, %s142
    %s160 = sphi 0, %s160
    %s162 = sphi 0, %s160
    %s163 = sphi 0, %s162
    %s177 = sphi 0, %s163
    %s181 = sphi 0, %s181
    %s183 = sphi 0, %s181
    %s184 = sphi 0, %s183
    %s198 = sphi 0, %s184
    %s202 = sphi 0, %s202
    %s204 = sphi 0, %s202
    %s205 = sphi 0, %s204
    %s219 = sphi 0, %s205
    %s227 = sphi 0, %s229
    %s230 = sphi 0, %s227
    %s231 = sphi 0, %s230
    %s247 = sphi 0, %s231
  $region4: #{run.3} parent=0 // loop_header_branch
    %17 = sbr.rel (%p15) target = $region8
  $region5: #{run.3} parent=0 // loop_body
    %s19 = ssub.s32 %s14, 1
    %s20 = ssub.s32 %s14, 2
    %s27 = sadd.s32 1, %s22
    %p28 = scmp.ge.s32.totalorder %s27, 1
    %s29 = scalar_select %p28, 0, %s27
    %s30 = sadd.s32 1, %s21
    %s31 = scalar_select %p28, %s30, %s21
    %p32 = scmp.ge.s32.totalorder %s31, 2
    %s33 = scalar_select %p32, 0, %s31
    %s34 = ssub.s32 %s21, %s33
    %s35 = ssub.s32 %s22, %s29
    %s36 = sor.u32 %s34, %s35
    %p37 = scmp.eq.s32.totalorder %s36, 0
    %s39 = sadd.s32 %s38, 1
    %s40 = scalar_select %p37, %s38, %s39
    %p43 = pneg %p37
    %p44 = scmp.eq.s32.totalorder %s14, 1
    %p45 = por %p43, %p44
    %p46 = scmp.ne.s32.totalorder %s38, %s41
    %p47 = scmp.eq.s32.totalorder %s14, 0
    %p48 = por %p46, %p47
    %p49 = scmp.ne.s32.totalorder %s38, %s41
    %p50 = scmp.eq.s32.totalorder %s19, 1
    %p51 = por %p49, %p50
    %p52 = scmp.ne.s32.totalorder %s41, %s42
    %p53 = scmp.eq.s32.totalorder %s19, 0
    %p54 = por %p52, %p53
    %p55 = scmp.ne.s32.totalorder %s41, %s42
    %p56 = scmp.eq.s32.totalorder %s20, 1
    %p57 = por %p55, %p56
    %p59 = scmp.ne.s32.totalorder %s42, %s58
    %p60 = scmp.eq.s32.totalorder %s20, 0
    %p61 = por %p59, %p60
    %s62 = ssub.s32 %s21, %s33
    %s63 = ssub.s32 %s22, %s29
    %s64 = sor.u32 %s62, %s63
    %p65 = scmp.eq.s32.totalorder %s64, 0
    %s67 = sadd.s32 %s66, 1
    %s68 = scalar_select %p65, %s66, %s67
    %p71 = pneg %p65
    %p72 = scmp.eq.s32.totalorder %s14, 1
    %p73 = por %p71, %p72
    %p74 = scmp.ne.s32.totalorder %s66, %s69
    %p75 = scmp.eq.s32.totalorder %s14, 0
    %p76 = por %p74, %p75
    %p77 = scmp.ne.s32.totalorder %s66, %s69
    %p78 = scmp.eq.s32.totalorder %s19, 1
    %p79 = por %p77, %p78
    %p80 = scmp.ne.s32.totalorder %s69, %s70
    %p81 = scmp.eq.s32.totalorder %s19, 0
    %p82 = por %p80, %p81
    %p83 = scmp.ne.s32.totalorder %s69, %s70
    %p84 = scmp.eq.s32.totalorder %s20, 1
    %p85 = por %p83, %p84
    %p87 = scmp.ne.s32.totalorder %s70, %s86
    %p88 = scmp.eq.s32.totalorder %s20, 0
    %p89 = por %p87, %p88
    %s90 = ssub.s32 %s21, %s33
    %s91 = ssub.s32 %s22, %s29
    %s92 = sor.u32 %s90, %s91
    %p93 = scmp.eq.s32.totalorder %s92, 0
    %s95 = sadd.s32 %s94, 1
    %s96 = scalar_select %p93, %s94, %s95
    %p99 = pneg %p93
    %p100 = scmp.eq.s32.totalorder %s14, 1
    %p101 = por %p99, %p100
    %p102 = scmp.ne.s32.totalorder %s94, %s97
    %p103 = scmp.eq.s32.totalorder %s14, 0
    %p104 = por %p102, %p103
    %p105 = scmp.ne.s32.totalorder %s94, %s97
    %p106 = scmp.eq.s32.totalorder %s19, 1
    %p107 = por %p105, %p106
    %p108 = scmp.ne.s32.totalorder %s97, %s98
    %p109 = scmp.eq.s32.totalorder %s19, 0
    %p110 = por %p108, %p109
    %p111 = scmp.ne.s32.totalorder %s97, %s98
    %p112 = scmp.eq.s32.totalorder %s20, 1
    %p113 = por %p111, %p112
    %p115 = scmp.ne.s32.totalorder %s98, %s114
    %p116 = scmp.eq.s32.totalorder %s20, 0
    %p117 = por %p115, %p116
    %s119 = sadd.s32 %s118, 1
    %p122 = scmp.eq.s32.totalorder %s14, 1
    %p123 = scmp.ne.s32.totalorder %s118, %s120
    %p124 = scmp.eq.s32.totalorder %s14, 0
    %p125 = por %p123, %p124
    %p126 = scmp.ne.s32.totalorder %s118, %s120
    %p127 = scmp.eq.s32.totalorder %s19, 1
    %p128 = por %p126, %p127
    %p129 = scmp.ne.s32.totalorder %s120, %s121
    %p130 = scmp.eq.s32.totalorder %s19, 0
    %p131 = por %p129, %p130
    %p132 = scmp.ne.s32.totalorder %s120, %s121
    %p133 = scmp.eq.s32.totalorder %s20, 1
    %p134 = por %p132, %p133
    %p136 = scmp.ne.s32.totalorder %s121, %s135
    %p137 = scmp.eq.s32.totalorder %s20, 0
    %p138 = por %p136, %p137
    %s140 = sadd.s32 %s139, 1
    %p143 = scmp.eq.s32.totalorder %s14, 1
    %p144 = scmp.ne.s32.totalorder %s139, %s141
    %p145 = scmp.eq.s32.totalorder %s14, 0
    %p146 = por %p144, %p145
    %p147 = scmp.ne.s32.totalorder %s139, %s141
    %p148 = scmp.eq.s32.totalorder %s19, 1
    %p149 = por %p147, %p148
    %p150 = scmp.ne.s32.totalorder %s141, %s142
    %p151 = scmp.eq.s32.totalorder %s19, 0
    %p152 = por %p150, %p151
    %p153 = scmp.ne.s32.totalorder %s141, %s142
    %p154 = scmp.eq.s32.totalorder %s20, 1
    %p155 = por %p153, %p154
    %p157 = scmp.ne.s32.totalorder %s142, %s156
    %p158 = scmp.eq.s32.totalorder %s20, 0
    %p159 = por %p157, %p158
    %s161 = sadd.s32 %s160, 1
    %p164 = scmp.eq.s32.totalorder %s14, 1
    %p165 = scmp.ne.s32.totalorder %s160, %s162
    %p166 = scmp.eq.s32.totalorder %s14, 0
    %p167 = por %p165, %p166
    %p168 = scmp.ne.s32.totalorder %s160, %s162
    %p169 = scmp.eq.s32.totalorder %s19, 1
    %p170 = por %p168, %p169
    %p171 = scmp.ne.s32.totalorder %s162, %s163
    %p172 = scmp.eq.s32.totalorder %s19, 0
    %p173 = por %p171, %p172
    %p174 = scmp.ne.s32.totalorder %s162, %s163
    %p175 = scmp.eq.s32.totalorder %s20, 1
    %p176 = por %p174, %p175
    %p178 = scmp.ne.s32.totalorder %s163, %s177
    %p179 = scmp.eq.s32.totalorder %s20, 0
    %p180 = por %p178, %p179
    %s182 = sadd.s32 %s181, 1
    %p185 = scmp.eq.s32.totalorder %s14, 1
    %p186 = scmp.ne.s32.totalorder %s181, %s183
    %p187 = scmp.eq.s32.totalorder %s14, 0
    %p188 = por %p186, %p187
    %p189 = scmp.ne.s32.totalorder %s181, %s183
    %p190 = scmp.eq.s32.totalorder %s19, 1
    %p191 = por %p189, %p190
    %p192 = scmp.ne.s32.totalorder %s183, %s184
    %p193 = scmp.eq.s32.totalorder %s19, 0
    %p194 = por %p192, %p193
    %p195 = scmp.ne.s32.totalorder %s183, %s184
    %p196 = scmp.eq.s32.totalorder %s20, 1
    %p197 = por %p195, %p196
    %p199 = scmp.ne.s32.totalorder %s184, %s198
    %p200 = scmp.eq.s32.totalorder %s20, 0
    %p201 = por %p199, %p200
    %s203 = sadd.s32 %s202, 1
    %p206 = scmp.eq.s32.totalorder %s14, 1
    %p207 = scmp.ne.s32.totalorder %s202, %s204
    %p208 = scmp.eq.s32.totalorder %s14, 0
    %p209 = por %p207, %p208
    %p210 = scmp.ne.s32.totalorder %s202, %s204
    %p211 = scmp.eq.s32.totalorder %s19, 1
    %p212 = por %p210, %p211
    %p213 = scmp.ne.s32.totalorder %s204, %s205
    %p214 = scmp.eq.s32.totalorder %s19, 0
    %p215 = por %p213, %p214
    %p216 = scmp.ne.s32.totalorder %s204, %s205
    %p217 = scmp.eq.s32.totalorder %s20, 1
    %p218 = por %p216, %p217
    %p220 = scmp.ne.s32.totalorder %s205, %s219
    %p221 = scmp.eq.s32.totalorder %s20, 0
    %p222 = por %p220, %p221
    %s223 = ssub.s32 %s21, %s33
    %s224 = ssub.s32 %s22, %s29
    %s225 = sor.u32 %s223, %s224
    %p226 = scmp.eq.s32.totalorder %s225, 0
    %s228 = sadd.s32 %s227, 1
    %s229 = scalar_select %p226, %s227, %s228
    %p232 = pneg %p226
    %p233 = scmp.eq.s32.totalorder %s14, 1
    %p234 = por %p232, %p233
    %p235 = scmp.ne.s32.totalorder %s227, %s230
    %p236 = scmp.eq.s32.totalorder %s14, 0
    %p237 = por %p235, %p236
    %p238 = scmp.ne.s32.totalorder %s227, %s230
    %p239 = scmp.eq.s32.totalorder %s19, 1
    %p240 = por %p238, %p239
    %p241 = scmp.ne.s32.totalorder %s230, %s231
    %p242 = scmp.eq.s32.totalorder %s19, 0
    %p243 = por %p241, %p242
    %p244 = scmp.ne.s32.totalorder %s230, %s231
    %p245 = scmp.eq.s32.totalorder %s20, 1
    %p246 = por %p244, %p245
    %p248 = scmp.ne.s32.totalorder %s231, %s247
    %p249 = scmp.eq.s32.totalorder %s20, 0
    %p250 = por %p248, %p249
    %p251 = scmp.le.s32.totalorder 1, %s14
    %p252 = scmp.lt.s32.totalorder %s14, 3
    %p253 = pnand %p251, %p252
    %p254 = pneg %p253
    // Predicated region
    $region9: #{run.3} parent=5 // pred_check
      _
    $region10: #{run.3} parent=5 // pred_check_branch
      %256 = sbr.rel (%p253) target = $region12
    $region11: #{run.3} parent=5 // pred_region
      %s257 = ssub.s32 %s14, 1
      // Predicated region
      $region13: #{run.3} parent=11 // pred_check
        %p258 = pneg %p131
      $region14: #{run.3} parent=11 // pred_check_branch
        %260 = sbr.rel (%p258) target = $region16
      $region15: #{run.3} parent=11 // pred_region
        _
      $region16: #{run.3} parent=11 // pred_fallthru
        _
      // Predicated region
      $region17: #{run.3} parent=11 // pred_check
        %p261 = pneg %p152
      $region18: #{run.3} parent=11 // pred_check_branch
        %263 = sbr.rel (%p261) target = $region20
      $region19: #{run.3} parent=11 // pred_region
        _
      $region20: #{run.3} parent=11 // pred_fallthru
        _
      // Predicated region
      $region21: #{run.3} parent=11 // pred_check
        %p264 = pneg %p173
      $region22: #{run.3} parent=11 // pred_check_branch
        %266 = sbr.rel (%p264) target = $region24
      $region23: #{run.3} parent=11 // pred_region
        _
      $region24: #{run.3} parent=11 // pred_fallthru
        _
      // Predicated region
      $region25: #{run.3} parent=11 // pred_check
        %p267 = pneg %p194
      $region26: #{run.3} parent=11 // pred_check_branch
        %269 = sbr.rel (%p267) target = $region28
      $region27: #{run.3} parent=11 // pred_region
        _
      $region28: #{run.3} parent=11 // pred_fallthru
        _
      // Predicated region
      $region29: #{run.3} parent=11 // pred_check
        %p270 = pneg %p215
      $region30: #{run.3} parent=11 // pred_check_branch
        %272 = sbr.rel (%p270) target = $region32
      $region31: #{run.3} parent=11 // pred_region
        _
      $region32: #{run.3} parent=11 // pred_fallthru
        _
    $region12: #{run.3} parent=5 // pred_fallthru
      _
    %p273 = scmp.lt.s32.totalorder %s14, 2
    // Predicated region
    $region33: #{run.3} parent=5 // pred_check
      %p274 = pneg %p273
    $region34: #{run.3} parent=5 // pred_check_branch
      %276 = sbr.rel (%p274) target = $region36
    $region35: #{run.3} parent=5 // pred_region
      // Predicated region
      $region37: #{run.3} parent=35 // pred_check
        %p277 = pneg %p48
      $region38: #{run.3} parent=35 // pred_check_branch
        %279 = sbr.rel (%p277) target = $region40
      $region39: #{run.3} parent=35 // pred_region
        %s280 = smul.u32 3, %s22
        %p281 = scmp.lt.s32.totalorder %s21, 1
        %s282 = scalar_select %p281, %s21, 1
        %p283 = scmp.lt.s32.totalorder %s280, 2
        %s284 = scalar_select %p283, %s280, 2
        %s285 = smul.addr %s282, 3
        %s286 = sadd.s32 %s284, %s285
        %s287 = smul.addr %s286, 8
        %s288 = scalar_lea.vmem %s0, %s287
        %s289 = smul.u32 3, %s22
      $region40: #{run.3} parent=35 // pred_fallthru
        _
      // Predicated region
      $region41: #{run.3} parent=35 // pred_check
        %p290 = pneg %p76
      $region42: #{run.3} parent=35 // pred_check_branch
        %292 = sbr.rel (%p290) target = $region44
      $region43: #{run.3} parent=35 // pred_region
        %s293 = smul.u32 24, %s22
        %p294 = scmp.lt.s32.totalorder %s21, 1
        %s295 = scalar_select %p294, %s21, 1
        %p296 = scmp.lt.s32.totalorder %s293, 23
        %s297 = scalar_select %p296, %s293, 23
        %s298 = smul.addr %s295, 24
        %s299 = sadd.s32 %s297, %s298
        %s300 = smul.addr %s299, 4
        %s301 = scalar_lea.vmem %s1, %s300
        %s302 = smul.u32 24, %s22
      $region44: #{run.3} parent=35 // pred_fallthru
        _
      // Predicated region
      $region45: #{run.3} parent=35 // pred_check
        %p303 = pneg %p104
      $region46: #{run.3} parent=35 // pred_check_branch
        %305 = sbr.rel (%p303) target = $region48
      $region47: #{run.3} parent=35 // pred_region
        %s306 = smul.u32 24, %s22
        %p307 = scmp.lt.s32.totalorder %s21, 1
        %s308 = scalar_select %p307, %s21, 1
        %p309 = scmp.lt.s32.totalorder %s306, 23
        %s310 = scalar_select %p309, %s306, 23
        %s311 = smul.addr %s308, 24
        %s312 = sadd.s32 %s310, %s311
        %s313 = smul.addr %s312, 8
        %s314 = scalar_lea.vmem %s2, %s313
        %s315 = smul.u32 24, %s22
      $region48: #{run.3} parent=35 // pred_fallthru
        _
    $region36: #{run.3} parent=5 // pred_fallthru
      _
    %p316 = scmp.le.s32.totalorder 1, %s14
    %p317 = scmp.lt.s32.totalorder %s14, 3
    %p318 = pnand %p316, %p317
    %p319 = pneg %p318
    // Predicated region
    $region49: #{run.3} parent=5 // pred_check
      _
    $region50: #{run.3} parent=5 // pred_check_branch
      %321 = sbr.rel (%p318) target = $region52
    $region51: #{run.3} parent=5 // pred_region
      %s322 = ssub.s32 %s14, 1
      %s323 = smul.u32 3, %s24
      %p324 = scmp.lt.s32.totalorder %s23, 1
      %s325 = scalar_select %p324, %s23, 1
      %p326 = scmp.lt.s32.totalorder %s323, 2
      %s327 = scalar_select %p326, %s323, 2
      %s328 = smul.addr %s325, 3
      %s329 = sadd.s32 %s327, %s328
      %s330 = smul.addr %s329, 8
      %s331 = scalar_lea.vmem %s0, %s330
      %p332 = pneg %p54
      %p333 = pneg %p51
      %s334 = smul.u32 24, %s24
      %p335 = scmp.lt.s32.totalorder %s23, 1
      %s336 = scalar_select %p335, %s23, 1
      %p337 = scmp.lt.s32.totalorder %s334, 23
      %s338 = scalar_select %p337, %s334, 23
      %s339 = smul.addr %s336, 24
      %s340 = sadd.s32 %s338, %s339
      %s341 = smul.addr %s340, 4
      %s342 = scalar_lea.vmem %s1, %s341
      %p343 = pneg %p82
      %p344 = pneg %p79
      %s345 = smul.u32 24, %s24
      %p346 = scmp.lt.s32.totalorder %s23, 1
      %s347 = scalar_select %p346, %s23, 1
      %p348 = scmp.lt.s32.totalorder %s345, 23
      %s349 = scalar_select %p348, %s345, 23
      %s350 = smul.addr %s347, 24
      %s351 = sadd.s32 %s349, %s350
      %s352 = smul.addr %s351, 8
      %s353 = scalar_lea.vmem %s2, %s352
      %p354 = pneg %p110
      %p355 = pneg %p107
      %p356 = pneg %p131
      %p357 = pneg %p128
      %p358 = pneg %p152
      %p359 = pneg %p149
      %p360 = pneg %p173
      %p361 = pneg %p170
      %p362 = pneg %p194
      %p363 = pneg %p191
      %p364 = pneg %p215
      %p365 = pneg %p212
      %p366 = pneg %p243
      %p367 = pneg %p240
      %s368 = smul.u32 3, %s24
      %p369 = scmp.lt.s32.totalorder %s23, 1
      %s370 = scalar_select %p369, %s23, 1
      %p371 = scmp.lt.s32.totalorder %s368, 2
      %s372 = scalar_select %p371, %s368, 2
      %s373 = smul.addr %s370, 3
      %s374 = sadd.s32 %s372, %s373
      %s375 = smul.addr %s374, 8
      %s376 = scalar_lea.vmem %s8, %s375
      %s377 = smul.u32 3, %s24
      %p378 = scmp.lt.s32.totalorder %s23, 1
      %s379 = scalar_select %p378, %s23, 1
      %p380 = scmp.lt.s32.totalorder %s377, 2
      %s381 = scalar_select %p380, %s377, 2
      %s382 = smul.addr %s379, 3
      %s383 = sadd.s32 %s381, %s382
      %s384 = smul.addr %s383, 8
      %s385 = scalar_lea.vmem %s0, %s384
      %s386 = smul.u32 3, %s24
      %s387 = smul.u32 24, %s24
      %p388 = scmp.lt.s32.totalorder %s23, 1
      %s389 = scalar_select %p388, %s23, 1
      %p390 = scmp.lt.s32.totalorder %s387, 23
      %s391 = scalar_select %p390, %s387, 23
      %s392 = smul.addr %s389, 24
      %s393 = sadd.s32 %s391, %s392
      %s394 = smul.addr %s393, 4
      %s395 = scalar_lea.vmem %s1, %s394
      %s396 = smul.u32 24, %s24
      %s397 = smul.u32 24, %s24
      %p398 = scmp.lt.s32.totalorder %s23, 1
      %s399 = scalar_select %p398, %s23, 1
      %p400 = scmp.lt.s32.totalorder %s397, 23
      %s401 = scalar_select %p400, %s397, 23
      %s402 = smul.addr %s399, 24
      %s403 = sadd.s32 %s401, %s402
      %s404 = smul.addr %s403, 8
      %s405 = scalar_lea.vmem %s2, %s404
      %s406 = smul.u32 24, %s24
      %s407 = smul.u32 3, %s24
      %p408 = scmp.lt.s32.totalorder %s23, 1
      %s409 = scalar_select %p408, %s23, 1
      %p410 = scmp.lt.s32.totalorder %s407, 2
      %s411 = scalar_select %p410, %s407, 2
      %s412 = smul.addr %s409, 3
      %s413 = sadd.s32 %s411, %s412
      %s414 = smul.addr %s413, 8
      %s415 = scalar_lea.vmem %s8, %s414
      %s416 = smul.u32 3, %s24
      %v418 = vld [vmem:[%s385] sm:$0xff]
      %v419 = vld [vmem:[%s385 + $0x8] sm:$0xff]
      %v420 = vld [vmem:[%s385 + $0x10] sm:$0xff]
      %v421 = vld [vmem:[%s3] sm:$0xff]
      %v422 = vld [vmem:[%s3 + $0x8] sm:$0xff]
      %v423 = vld [vmem:[%s3 + $0x10] sm:$0xff]
      %v424 = vld [vmem:[%s3 + $0x18] sm:$0xff]
      %v425 = vld [vmem:[%s7] sm:$0x1]
      %v426 = vlaneseq
      %v427 = vshrl.u32 %v426, 7
      %v428 = vsub.s32 0, %v427
      %v429 = vrot.slane %v425, %v428
      %vm430 = vcmask 261120
      %v432 = vsel %vm430, %v418, 0
      %v435 = vsel %vm430, %v419, 0
      %v438 = vsel %vm430, %v420, 0
      %440 = vmatprep.subr.mxu0 0.0
      %441 = vmatpush1.msra.mxu0 %v421
      %442 = vmatprep.subr.mxu0 0.0
      %443 = vmatpush1.msra.mxu0 %v422
      %444 = vmatprep.subr.mxu0 0.0
      %445 = vmatpush1.msra.mxu0 %v423
      %446 = vmatprep.subr.mxu0 0.0
      %447 = vmatpush1.msra.mxu0 %v424
      %448 = vmatprep.subr.mxu0 0.0
      %449 = vmatpush1.msra.mxu0 0.0
      %450 = vmatprep.subr.mxu0 0.0
      %451 = vmatpush1.msra.mxu0 0.0
      %452 = vmatprep.subr.mxu0 0.0
      %453 = vmatpush1.msra.mxu0 0.0
      %454 = vmatprep.subr.mxu0 0.0
      %455 = vmatpush1.msra.mxu0 0.0
      %456 = vmatprep.subr.mxu0 0.0
      %457 = vmatpush1.msra.mxu0 0.0
      %458 = vmatprep.subr.mxu0 0.0
      %459 = vmatpush1.msra.mxu0 0.0
      %460 = vmatprep.subr.mxu0 0.0
      %461 = vmatpush1.msra.mxu0 0.0
      %462 = vmatprep.subr.mxu0 0.0
      %463 = vmatpush1.msra.mxu0 0.0
      %464 = vmatprep.subr.mxu0 0.0
      %465 = vmatpush1.msra.mxu0 0.0
      %466 = vmatprep.subr.mxu0 0.0
      %467 = vmatpush1.msra.mxu0 0.0
      %468 = vmatprep.subr.mxu0 0.0
      %469 = vmatpush1.msra.mxu0 0.0
      %470 = vmatprep.subr.mxu0 0.0
      %471 = vmatpush1.msra.mxu0 0.0
      %472 = vmatprep.subr.mxu0 0.0
      %473 = vmatpush1.msra.mxu0 0.0
      %474 = vmatprep.subr.mxu0 0.0
      %475 = vmatpush1.msra.mxu0 0.0
      %476 = vmatprep.subr.mxu0 0.0
      %477 = vmatpush1.msra.mxu0 0.0
      %478 = vmatprep.subr.mxu0 0.0
      %479 = vmatpush1.msra.mxu0 0.0
      %480 = vmatprep.subr.mxu0 0.0
      %481 = vmatpush1.msra.mxu0 0.0
      %482 = vmatprep.subr.mxu0 0.0
      %483 = vmatpush1.msra.mxu0 0.0
      %484 = vmatprep.subr.mxu0 0.0
      %485 = vmatpush1.msra.mxu0 0.0
      %486 = vmatprep.subr.mxu0 0.0
      %487 = vmatpush1.msra.mxu0 0.0
      %488 = vmatprep.subr.mxu0 0.0
      %489 = vmatpush1.msra.mxu0 0.0
      %490 = vmatprep.subr.mxu0 0.0
      %491 = vmatpush1.msra.mxu0 0.0
      %492 = vmatprep.subr.mxu0 0.0
      %493 = vmatpush1.msra.mxu0 0.0
      %494 = vmatprep.subr.mxu0 0.0
      %495 = vmatpush1.msra.mxu0 0.0
      %496 = vmatprep.subr.mxu0 0.0
      %497 = vmatpush1.msra.mxu0 0.0
      %498 = vmatprep.subr.mxu0 0.0
      %499 = vmatpush1.msra.mxu0 0.0
      %500 = vmatprep.subr.mxu0 0.0
      %501 = vmatpush1.msra.mxu0 0.0
      %502 = vmatprep.subr.mxu0 0.0
      %503 = vmatpush1.msra.mxu0 0.0
      %504 = vmatprep.mubr.f32.mxu0 0.0
      %505 = vmatmul.mubr.f32.gmra.mrb[0].mxu0 %v432
      %v506 = vpop.f32.mrb[0].mxu0
      %v507 = vadd.f32 %v429, %v506
      %v508 = vpop.f32.mrb[0].mxu0
      %509 = vmatprep.mubr.f32.mxu0 0.0
      %510 = vmatmul.mubr.f32.gmra.mrb[0].mxu0 %v435
      %v511 = vpop.f32.mrb[0].mxu0
      %v512 = vadd.f32 %v429, %v511
      %v513 = vpop.f32.mrb[0].mxu0
      %514 = vmatprep.mubr.f32.mxu0 0.0
      %515 = vmatmul.mubr.f32.gmra.mrb[0].mxu0 %v438
      %v516 = vpop.f32.mrb[0].mxu0
      %v517 = vadd.f32 %v429, %v516
      %v518 = vpop.f32.mrb[0].mxu0
      %519 = vdwg.mxu0
      %v520 = vmax.f32 %v507, 0.0
      %v521 = vmax.f32 %v512, 0.0
      %v522 = vmax.f32 %v517, 0.0
      %s523 = scalar_lea.vmem %s3, 32
      %v524 = vld [vmem:[%s523] sm:$0xff]
      %v525 = vld [vmem:[%s523 + $0x8] sm:$0xff]
      %v526 = vld [vmem:[%s523 + $0x10] sm:$0xff]
      %v527 = vld [vmem:[%s523 + $0x18] sm:$0xff]
      %v528 = vld [vmem:[%s7 + $0x1] sm:$0x1]
      %v529 = vlaneseq
      %v530 = vshrl.u32 %v529, 7
      %v531 = vsub.s32 0, %v530
      %v532 = vrot.slane %v528, %v531
      %v534 = vsel %vm430, %v520, 0
      %v537 = vsel %vm430, %v521, 0
      %v540 = vsel %vm430, %v522, 0
      %542 = vmatprep.subr.mxu0 0.0
      %543 = vmatpush1.msra.mxu0 %v524
      %544 = vmatprep.subr.mxu0 0.0
      %545 = vmatpush1.msra.mxu0 %v525
      %546 = vmatprep.subr.mxu0 0.0
      %547 = vmatpush1.msra.mxu0 %v526
      %548 = vmatprep.subr.mxu0 0.0
      %549 = vmatpush1.msra.mxu0 %v527
      %550 = vmatprep.subr.mxu0 0.0
      %551 = vmatpush1.msra.mxu0 0.0
      %552 = vmatprep.subr.mxu0 0.0
      %553 = vmatpush1.msra.mxu0 0.0
      %554 = vmatprep.subr.mxu0 0.0
      %555 = vmatpush1.msra.mxu0 0.0
      %556 = vmatprep.subr.mxu0 0.0
      %557 = vmatpush1.msra.mxu0 0.0
      %558 = vmatprep.subr.mxu0 0.0
      %559 = vmatpush1.msra.mxu0 0.0
      %560 = vmatprep.subr.mxu0 0.0
      %561 = vmatpush1.msra.mxu0 0.0
      %562 = vmatprep.subr.mxu0 0.0
      %563 = vmatpush1.msra.mxu0 0.0
      %564 = vmatprep.subr.mxu0 0.0
      %565 = vmatpush1.msra.mxu0 0.0
      %566 = vmatprep.subr.mxu0 0.0
      %567 = vmatpush1.msra.mxu0 0.0
      %568 = vmatprep.subr.mxu0 0.0
      %569 = vmatpush1.msra.mxu0 0.0
      %570 = vmatprep.subr.mxu0 0.0
      %571 = vmatpush1.msra.mxu0 0.0
      %572 = vmatprep.subr.mxu0 0.0
      %573 = vmatpush1.msra.mxu0 0.0
      %574 = vmatprep.subr.mxu0 0.0
      %575 = vmatpush1.msra.mxu0 0.0
      %576 = vmatprep.subr.mxu0 0.0
      %577 = vmatpush1.msra.mxu0 0.0
      %578 = vmatprep.subr.mxu0 0.0
      %579 = vmatpush1.msra.mxu0 0.0
      %580 = vmatprep.subr.mxu0 0.0
      %581 = vmatpush1.msra.mxu0 0.0
      %582 = vmatprep.subr.mxu0 0.0
      %583 = vmatpush1.msra.mxu0 0.0
      %584 = vmatprep.subr.mxu0 0.0
      %585 = vmatpush1.msra.mxu0 0.0
      %586 = vmatprep.subr.mxu0 0.0
      %587 = vmatpush1.msra.mxu0 0.0
      %588 = vmatprep.subr.mxu0 0.0
      %589 = vmatpush1.msra.mxu0 0.0
      %590 = vmatprep.subr.mxu0 0.0
      %591 = vmatpush1.msra.mxu0 0.0
      %592 = vmatprep.subr.mxu0 0.0
      %593 = vmatpush1.msra.mxu0 0.0
      %594 = vmatprep.subr.mxu0 0.0
      %595 = vmatpush1.msra.mxu0 0.0
      %596 = vmatprep.subr.mxu0 0.0
      %597 = vmatpush1.msra.mxu0 0.0
      %598 = vmatprep.subr.mxu0 0.0
      %599 = vmatpush1.msra.mxu0 0.0
      %600 = vmatprep.subr.mxu0 0.0
      %601 = vmatpush1.msra.mxu0 0.0
      %602 = vmatprep.subr.mxu0 0.0
      %603 = vmatpush1.msra.mxu0 0.0
      %604 = vmatprep.subr.mxu0 0.0
      %605 = vmatpush1.msra.mxu0 0.0
      %606 = vmatprep.mubr.f32.mxu0 0.0
      %607 = vmatmul.mubr.f32.gmra.mrb[0].mxu0 %v534
      %v608 = vpop.f32.mrb[0].mxu0
      %v609 = vadd.f32 %v532, %v608
      %v610 = vpop.f32.mrb[0].mxu0
      %611 = vmatprep.mubr.f32.mxu0 0.0
      %612 = vmatmul.mubr.f32.gmra.mrb[0].mxu0 %v537
      %v613 = vpop.f32.mrb[0].mxu0
      %v614 = vadd.f32 %v532, %v613
      %v615 = vpop.f32.mrb[0].mxu0
      %616 = vmatprep.mubr.f32.mxu0 0.0
      %617 = vmatmul.mubr.f32.gmra.mrb[0].mxu0 %v540
      %v618 = vpop.f32.mrb[0].mxu0
      %v619 = vadd.f32 %v532, %v618
      %v620 = vpop.f32.mrb[0].mxu0
      %621 = vdwg.mxu0
      %v622 = vmax.f32 %v609, 0.0
      %v623 = vmax.f32 %v614, 0.0
      %v624 = vmax.f32 %v619, 0.0
      %v625 = vld [vmem:[%s395] sm:$0xf]
      %v626 = vld [vmem:[%s395 + $0x4] sm:$0xf]
      %v627 = vld [vmem:[%s395 + $0x8] sm:$0xf]
      %v628 = vld [vmem:[%s395 + $0xc] sm:$0xf]
      %v629 = vld [vmem:[%s395 + $0x10] sm:$0xf]
      %v630 = vld [vmem:[%s395 + $0x14] sm:$0xf]
      %v631 = vld [vmem:[%s395 + $0x18] sm:$0xf]
      %v632 = vld [vmem:[%s395 + $0x1c] sm:$0xf]
      %v633 = vld [vmem:[%s395 + $0x20] sm:$0xf]
      %v634 = vld [vmem:[%s395 + $0x24] sm:$0xf]
      %v635 = vld [vmem:[%s395 + $0x28] sm:$0xf]
      %v636 = vld [vmem:[%s395 + $0x2c] sm:$0xf]
      %v637 = vld [vmem:[%s395 + $0x30] sm:$0xf]
      %v638 = vld [vmem:[%s395 + $0x34] sm:$0xf]
      %v639 = vld [vmem:[%s395 + $0x38] sm:$0xf]
      %v640 = vld [vmem:[%s395 + $0x3c] sm:$0xf]
      %v641 = vld [vmem:[%s395 + $0x40] sm:$0xf]
      %v642 = vld [vmem:[%s395 + $0x44] sm:$0xf]
      %v643 = vld [vmem:[%s395 + $0x48] sm:$0xf]
      %v644 = vld [vmem:[%s395 + $0x4c] sm:$0xf]
      %v645 = vld [vmem:[%s395 + $0x50] sm:$0xf]
      %v646 = vld [vmem:[%s395 + $0x54] sm:$0xf]
      %v647 = vld [vmem:[%s395 + $0x58] sm:$0xf]
      %v648 = vld [vmem:[%s395 + $0x5c] sm:$0xf]
      %v649 = vunpack.c.l.bf16 %v625
      %v650 = vunpack.c.l.bf16 %v626
      %v651 = vunpack.c.l.bf16 %v627
      %v652 = vunpack.c.l.bf16 %v628
      %v653 = vunpack.c.l.bf16 %v629
      %v654 = vunpack.c.l.bf16 %v630
      %v655 = vunpack.c.l.bf16 %v631
      %v656 = vunpack.c.l.bf16 %v632
      %v657 = vunpack.c.l.bf16 %v633
      %v658 = vunpack.c.l.bf16 %v634
      %v659 = vunpack.c.l.bf16 %v635
      %v660 = vunpack.c.l.bf16 %v636
      %v661 = vunpack.c.l.bf16 %v637
      %v662 = vunpack.c.l.bf16 %v638
      %v663 = vunpack.c.l.bf16 %v639
      %v664 = vunpack.c.l.bf16 %v640
      %v665 = vunpack.c.l.bf16 %v641
      %v666 = vunpack.c.l.bf16 %v642
      %v667 = vunpack.c.l.bf16 %v643
      %v668 = vunpack.c.l.bf16 %v644
      %v669 = vunpack.c.l.bf16 %v645
      %v670 = vunpack.c.l.bf16 %v646
      %v671 = vunpack.c.l.bf16 %v647
      %v672 = vunpack.c.l.bf16 %v648
      %v673 = vld [vmem:[%s405] sm:$0xff]
      %v674 = vld [vmem:[%s405 + $0x8] sm:$0xff]
      %v675 = vld [vmem:[%s405 + $0x10] sm:$0xff]
      %v676 = vld [vmem:[%s405 + $0x18] sm:$0xff]
      %v677 = vld [vmem:[%s405 + $0x20] sm:$0xff]
      %v678 = vld [vmem:[%s405 + $0x28] sm:$0xff]
      %v679 = vld [vmem:[%s405 + $0x30] sm:$0xff]
      %v680 = vld [vmem:[%s405 + $0x38] sm:$0xff]
      %v681 = vld [vmem:[%s405 + $0x40] sm:$0xff]
      %v682 = vld [vmem:[%s405 + $0x48] sm:$0xff]
      %v683 = vld [vmem:[%s405 + $0x50] sm:$0xff]
      %v684 = vld [vmem:[%s405 + $0x58] sm:$0xff]
      %v685 = vld [vmem:[%s405 + $0x60] sm:$0xff]
      %v686 = vld [vmem:[%s405 + $0x68] sm:$0xff]
      %v687 = vld [vmem:[%s405 + $0x70] sm:$0xff]
      %v688 = vld [vmem:[%s405 + $0x78] sm:$0xff]
      %v689 = vld [vmem:[%s405 + $0x80] sm:$0xff]
      %v690 = vld [vmem:[%s405 + $0x88] sm:$0xff]
      %v691 = vld [vmem:[%s405 + $0x90] sm:$0xff]
      %v692 = vld [vmem:[%s405 + $0x98] sm:$0xff]
      %v693 = vld [vmem:[%s405 + $0xa0] sm:$0xff]
      %v694 = vld [vmem:[%s405 + $0xa8] sm:$0xff]
      %v695 = vld [vmem:[%s405 + $0xb0] sm:$0xff]
      %v696 = vld [vmem:[%s405 + $0xb8] sm:$0xff]
      %v697 = vld [vmem:[%s5] sm:$0x1]
      %699 = vset.pattern.permute.xlu0 0
      %700 = vperm.xlu0 %699, %v673
      %v701 = vpop.permute.xlu0 %700
      %704 = vset.pattern.permute.xlu0 0
      %705 = vperm.xlu0 %704, %v674
      %v706 = vpop.permute.xlu0 %705
      %709 = vset.pattern.permute.xlu0 0
      %710 = vperm.xlu0 %709, %v675
      %v711 = vpop.permute.xlu0 %710
      %714 = vset.pattern.permute.xlu0 0
      %715 = vperm.xlu0 %714, %v676
      %v716 = vpop.permute.xlu0 %715
      %719 = vset.pattern.permute.xlu0 0
      %720 = vperm.xlu0 %719, %v677
      %v721 = vpop.permute.xlu0 %720
      %724 = vset.pattern.permute.xlu0 0
      %725 = vperm.xlu0 %724, %v678
      %v726 = vpop.permute.xlu0 %725
      %729 = vset.pattern.permute.xlu0 0
      %730 = vperm.xlu0 %729, %v679
      %v731 = vpop.permute.xlu0 %730
      %734 = vset.pattern.permute.xlu0 0
      %735 = vperm.xlu0 %734, %v680
      %v736 = vpop.permute.xlu0 %735
      %739 = vset.pattern.permute.xlu0 0
      %740 = vperm.xlu0 %739, %v681
      %v741 = vpop.permute.xlu0 %740
      %744 = vset.pattern.permute.xlu0 0
      %745 = vperm.xlu0 %744, %v682
      %v746 = vpop.permute.xlu0 %745
      %749 = vset.pattern.permute.xlu0 0
      %750 = vperm.xlu0 %749, %v683
      %v751 = vpop.permute.xlu0 %750
      %754 = vset.pattern.permute.xlu0 0
      %755 = vperm.xlu0 %754, %v684
      %v756 = vpop.permute.xlu0 %755
      %759 = vset.pattern.permute.xlu0 0
      %760 = vperm.xlu0 %759, %v685
      %v761 = vpop.permute.xlu0 %760
      %764 = vset.pattern.permute.xlu0 0
      %765 = vperm.xlu0 %764, %v686
      %v766 = vpop.permute.xlu0 %765
      %769 = vset.pattern.permute.xlu0 0
      %770 = vperm.xlu0 %769, %v687
      %v771 = vpop.permute.xlu0 %770
      %774 = vset.pattern.permute.xlu0 0
      %775 = vperm.xlu0 %774, %v688
      %v776 = vpop.permute.xlu0 %775
      %779 = vset.pattern.permute.xlu0 0
      %780 = vperm.xlu0 %779, %v689
      %v781 = vpop.permute.xlu0 %780
      %784 = vset.pattern.permute.xlu0 0
      %785 = vperm.xlu0 %784, %v690
      %v786 = vpop.permute.xlu0 %785
      %789 = vset.pattern.permute.xlu0 0
      %790 = vperm.xlu0 %789, %v691
      %v791 = vpop.permute.xlu0 %790
      %794 = vset.pattern.permute.xlu0 0
      %795 = vperm.xlu0 %794, %v692
      %v796 = vpop.permute.xlu0 %795
      %799 = vset.pattern.permute.xlu0 0
      %800 = vperm.xlu0 %799, %v693
      %v801 = vpop.permute.xlu0 %800
      %804 = vset.pattern.permute.xlu0 0
      %805 = vperm.xlu0 %804, %v694
      %v806 = vpop.permute.xlu0 %805
      %809 = vset.pattern.permute.xlu0 0
      %810 = vperm.xlu0 %809, %v695
      %v811 = vpop.permute.xlu0 %810
      %814 = vset.pattern.permute.xlu0 0
      %815 = vperm.xlu0 %814, %v696
      %v816 = vpop.permute.xlu0 %815
      %v818 = vlaneseq
      %v819 = vshrl.u32 %v818, 7
      %v820 = vsub.s32 0, %v819
      %v821 = vrot.slane %v697, %v820
      %v822 = vmul.f32 %v701, %v821
      %v823 = vmul.f32 %v706, %v821
      %v824 = vmul.f32 %v711, %v821
      %v825 = vmul.f32 %v716, %v821
      %v826 = vmul.f32 %v721, %v821
      %v827 = vmul.f32 %v726, %v821
      %v828 = vmul.f32 %v731, %v821
      %v829 = vmul.f32 %v736, %v821
      %v830 = vmul.f32 %v741, %v821
      %v831 = vmul.f32 %v746, %v821
      %v832 = vmul.f32 %v751, %v821
      %v833 = vmul.f32 %v756, %v821
      %v834 = vmul.f32 %v761, %v821
      %v835 = vmul.f32 %v766, %v821
      %v836 = vmul.f32 %v771, %v821
      %v837 = vmul.f32 %v776, %v821
      %v838 = vmul.f32 %v781, %v821
      %v839 = vmul.f32 %v786, %v821
      %v840 = vmul.f32 %v791, %v821
      %v841 = vmul.f32 %v796, %v821
      %v842 = vmul.f32 %v801, %v821
      %v843 = vmul.f32 %v806, %v821
      %v844 = vmul.f32 %v811, %v821
      %v845 = vmul.f32 %v816, %v821
      %v846 = vld [vmem:[%s5 + $0x1] sm:$0x1]
      %847 = vset.pattern.permute.xlu0 1
      %848 = vperm.xlu0 %847, %v673
      %v849 = vpop.permute.xlu0 %848
      %851 = vset.pattern.permute.xlu0 1
      %852 = vperm.xlu0 %851, %v674
      %v853 = vpop.permute.xlu0 %852
      %855 = vset.pattern.permute.xlu0 1
      %856 = vperm.xlu0 %855, %v675
      %v857 = vpop.permute.xlu0 %856
      %859 = vset.pattern.permute.xlu0 1
      %860 = vperm.xlu0 %859, %v676
      %v861 = vpop.permute.xlu0 %860
      %863 = vset.pattern.permute.xlu0 1
      %864 = vperm.xlu0 %863, %v677
      %v865 = vpop.permute.xlu0 %864
      %867 = vset.pattern.permute.xlu0 1
      %868 = vperm.xlu0 %867, %v678
      %v869 = vpop.permute.xlu0 %868
      %871 = vset.pattern.permute.xlu0 1
      %872 = vperm.xlu0 %871, %v679
      %v873 = vpop.permute.xlu0 %872
      %875 = vset.pattern.permute.xlu0 1
      %876 = vperm.xlu0 %875, %v680
      %v877 = vpop.permute.xlu0 %876
      %879 = vset.pattern.permute.xlu0 1
      %880 = vperm.xlu0 %879, %v681
      %v881 = vpop.permute.xlu0 %880
      %883 = vset.pattern.permute.xlu0 1
      %884 = vperm.xlu0 %883, %v682
      %v885 = vpop.permute.xlu0 %884
      %887 = vset.pattern.permute.xlu0 1
      %888 = vperm.xlu0 %887, %v683
      %v889 = vpop.permute.xlu0 %888
      %891 = vset.pattern.permute.xlu0 1
      %892 = vperm.xlu0 %891, %v684
      %v893 = vpop.permute.xlu0 %892
      %895 = vset.pattern.permute.xlu0 1
      %896 = vperm.xlu0 %895, %v685
      %v897 = vpop.permute.xlu0 %896
      %899 = vset.pattern.permute.xlu0 1
      %900 = vperm.xlu0 %899, %v686
      %v901 = vpop.permute.xlu0 %900
      %903 = vset.pattern.permute.xlu0 1
      %904 = vperm.xlu0 %903, %v687
      %v905 = vpop.permute.xlu0 %904
      %907 = vset.pattern.permute.xlu0 1
      %908 = vperm.xlu0 %907, %v688
      %v909 = vpop.permute.xlu0 %908
      %911 = vset.pattern.permute.xlu0 1
      %912 = vperm.xlu0 %911, %v689
      %v913 = vpop.permute.xlu0 %912
      %915 = vset.pattern.permute.xlu0 1
      %916 = vperm.xlu0 %915, %v690
      %v917 = vpop.permute.xlu0 %916
      %919 = vset.pattern.permute.xlu0 1
      %920 = vperm.xlu0 %919, %v691
      %v921 = vpop.permute.xlu0 %920
      %923 = vset.pattern.permute.xlu0 1
      %924 = vperm.xlu0 %923, %v692
      %v925 = vpop.permute.xlu0 %924
      %927 = vset.pattern.permute.xlu0 1
      %928 = vperm.xlu0 %927, %v693
      %v929 = vpop.permute.xlu0 %928
      %931 = vset.pattern.permute.xlu0 1
      %932 = vperm.xlu0 %931, %v694
      %v933 = vpop.permute.xlu0 %932
      %935 = vset.pattern.permute.xlu0 1
      %936 = vperm.xlu0 %935, %v695
      %v937 = vpop.permute.xlu0 %936
      %939 = vset.pattern.permute.xlu0 1
      %940 = vperm.xlu0 %939, %v696
      %v941 = vpop.permute.xlu0 %940
      %v943 = vlaneseq
      %v944 = vshrl.u32 %v943, 7
      %v945 = vsub.s32 0, %v944
      %v946 = vrot.slane %v846, %v945
      %v947 = vmul.f32 %v849, %v946
      %v948 = vmul.f32 %v853, %v946
      %v949 = vmul.f32 %v857, %v946
      %v950 = vmul.f32 %v861, %v946
      %v951 = vmul.f32 %v865, %v946
      %v952 = vmul.f32 %v869, %v946
      %v953 = vmul.f32 %v873, %v946
      %v954 = vmul.f32 %v877, %v946
      %v955 = vmul.f32 %v881, %v946
      %v956 = vmul.f32 %v885, %v946
      %v957 = vmul.f32 %v889, %v946
      %v958 = vmul.f32 %v893, %v946
      %v959 = vmul.f32 %v897, %v946
      %v960 = vmul.f32 %v901, %v946
      %v961 = vmul.f32 %v905, %v946
      %v962 = vmul.f32 %v909, %v946
      %v963 = vmul.f32 %v913, %v946
      %v964 = vmul.f32 %v917, %v946
      %v965 = vmul.f32 %v921, %v946
      %v966 = vmul.f32 %v925, %v946
      %v967 = vmul.f32 %v929, %v946
      %v968 = vmul.f32 %v933, %v946
      %v969 = vmul.f32 %v937, %v946
      %v970 = vmul.f32 %v941, %v946
      %v971 = vadd.f32 %v822, %v947
      %v972 = vadd.f32 %v823, %v948
      %v973 = vadd.f32 %v824, %v949
      %v974 = vadd.f32 %v825, %v950
      %v975 = vadd.f32 %v826, %v951
      %v976 = vadd.f32 %v827, %v952
      %v977 = vadd.f32 %v828, %v953
      %v978 = vadd.f32 %v829, %v954
      %v979 = vadd.f32 %v830, %v955
      %v980 = vadd.f32 %v831, %v956
      %v981 = vadd.f32 %v832, %v957
      %v982 = vadd.f32 %v833, %v958
      %v983 = vadd.f32 %v834, %v959
      %v984 = vadd.f32 %v835, %v960
      %v985 = vadd.f32 %v836, %v961
      %v986 = vadd.f32 %v837, %v962
      %v987 = vadd.f32 %v838, %v963
      %v988 = vadd.f32 %v839, %v964
      %v989 = vadd.f32 %v840, %v965
      %v990 = vadd.f32 %v841, %v966
      %v991 = vadd.f32 %v842, %v967
      %v992 = vadd.f32 %v843, %v968
      %v993 = vadd.f32 %v844, %v969
      %v994 = vadd.f32 %v845, %v970
      %v995 = vld [vmem:[%s5 + $0x2] sm:$0x1]
      %996 = vset.pattern.permute.xlu0 2
      %997 = vperm.xlu0 %996, %v673
      %v998 = vpop.permute.xlu0 %997
      %1000 = vset.pattern.permute.xlu0 2
      %1001 = vperm.xlu0 %1000, %v674
      %v1002 = vpop.permute.xlu0 %1001
      %1004 = vset.pattern.permute.xlu0 2
      %1005 = vperm.xlu0 %1004, %v675
      %v1006 = vpop.permute.xlu0 %1005
      %1008 = vset.pattern.permute.xlu0 2
      %1009 = vperm.xlu0 %1008, %v676
      %v1010 = vpop.permute.xlu0 %1009
      %1012 = vset.pattern.permute.xlu0 2
      %1013 = vperm.xlu0 %1012, %v677
      %v1014 = vpop.permute.xlu0 %1013
      %1016 = vset.pattern.permute.xlu0 2
      %1017 = vperm.xlu0 %1016, %v678
      %v1018 = vpop.permute.xlu0 %1017
      %1020 = vset.pattern.permute.xlu0 2
      %1021 = vperm.xlu0 %1020, %v679
      %v1022 = vpop.permute.xlu0 %1021
      %1024 = vset.pattern.permute.xlu0 2
      %1025 = vperm.xlu0 %1024, %v680
      %v1026 = vpop.permute.xlu0 %1025
      %1028 = vset.pattern.permute.xlu0 2
      %1029 = vperm.xlu0 %1028, %v681
      %v1030 = vpop.permute.xlu0 %1029
      %1032 = vset.pattern.permute.xlu0 2
      %1033 = vperm.xlu0 %1032, %v682
      %v1034 = vpop.permute.xlu0 %1033
      %1036 = vset.pattern.permute.xlu0 2
      %1037 = vperm.xlu0 %1036, %v683
      %v1038 = vpop.permute.xlu0 %1037
      %1040 = vset.pattern.permute.xlu0 2
      %1041 = vperm.xlu0 %1040, %v684
      %v1042 = vpop.permute.xlu0 %1041
      %1044 = vset.pattern.permute.xlu0 2
      %1045 = vperm.xlu0 %1044, %v685
      %v1046 = vpop.permute.xlu0 %1045
      %1048 = vset.pattern.permute.xlu0 2
      %1049 = vperm.xlu0 %1048, %v686
      %v1050 = vpop.permute.xlu0 %1049
      %1052 = vset.pattern.permute.xlu0 2
      %1053 = vperm.xlu0 %1052, %v687
      %v1054 = vpop.permute.xlu0 %1053
      %1056 = vset.pattern.permute.xlu0 2
      %1057 = vperm.xlu0 %1056, %v688
      %v1058 = vpop.permute.xlu0 %1057
      %1060 = vset.pattern.permute.xlu0 2
      %1061 = vperm.xlu0 %1060, %v689
      %v1062 = vpop.permute.xlu0 %1061
      %1064 = vset.pattern.permute.xlu0 2
      %1065 = vperm.xlu0 %1064, %v690
      %v1066 = vpop.permute.xlu0 %1065
      %1068 = vset.pattern.permute.xlu0 2
      %1069 = vperm.xlu0 %1068, %v691
      %v1070 = vpop.permute.xlu0 %1069
      %1072 = vset.pattern.permute.xlu0 2
      %1073 = vperm.xlu0 %1072, %v692
      %v1074 = vpop.permute.xlu0 %1073
      %1076 = vset.pattern.permute.xlu0 2
      %1077 = vperm.xlu0 %1076, %v693
      %v1078 = vpop.permute.xlu0 %1077
      %1080 = vset.pattern.permute.xlu0 2
      %1081 = vperm.xlu0 %1080, %v694
      %v1082 = vpop.permute.xlu0 %1081
      %1084 = vset.pattern.permute.xlu0 2
      %1085 = vperm.xlu0 %1084, %v695
      %v1086 = vpop.permute.xlu0 %1085
      %1088 = vset.pattern.permute.xlu0 2
      %1089 = vperm.xlu0 %1088, %v696
      %v1090 = vpop.permute.xlu0 %1089
      %v1092 = vlaneseq
      %v1093 = vshrl.u32 %v1092, 7
      %v1094 = vsub.s32 0, %v1093
      %v1095 = vrot.slane %v995, %v1094
      %v1096 = vmul.f32 %v998, %v1095
      %v1097 = vmul.f32 %v1002, %v1095
      %v1098 = vmul.f32 %v1006, %v1095
      %v1099 = vmul.f32 %v1010, %v1095
      %v1100 = vmul.f32 %v1014, %v1095
      %v1101 = vmul.f32 %v1018, %v1095
      %v1102 = vmul.f32 %v1022, %v1095
      %v1103 = vmul.f32 %v1026, %v1095
      %v1104 = vmul.f32 %v1030, %v1095
      %v1105 = vmul.f32 %v1034, %v1095
      %v1106 = vmul.f32 %v1038, %v1095
      %v1107 = vmul.f32 %v1042, %v1095
      %v1108 = vmul.f32 %v1046, %v1095
      %v1109 = vmul.f32 %v1050, %v1095
      %v1110 = vmul.f32 %v1054, %v1095
      %v1111 = vmul.f32 %v1058, %v1095
      %v1112 = vmul.f32 %v1062, %v1095
      %v1113 = vmul.f32 %v1066, %v1095
      %v1114 = vmul.f32 %v1070, %v1095
      %v1115 = vmul.f32 %v1074, %v1095
      %v1116 = vmul.f32 %v1078, %v1095
      %v1117 = vmul.f32 %v1082, %v1095
      %v1118 = vmul.f32 %v1086, %v1095
      %v1119 = vmul.f32 %v1090, %v1095
      %v1120 = vadd.f32 %v971, %v1096
      %v1121 = vadd.f32 %v972, %v1097
      %v1122 = vadd.f32 %v973, %v1098
      %v1123 = vadd.f32 %v974, %v1099
      %v1124 = vadd.f32 %v975, %v1100
      %v1125 = vadd.f32 %v976, %v1101
      %v1126 = vadd.f32 %v977, %v1102
      %v1127 = vadd.f32 %v978, %v1103
      %v1128 = vadd.f32 %v979, %v1104
      %v1129 = vadd.f32 %v980, %v1105
      %v1130 = vadd.f32 %v981, %v1106
      %v1131 = vadd.f32 %v982, %v1107
      %v1132 = vadd.f32 %v983, %v1108
      %v1133 = vadd.f32 %v984, %v1109
      %v1134 = vadd.f32 %v985, %v1110
      %v1135 = vadd.f32 %v986, %v1111
      %v1136 = vadd.f32 %v987, %v1112
      %v1137 = vadd.f32 %v988, %v1113
      %v1138 = vadd.f32 %v989, %v1114
      %v1139 = vadd.f32 %v990, %v1115
      %v1140 = vadd.f32 %v991, %v1116
      %v1141 = vadd.f32 %v992, %v1117
      %v1142 = vadd.f32 %v993, %v1118
      %v1143 = vadd.f32 %v994, %v1119
      %v1144 = vld [vmem:[%s5 + $0x3] sm:$0x1]
      %v1145 = vlaneseq
      %v1146 = vshrl.u32 %v1145, 7
      %v1147 = vsub.s32 0, %v1146
      %v1148 = vrot.slane %v1144, %v1147
      %v1149 = vadd.f32 %v1120, %v1148
      %v1150 = vadd.f32 %v1121, %v1148
      %v1151 = vadd.f32 %v1122, %v1148
      %v1152 = vadd.f32 %v1123, %v1148
      %v1153 = vadd.f32 %v1124, %v1148
      %v1154 = vadd.f32 %v1125, %v1148
      %v1155 = vadd.f32 %v1126, %v1148
      %v1156 = vadd.f32 %v1127, %v1148
      %v1157 = vadd.f32 %v1128, %v1148
      %v1158 = vadd.f32 %v1129, %v1148
      %v1159 = vadd.f32 %v1130, %v1148
      %v1160 = vadd.f32 %v1131, %v1148
      %v1161 = vadd.f32 %v1132, %v1148
      %v1162 = vadd.f32 %v1133, %v1148
      %v1163 = vadd.f32 %v1134, %v1148
      %v1164 = vadd.f32 %v1135, %v1148
      %v1165 = vadd.f32 %v1136, %v1148
      %v1166 = vadd.f32 %v1137, %v1148
      %v1167 = vadd.f32 %v1138, %v1148
      %v1168 = vadd.f32 %v1139, %v1148
      %v1169 = vadd.f32 %v1140, %v1148
      %v1170 = vadd.f32 %v1141, %v1148
      %v1171 = vadd.f32 %v1142, %v1148
      %v1172 = vadd.f32 %v1143, %v1148
      %v1173 = vmax.f32 %v1149, 0.0
      %v1174 = vmax.f32 %v1150, 0.0
      %v1175 = vmax.f32 %v1151, 0.0
      %v1176 = vmax.f32 %v1152, 0.0
      %v1177 = vmax.f32 %v1153, 0.0
      %v1178 = vmax.f32 %v1154, 0.0
      %v1179 = vmax.f32 %v1155, 0.0
      %v1180 = vmax.f32 %v1156, 0.0
      %v1181 = vmax.f32 %v1157, 0.0
      %v1182 = vmax.f32 %v1158, 0.0
      %v1183 = vmax.f32 %v1159, 0.0
      %v1184 = vmax.f32 %v1160, 0.0
      %v1185 = vmax.f32 %v1161, 0.0
      %v1186 = vmax.f32 %v1162, 0.0
      %v1187 = vmax.f32 %v1163, 0.0
      %v1188 = vmax.f32 %v1164, 0.0
      %v1189 = vmax.f32 %v1165, 0.0
      %v1190 = vmax.f32 %v1166, 0.0
      %v1191 = vmax.f32 %v1167, 0.0
      %v1192 = vmax.f32 %v1168, 0.0
      %v1193 = vmax.f32 %v1169, 0.0
      %v1194 = vmax.f32 %v1170, 0.0
      %v1195 = vmax.f32 %v1171, 0.0
      %v1196 = vmax.f32 %v1172, 0.0
      %v1197 = vpack.c.bf16 %v1174, %v1173
      %v1198 = vpack.c.bf16 %v1176, %v1175
      %v1199 = vpack.c.bf16 %v1178, %v1177
      %v1200 = vpack.c.bf16 %v1180, %v1179
      %v1201 = vpack.c.bf16 %v1182, %v1181
      %v1202 = vpack.c.bf16 %v1184, %v1183
      %v1203 = vpack.c.bf16 %v1186, %v1185
      %v1204 = vpack.c.bf16 %v1188, %v1187
      %v1205 = vpack.c.bf16 %v1190, %v1189
      %v1206 = vpack.c.bf16 %v1192, %v1191
      %v1207 = vpack.c.bf16 %v1194, %v1193
      %v1208 = vpack.c.bf16 %v1196, %v1195
      %v1209 = vld [vmem:[%s6] sm:$0xf]
      %v1210 = vld [vmem:[%s6 + $0x4] sm:$0xf]
      %v1211 = vld [vmem:[%s6 + $0x8] sm:$0xf]
      %v1212 = vld [vmem:[%s6 + $0xc] sm:$0xf]
      %v1213 = vld [vmem:[%s6 + $0x10] sm:$0xf]
      %v1214 = vld [vmem:[%s6 + $0x14] sm:$0xf]
      %v1215 = vld [vmem:[%s6 + $0x18] sm:$0xf]
      %v1216 = vld [vmem:[%s6 + $0x1c] sm:$0xf]
      %v1217 = vld [vmem:[%s5 + $0x4] sm:$0x1]
      %v1218 = vlaneseq
      %v1219 = vshrl.u32 %v1218, 7
      %v1220 = vsub.s32 0, %v1219
      %v1221 = vrot.slane %v1217, %v1220
      %v1230 = vunpack.c.l.b16 %v1209
      %v1231 = vunpack.c.l.b16 %v1210
      %v1232 = vunpack.c.l.b16 %v1211
      %v1233 = vunpack.c.l.b16 %v1212
      %v1234 = vunpack.c.l.b16 %v1213
      %v1235 = vunpack.c.l.b16 %v1214
      %v1236 = vunpack.c.l.b16 %v1215
      %v1237 = vunpack.c.l.b16 %v1216
      %v1238 = vpack.c.b16 %v1231, %v1230
      %v1239 = vpack.c.b16 %v1233, %v1232
      %v1240 = vpack.c.b16 %v1235, %v1234
      %v1241 = vpack.c.b16 %v1237, %v1236
      %vm1246 = vcmask 523264
      %v1248 = vsel %vm1246, %v1197, 0
      %v1251 = vsel %vm1246, %v1198, 0
      %v1254 = vsel %vm1246, %v1199, 0
      %v1257 = vsel %vm1246, %v1200, 0
      %v1260 = vsel %vm1246, %v1201, 0
      %v1263 = vsel %vm1246, %v1202, 0
      %v1266 = vsel %vm1246, %v1203, 0
      %v1269 = vsel %vm1246, %v1204, 0
      %v1272 = vsel %vm1246, %v1205, 0
      %v1275 = vsel %vm1246, %v1206, 0
      %v1278 = vsel %vm1246, %v1207, 0
      %v1281 = vsel %vm1246, %v1208, 0
      %1283 = vmatprep.subr.bf16.mxu0 0
      %1284 = vmatpush1.bf16.msra.mxu0 %v1238
      %1285 = vmatprep.subr.bf16.mxu0 0
      %1286 = vmatpush1.bf16.msra.mxu0 %v1239
      %1287 = vmatprep.subr.bf16.mxu0 0
      %1288 = vmatpush1.bf16.msra.mxu0 %v1240
      %1289 = vmatprep.subr.bf16.mxu0 0
      %1290 = vmatpush1.bf16.msra.mxu0 %v1241
      %1291 = vmatprep.subr.bf16.mxu0 0
      %1292 = vmatpush1.bf16.msra.mxu0 0
      %1293 = vmatprep.subr.bf16.mxu0 0
      %1294 = vmatpush1.bf16.msra.mxu0 0
      %1295 = vmatprep.subr.bf16.mxu0 0
      %1296 = vmatpush1.bf16.msra.mxu0 0
      %1297 = vmatprep.subr.bf16.mxu0 0
      %1298 = vmatpush1.bf16.msra.mxu0 0
      %1299 = vmatprep.subr.bf16.mxu0 0
      %1300 = vmatpush1.bf16.msra.mxu0 0
      %1301 = vmatprep.subr.bf16.mxu0 0
      %1302 = vmatpush1.bf16.msra.mxu0 0
      %1303 = vmatprep.subr.bf16.mxu0 0
      %1304 = vmatpush1.bf16.msra.mxu0 0
      %1305 = vmatprep.subr.bf16.mxu0 0
      %1306 = vmatpush1.bf16.msra.mxu0 0
      %1307 = vmatprep.subr.bf16.mxu0 0
      %1308 = vmatpush1.bf16.msra.mxu0 0
      %1309 = vmatprep.subr.bf16.mxu0 0
      %1310 = vmatpush1.bf16.msra.mxu0 0
      %1311 = vmatprep.subr.bf16.mxu0 0
      %1312 = vmatpush1.bf16.msra.mxu0 0
      %1313 = vmatprep.subr.bf16.mxu0 0
      %1314 = vmatpush1.bf16.msra.mxu0 0
      %1315 = vmatprep.mubr.bf16.mxu0 0
      %1316 = vmatmul.mubr.bf16.gmra.mrb[0].mxu0 %v1248
      %v1317 = vpop.f32.mrb[0].mxu0
      %v1318 = vadd.f32 %v1221, %v1317
      %v1319 = vpop.f32.mrb[0].mxu0
      %v1320 = vpop.f32.mrb[0].mxu0
      %v1321 = vadd.f32 %v1221, %v1320
      %v1322 = vpop.f32.mrb[0].mxu0
      %1323 = vmatprep.mubr.bf16.mxu0 0
      %1324 = vmatmul.mubr.bf16.gmra.mrb[0].mxu0 %v1251
      %v1325 = vpop.f32.mrb[0].mxu0
      %v1326 = vadd.f32 %v1221, %v1325
      %v1327 = vpop.f32.mrb[0].mxu0
      %v1328 = vpop.f32.mrb[0].mxu0
      %v1329 = vadd.f32 %v1221, %v1328
      %v1330 = vpop.f32.mrb[0].mxu0
      %1331 = vmatprep.mubr.bf16.mxu0 0
      %1332 = vmatmul.mubr.bf16.gmra.mrb[0].mxu0 %v1254
      %v1333 = vpop.f32.mrb[0].mxu0
      %v1334 = vadd.f32 %v1221, %v1333
      %v1335 = vpop.f32.mrb[0].mxu0
      %v1336 = vpop.f32.mrb[0].mxu0
      %v1337 = vadd.f32 %v1221, %v1336
      %v1338 = vpop.f32.mrb[0].mxu0
      %1339 = vmatprep.mubr.bf16.mxu0 0
      %1340 = vmatmul.mubr.bf16.gmra.mrb[0].mxu0 %v1257
      %v1341 = vpop.f32.mrb[0].mxu0
      %v1342 = vadd.f32 %v1221, %v1341
      %v1343 = vpop.f32.mrb[0].mxu0
      %v1344 = vpop.f32.mrb[0].mxu0
      %v1345 = vadd.f32 %v1221, %v1344
      %v1346 = vpop.f32.mrb[0].mxu0
      %1347 = vmatprep.mubr.bf16.mxu0 0
      %1348 = vmatmul.mubr.bf16.gmra.mrb[0].mxu0 %v1260
      %v1349 = vpop.f32.mrb[0].mxu0
      %v1350 = vadd.f32 %v1221, %v1349
      %v1351 = vpop.f32.mrb[0].mxu0
      %v1352 = vpop.f32.mrb[0].mxu0
      %v1353 = vadd.f32 %v1221, %v1352
      %v1354 = vpop.f32.mrb[0].mxu0
      %1355 = vmatprep.mubr.bf16.mxu0 0
      %1356 = vmatmul.mubr.bf16.gmra.mrb[0].mxu0 %v1263
      %v1357 = vpop.f32.mrb[0].mxu0
      %v1358 = vadd.f32 %v1221, %v1357
      %v1359 = vpop.f32.mrb[0].mxu0
      %v1360 = vpop.f32.mrb[0].mxu0
      %v1361 = vadd.f32 %v1221, %v1360
      %v1362 = vpop.f32.mrb[0].mxu0
      %1363 = vmatprep.mubr.bf16.mxu0 0
      %1364 = vmatmul.mubr.bf16.gmra.mrb[0].mxu0 %v1266
      %v1365 = vpop.f32.mrb[0].mxu0
      %v1366 = vadd.f32 %v1221, %v1365
      %v1367 = vpop.f32.mrb[0].mxu0
      %v1368 = vpop.f32.mrb[0].mxu0
      %v1369 = vadd.f32 %v1221, %v1368
      %v1370 = vpop.f32.mrb[0].mxu0
      %1371 = vmatprep.mubr.bf16.mxu0 0
      %1372 = vmatmul.mubr.bf16.gmra.mrb[0].mxu0 %v1269
      %v1373 = vpop.f32.mrb[0].mxu0
      %v1374 = vadd.f32 %v1221, %v1373
      %v1375 = vpop.f32.mrb[0].mxu0
      %v1376 = vpop.f32.mrb[0].mxu0
      %v1377 = vadd.f32 %v1221, %v1376
      %v1378 = vpop.f32.mrb[0].mxu0
      %1379 = vmatprep.mubr.bf16.mxu0 0
      %1380 = vmatmul.mubr.bf16.gmra.mrb[0].mxu0 %v1272
      %v1381 = vpop.f32.mrb[0].mxu0
      %v1382 = vadd.f32 %v1221, %v1381
      %v1383 = vpop.f32.mrb[0].mxu0
      %v1384 = vpop.f32.mrb[0].mxu0
      %v1385 = vadd.f32 %v1221, %v1384
      %v1386 = vpop.f32.mrb[0].mxu0
      %1387 = vmatprep.mubr.bf16.mxu0 0
      %1388 = vmatmul.mubr.bf16.gmra.mrb[0].mxu0 %v1275
      %v1389 = vpop.f32.mrb[0].mxu0
      %v1390 = vadd.f32 %v1221, %v1389
      %v1391 = vpop.f32.mrb[0].mxu0
      %v1392 = vpop.f32.mrb[0].mxu0
      %v1393 = vadd.f32 %v1221, %v1392
      %v1394 = vpop.f32.mrb[0].mxu0
      %1395 = vmatprep.mubr.bf16.mxu0 0
      %1396 = vmatmul.mubr.bf16.gmra.mrb[0].mxu0 %v1278
      %v1397 = vpop.f32.mrb[0].mxu0
      %v1398 = vadd.f32 %v1221, %v1397
      %v1399 = vpop.f32.mrb[0].mxu0
      %v1400 = vpop.f32.mrb[0].mxu0
      %v1401 = vadd.f32 %v1221, %v1400
      %v1402 = vpop.f32.mrb[0].mxu0
      %1403 = vmatprep.mubr.bf16.mxu0 0
      %1404 = vmatmul.mubr.bf16.gmra.mrb[0].mxu0 %v1281
      %v1405 = vpop.f32.mrb[0].mxu0
      %v1406 = vadd.f32 %v1221, %v1405
      %v1407 = vpop.f32.mrb[0].mxu0
      %v1408 = vpop.f32.mrb[0].mxu0
      %v1409 = vadd.f32 %v1221, %v1408
      %v1410 = vpop.f32.mrb[0].mxu0
      %1411 = vdwg.mxu0
      %v1415 = vcombine.high %v622, %v622
      %v1417 = vunpack.c.l.s4 1966171168
      %v1418 = vunpack.c.0.s8 %v1417
      %v1419 = vlaneseq
      %v1420 = vshrl.u32 %v1419, 7
      %v1421 = vsub.s32 %v1418, %v1420
      %v1422 = vrot.slane %v622, %v1421
      %v1424 = vunpack.c.l.s4 1966171168
      %v1425 = vunpack.c.0.s8 %v1424
      %v1426 = vlaneseq
      %v1427 = vshrl.u32 %v1426, 7
      %v1428 = vsub.s32 %v1425, %v1427
      %v1429 = vrot.slane %v1415, %v1428
      %v1430 = vcombine.high %v1422, %v1422
      %v1431 = vcombine.high %v1429, %v1429
      %v1433 = vunpack.c.l.s4 1966171168
      %v1434 = vunpack.c.0.s8 %v1433
      %v1435 = vlaneseq
      %v1436 = vshrl.u32 %v1435, 7
      %v1437 = vsub.s32 %v1434, %v1436
      %v1438 = vrot.slane %v1422, %v1437
      %v1440 = vunpack.c.l.s4 1966171168
      %v1441 = vunpack.c.0.s8 %v1440
      %v1442 = vlaneseq
      %v1443 = vshrl.u32 %v1442, 7
      %v1444 = vsub.s32 %v1441, %v1443
      %v1445 = vrot.slane %v1429, %v1444
      %v1447 = vunpack.c.l.s4 1966171168
      %v1448 = vunpack.c.0.s8 %v1447
      %v1449 = vlaneseq
      %v1450 = vshrl.u32 %v1449, 7
      %v1451 = vsub.s32 %v1448, %v1450
      %v1452 = vrot.slane %v1430, %v1451
      %v1454 = vunpack.c.l.s4 1966171168
      %v1455 = vunpack.c.0.s8 %v1454
      %v1456 = vlaneseq
      %v1457 = vshrl.u32 %v1456, 7
      %v1458 = vsub.s32 %v1455, %v1457
      %v1459 = vrot.slane %v1431, %v1458
      %v1460 = vcombine.high %v1438, %v1438
      %v1461 = vcombine.high %v1445, %v1445
      %v1462 = vcombine.high %v1452, %v1452
      %v1463 = vcombine.high %v1459, %v1459
      %v1464 = vcombine.high %v623, %v623
      %v1466 = vunpack.c.l.s4 1966171168
      %v1467 = vunpack.c.0.s8 %v1466
      %v1468 = vlaneseq
      %v1469 = vshrl.u32 %v1468, 7
      %v1470 = vsub.s32 %v1467, %v1469
      %v1471 = vrot.slane %v623, %v1470
      %v1473 = vunpack.c.l.s4 1966171168
      %v1474 = vunpack.c.0.s8 %v1473
      %v1475 = vlaneseq
      %v1476 = vshrl.u32 %v1475, 7
      %v1477 = vsub.s32 %v1474, %v1476
      %v1478 = vrot.slane %v1464, %v1477
      %v1479 = vcombine.high %v1471, %v1471
      %v1480 = vcombine.high %v1478, %v1478
      %v1482 = vunpack.c.l.s4 1966171168
      %v1483 = vunpack.c.0.s8 %v1482
      %v1484 = vlaneseq
      %v1485 = vshrl.u32 %v1484, 7
      %v1486 = vsub.s32 %v1483, %v1485
      %v1487 = vrot.slane %v1471, %v1486
      %v1489 = vunpack.c.l.s4 1966171168
      %v1490 = vunpack.c.0.s8 %v1489
      %v1491 = vlaneseq
      %v1492 = vshrl.u32 %v1491, 7
      %v1493 = vsub.s32 %v1490, %v1492
      %v1494 = vrot.slane %v1478, %v1493
      %v1496 = vunpack.c.l.s4 1966171168
      %v1497 = vunpack.c.0.s8 %v1496
      %v1498 = vlaneseq
      %v1499 = vshrl.u32 %v1498, 7
      %v1500 = vsub.s32 %v1497, %v1499
      %v1501 = vrot.slane %v1479, %v1500
      %v1503 = vunpack.c.l.s4 1966171168
      %v1504 = vunpack.c.0.s8 %v1503
      %v1505 = vlaneseq
      %v1506 = vshrl.u32 %v1505, 7
      %v1507 = vsub.s32 %v1504, %v1506
      %v1508 = vrot.slane %v1480, %v1507
      %v1509 = vcombine.high %v1487, %v1487
      %v1510 = vcombine.high %v1494, %v1494
      %v1511 = vcombine.high %v1501, %v1501
      %v1512 = vcombine.high %v1508, %v1508
      %v1513 = vcombine.high %v624, %v624
      %v1515 = vunpack.c.l.s4 1966171168
      %v1516 = vunpack.c.0.s8 %v1515
      %v1517 = vlaneseq
      %v1518 = vshrl.u32 %v1517, 7
      %v1519 = vsub.s32 %v1516, %v1518
      %v1520 = vrot.slane %v624, %v1519
      %v1522 = vunpack.c.l.s4 1966171168
      %v1523 = vunpack.c.0.s8 %v1522
      %v1524 = vlaneseq
      %v1525 = vshrl.u32 %v1524, 7
      %v1526 = vsub.s32 %v1523, %v1525
      %v1527 = vrot.slane %v1513, %v1526
      %v1528 = vcombine.high %v1520, %v1520
      %v1529 = vcombine.high %v1527, %v1527
      %v1531 = vunpack.c.l.s4 1966171168
      %v1532 = vunpack.c.0.s8 %v1531
      %v1533 = vlaneseq
      %v1534 = vshrl.u32 %v1533, 7
      %v1535 = vsub.s32 %v1532, %v1534
      %v1536 = vrot.slane %v1520, %v1535
      %v1538 = vunpack.c.l.s4 1966171168
      %v1539 = vunpack.c.0.s8 %v1538
      %v1540 = vlaneseq
      %v1541 = vshrl.u32 %v1540, 7
      %v1542 = vsub.s32 %v1539, %v1541
      %v1543 = vrot.slane %v1527, %v1542
      %v1545 = vunpack.c.l.s4 1966171168
      %v1546 = vunpack.c.0.s8 %v1545
      %v1547 = vlaneseq
      %v1548 = vshrl.u32 %v1547, 7
      %v1549 = vsub.s32 %v1546, %v1548
      %v1550 = vrot.slane %v1528, %v1549
      %v1552 = vunpack.c.l.s4 1966171168
      %v1553 = vunpack.c.0.s8 %v1552
      %v1554 = vlaneseq
      %v1555 = vshrl.u32 %v1554, 7
      %v1556 = vsub.s32 %v1553, %v1555
      %v1557 = vrot.slane %v1529, %v1556
      %v1558 = vcombine.high %v1536, %v1536
      %v1559 = vcombine.high %v1543, %v1543
      %v1560 = vcombine.high %v1550, %v1550
      %v1561 = vcombine.high %v1557, %v1557
      %v1562 = vlaneseq
      %v1563 = vshrl.u32 %v1562, 7
      %v1564 = vsub.s32 0, %v1563
      %v1565 = vrot.slane %v1438, %v1564
      %v1566 = vlaneseq
      %v1567 = vshrl.u32 %v1566, 7
      %v1568 = vsub.s32 0, %v1567
      %v1569 = vrot.slane %v1452, %v1568
      %v1570 = vlaneseq
      %v1571 = vshrl.u32 %v1570, 7
      %v1572 = vsub.s32 0, %v1571
      %v1573 = vrot.slane %v1460, %v1572
      %v1574 = vlaneseq
      %v1575 = vshrl.u32 %v1574, 7
      %v1576 = vsub.s32 0, %v1575
      %v1577 = vrot.slane %v1462, %v1576
      %v1578 = vlaneseq
      %v1579 = vshrl.u32 %v1578, 7
      %v1580 = vsub.s32 0, %v1579
      %v1581 = vrot.slane %v1445, %v1580
      %v1582 = vlaneseq
      %v1583 = vshrl.u32 %v1582, 7
      %v1584 = vsub.s32 0, %v1583
      %v1585 = vrot.slane %v1459, %v1584
      %v1586 = vlaneseq
      %v1587 = vshrl.u32 %v1586, 7
      %v1588 = vsub.s32 0, %v1587
      %v1589 = vrot.slane %v1461, %v1588
      %v1590 = vlaneseq
      %v1591 = vshrl.u32 %v1590, 7
      %v1592 = vsub.s32 0, %v1591
      %v1593 = vrot.slane %v1463, %v1592
      %v1594 = vlaneseq
      %v1595 = vshrl.u32 %v1594, 7
      %v1596 = vsub.s32 0, %v1595
      %v1597 = vrot.slane %v1487, %v1596
      %v1598 = vlaneseq
      %v1599 = vshrl.u32 %v1598, 7
      %v1600 = vsub.s32 0, %v1599
      %v1601 = vrot.slane %v1501, %v1600
      %v1602 = vlaneseq
      %v1603 = vshrl.u32 %v1602, 7
      %v1604 = vsub.s32 0, %v1603
      %v1605 = vrot.slane %v1509, %v1604
      %v1606 = vlaneseq
      %v1607 = vshrl.u32 %v1606, 7
      %v1608 = vsub.s32 0, %v1607
      %v1609 = vrot.slane %v1511, %v1608
      %v1610 = vlaneseq
      %v1611 = vshrl.u32 %v1610, 7
      %v1612 = vsub.s32 0, %v1611
      %v1613 = vrot.slane %v1494, %v1612
      %v1614 = vlaneseq
      %v1615 = vshrl.u32 %v1614, 7
      %v1616 = vsub.s32 0, %v1615
      %v1617 = vrot.slane %v1508, %v1616
      %v1618 = vlaneseq
      %v1619 = vshrl.u32 %v1618, 7
      %v1620 = vsub.s32 0, %v1619
      %v1621 = vrot.slane %v1510, %v1620
      %v1622 = vlaneseq
      %v1623 = vshrl.u32 %v1622, 7
      %v1624 = vsub.s32 0, %v1623
      %v1625 = vrot.slane %v1512, %v1624
      %v1626 = vlaneseq
      %v1627 = vshrl.u32 %v1626, 7
      %v1628 = vsub.s32 0, %v1627
      %v1629 = vrot.slane %v1536, %v1628
      %v1630 = vlaneseq
      %v1631 = vshrl.u32 %v1630, 7
      %v1632 = vsub.s32 0, %v1631
      %v1633 = vrot.slane %v1550, %v1632
      %v1634 = vlaneseq
      %v1635 = vshrl.u32 %v1634, 7
      %v1636 = vsub.s32 0, %v1635
      %v1637 = vrot.slane %v1558, %v1636
      %v1638 = vlaneseq
      %v1639 = vshrl.u32 %v1638, 7
      %v1640 = vsub.s32 0, %v1639
      %v1641 = vrot.slane %v1560, %v1640
      %v1642 = vlaneseq
      %v1643 = vshrl.u32 %v1642, 7
      %v1644 = vsub.s32 0, %v1643
      %v1645 = vrot.slane %v1543, %v1644
      %v1646 = vlaneseq
      %v1647 = vshrl.u32 %v1646, 7
      %v1648 = vsub.s32 0, %v1647
      %v1649 = vrot.slane %v1557, %v1648
      %v1650 = vlaneseq
      %v1651 = vshrl.u32 %v1650, 7
      %v1652 = vsub.s32 0, %v1651
      %v1653 = vrot.slane %v1559, %v1652
      %v1654 = vlaneseq
      %v1655 = vshrl.u32 %v1654, 7
      %v1656 = vsub.s32 0, %v1655
      %v1657 = vrot.slane %v1561, %v1656
      %v1682 = vsub.f32 %v649, %v1565
      %v1683 = vsub.f32 %v650, %v1569
      %v1684 = vsub.f32 %v651, %v1573
      %v1685 = vsub.f32 %v652, %v1577
      %v1686 = vsub.f32 %v653, %v1581
      %v1687 = vsub.f32 %v654, %v1585
      %v1688 = vsub.f32 %v655, %v1589
      %v1689 = vsub.f32 %v656, %v1593
      %v1690 = vsub.f32 %v657, %v1597
      %v1691 = vsub.f32 %v658, %v1601
      %v1692 = vsub.f32 %v659, %v1605
      %v1693 = vsub.f32 %v660, %v1609
      %v1694 = vsub.f32 %v661, %v1613
      %v1695 = vsub.f32 %v662, %v1617
      %v1696 = vsub.f32 %v663, %v1621
      %v1697 = vsub.f32 %v664, %v1625
      %v1698 = vsub.f32 %v665, %v1629
      %v1699 = vsub.f32 %v666, %v1633
      %v1700 = vsub.f32 %v667, %v1637
      %v1701 = vsub.f32 %v668, %v1641
      %v1702 = vsub.f32 %v669, %v1645
      %v1703 = vsub.f32 %v670, %v1649
      %v1704 = vsub.f32 %v671, %v1653
      %v1705 = vsub.f32 %v672, %v1657
      %v1706 = vmul.f32 %v1682, %v1318
      %v1707 = vmul.f32 %v1683, %v1321
      %v1708 = vmul.f32 %v1684, %v1326
      %v1709 = vmul.f32 %v1685, %v1329
      %v1710 = vmul.f32 %v1686, %v1334
      %v1711 = vmul.f32 %v1687, %v1337
      %v1712 = vmul.f32 %v1688, %v1342
      %v1713 = vmul.f32 %v1689, %v1345
      %v1714 = vmul.f32 %v1690, %v1350
      %v1715 = vmul.f32 %v1691, %v1353
      %v1716 = vmul.f32 %v1692, %v1358
      %v1717 = vmul.f32 %v1693, %v1361
      %v1718 = vmul.f32 %v1694, %v1366
      %v1719 = vmul.f32 %v1695, %v1369
      %v1720 = vmul.f32 %v1696, %v1374
      %v1721 = vmul.f32 %v1697, %v1377
      %v1722 = vmul.f32 %v1698, %v1382
      %v1723 = vmul.f32 %v1699, %v1385
      %v1724 = vmul.f32 %v1700, %v1390
      %v1725 = vmul.f32 %v1701, %v1393
      %v1726 = vmul.f32 %v1702, %v1398
      %v1727 = vmul.f32 %v1703, %v1401
      %v1728 = vmul.f32 %v1704, %v1406
      %v1729 = vmul.f32 %v1705, %v1409
      %1754 = vrot.lane.b32.xlu0 %v1318, 96
      %v1755 = vpop.permute.xlu0 %1754
      %1756 = vrot.lane.b32.xlu0 %v1321, 96
      %v1757 = vpop.permute.xlu0 %1756
      %1758 = vrot.lane.b32.xlu0 %v1326, 96
      %v1759 = vpop.permute.xlu0 %1758
      %1760 = vrot.lane.b32.xlu0 %v1329, 96
      %v1761 = vpop.permute.xlu0 %1760
      %1762 = vrot.lane.b32.xlu0 %v1334, 96
      %v1763 = vpop.permute.xlu0 %1762
      %1764 = vrot.lane.b32.xlu0 %v1337, 96
      %v1765 = vpop.permute.xlu0 %1764
      %1766 = vrot.lane.b32.xlu0 %v1342, 96
      %v1767 = vpop.permute.xlu0 %1766
      %1768 = vrot.lane.b32.xlu0 %v1345, 96
      %v1769 = vpop.permute.xlu0 %1768
      %1770 = vrot.lane.b32.xlu0 %v1350, 96
      %v1771 = vpop.permute.xlu0 %1770
      %1772 = vrot.lane.b32.xlu0 %v1353, 96
      %v1773 = vpop.permute.xlu0 %1772
      %1774 = vrot.lane.b32.xlu0 %v1358, 96
      %v1775 = vpop.permute.xlu0 %1774
      %1776 = vrot.lane.b32.xlu0 %v1361, 96
      %v1777 = vpop.permute.xlu0 %1776
      %1778 = vrot.lane.b32.xlu0 %v1366, 96
      %v1779 = vpop.permute.xlu0 %1778
      %1780 = vrot.lane.b32.xlu0 %v1369, 96
      %v1781 = vpop.permute.xlu0 %1780
      %1782 = vrot.lane.b32.xlu0 %v1374, 96
      %v1783 = vpop.permute.xlu0 %1782
      %1784 = vrot.lane.b32.xlu0 %v1377, 96
      %v1785 = vpop.permute.xlu0 %1784
      %1786 = vrot.lane.b32.xlu0 %v1382, 96
      %v1787 = vpop.permute.xlu0 %1786
      %1788 = vrot.lane.b32.xlu0 %v1385, 96
      %v1789 = vpop.permute.xlu0 %1788
      %1790 = vrot.lane.b32.xlu0 %v1390, 96
      %v1791 = vpop.permute.xlu0 %1790
      %1792 = vrot.lane.b32.xlu0 %v1393, 96
      %v1793 = vpop.permute.xlu0 %1792
      %1794 = vrot.lane.b32.xlu0 %v1398, 96
      %v1795 = vpop.permute.xlu0 %1794
      %1796 = vrot.lane.b32.xlu0 %v1401, 96
      %v1797 = vpop.permute.xlu0 %1796
      %1798 = vrot.lane.b32.xlu0 %v1406, 96
      %v1799 = vpop.permute.xlu0 %1798
      %1800 = vrot.lane.b32.xlu0 %v1409, 96
      %v1801 = vpop.permute.xlu0 %1800
      %v1826 = vadd.f32 %v1706, %v1755
      %v1827 = vadd.f32 %v1707, %v1757
      %v1828 = vadd.f32 %v1708, %v1759
      %v1829 = vadd.f32 %v1709, %v1761
      %v1830 = vadd.f32 %v1710, %v1763
      %v1831 = vadd.f32 %v1711, %v1765
      %v1832 = vadd.f32 %v1712, %v1767
      %v1833 = vadd.f32 %v1713, %v1769
      %v1834 = vadd.f32 %v1714, %v1771
      %v1835 = vadd.f32 %v1715, %v1773
      %v1836 = vadd.f32 %v1716, %v1775
      %v1837 = vadd.f32 %v1717, %v1777
      %v1838 = vadd.f32 %v1718, %v1779
      %v1839 = vadd.f32 %v1719, %v1781
      %v1840 = vadd.f32 %v1720, %v1783
      %v1841 = vadd.f32 %v1721, %v1785
      %v1842 = vadd.f32 %v1722, %v1787
      %v1843 = vadd.f32 %v1723, %v1789
      %v1844 = vadd.f32 %v1724, %v1791
      %v1845 = vadd.f32 %v1725, %v1793
      %v1846 = vadd.f32 %v1726, %v1795
      %v1847 = vadd.f32 %v1727, %v1797
      %v1848 = vadd.f32 %v1728, %v1799
      %v1849 = vadd.f32 %v1729, %v1801
      %v1850 = vpack.c.bf16 %v1827, %v1826
      %v1851 = vpack.c.bf16 %v1829, %v1828
      %v1852 = vpack.c.bf16 %v1831, %v1830
      %v1853 = vpack.c.bf16 %v1833, %v1832
      %v1854 = vpack.c.bf16 %v1835, %v1834
      %v1855 = vpack.c.bf16 %v1837, %v1836
      %v1856 = vpack.c.bf16 %v1839, %v1838
      %v1857 = vpack.c.bf16 %v1841, %v1840
      %v1858 = vpack.c.bf16 %v1843, %v1842
      %v1859 = vpack.c.bf16 %v1845, %v1844
      %v1860 = vpack.c.bf16 %v1847, %v1846
      %v1861 = vpack.c.bf16 %v1849, %v1848
      %v1862 = vld [vmem:[%s4] sm:$0xf]
      %v1863 = vld [vmem:[%s4 + $0x4] sm:$0xf]
      %v1864 = vld [vmem:[%s4 + $0x8] sm:$0xf]
      %v1865 = vld [vmem:[%s4 + $0xc] sm:$0xf]
      %v1866 = vld [vmem:[%s7 + $0x2] sm:$0x1]
      %v1867 = vlaneseq
      %v1868 = vshrl.u32 %v1867, 7
      %v1869 = vsub.s32 0, %v1868
      %v1870 = vrot.slane %v1866, %v1869
      %v1875 = vunpack.c.l.b16 %v1862
      %v1876 = vunpack.c.l.b16 %v1863
      %v1877 = vunpack.c.l.b16 %v1864
      %v1878 = vunpack.c.l.b16 %v1865
      %v1879 = vpack.c.b16 %v1876, %v1875
      %v1880 = vpack.c.b16 %v1878, %v1877
      %v1884 = vsel %vm430, %v1850, 0
      %v1887 = vsel %vm430, %v1851, 0
      %v1890 = vsel %vm430, %v1852, 0
      %v1893 = vsel %vm430, %v1853, 0
      %v1896 = vsel %vm430, %v1854, 0
      %v1899 = vsel %vm430, %v1855, 0
      %v1902 = vsel %vm430, %v1856, 0
      %v1905 = vsel %vm430, %v1857, 0
      %v1908 = vsel %vm430, %v1858, 0
      %v1911 = vsel %vm430, %v1859, 0
      %v1914 = vsel %vm430, %v1860, 0
      %v1917 = vsel %vm430, %v1861, 0
      %1919 = vmatprep.subr.bf16.mxu0 0
      %1920 = vmatpush1.bf16.msra.mxu0 %v1879
      %1921 = vmatprep.subr.bf16.mxu0 0
      %1922 = vmatpush1.bf16.msra.mxu0 %v1880
      %1923 = vmatprep.subr.bf16.mxu0 0
      %1924 = vmatpush1.bf16.msra.mxu0 0
      %1925 = vmatprep.subr.bf16.mxu0 0
      %1926 = vmatpush1.bf16.msra.mxu0 0
      %1927 = vmatprep.subr.bf16.mxu0 0
      %1928 = vmatpush1.bf16.msra.mxu0 0
      %1929 = vmatprep.subr.bf16.mxu0 0
      %1930 = vmatpush1.bf16.msra.mxu0 0
      %1931 = vmatprep.subr.bf16.mxu0 0
      %1932 = vmatpush1.bf16.msra.mxu0 0
      %1933 = vmatprep.subr.bf16.mxu0 0
      %1934 = vmatpush1.bf16.msra.mxu0 0
      %1935 = vmatprep.subr.bf16.mxu0 0
      %1936 = vmatpush1.bf16.msra.mxu0 0
      %1937 = vmatprep.subr.bf16.mxu0 0
      %1938 = vmatpush1.bf16.msra.mxu0 0
      %1939 = vmatprep.subr.bf16.mxu0 0
      %1940 = vmatpush1.bf16.msra.mxu0 0
      %1941 = vmatprep.subr.bf16.mxu0 0
      %1942 = vmatpush1.bf16.msra.mxu0 0
      %1943 = vmatprep.subr.bf16.mxu0 0
      %1944 = vmatpush1.bf16.msra.mxu0 0
      %1945 = vmatprep.subr.bf16.mxu0 0
      %1946 = vmatpush1.bf16.msra.mxu0 0
      %1947 = vmatprep.subr.bf16.mxu0 0
      %1948 = vmatpush1.bf16.msra.mxu0 0
      %1949 = vmatprep.subr.bf16.mxu0 0
      %1950 = vmatpush1.bf16.msra.mxu0 0
      %1951 = vmatprep.mubr.bf16.mxu0 0
      %1952 = vmatmul.mubr.bf16.gmra.mrb[0].mxu0 %v1884
      %v1953 = vpop.f32.mrb[0].mxu0
      %v1954 = vadd.f32 %v1870, %v1953
      %v1955 = vpop.f32.mrb[0].mxu0
      %v1956 = vpop.f32.mrb[0].mxu0
      %v1957 = vadd.f32 %v1870, %v1956
      %v1958 = vpop.f32.mrb[0].mxu0
      %1959 = vmatprep.mubr.bf16.mxu0 0
      %1960 = vmatmul.mubr.bf16.gmra.mrb[0].mxu0 %v1887
      %v1961 = vpop.f32.mrb[0].mxu0
      %v1962 = vadd.f32 %v1870, %v1961
      %v1963 = vpop.f32.mrb[0].mxu0
      %v1964 = vpop.f32.mrb[0].mxu0
      %v1965 = vadd.f32 %v1870, %v1964
      %v1966 = vpop.f32.mrb[0].mxu0
      %1967 = vmatprep.mubr.bf16.mxu0 0
      %1968 = vmatmul.mubr.bf16.gmra.mrb[0].mxu0 %v1890
      %v1969 = vpop.f32.mrb[0].mxu0
      %v1970 = vadd.f32 %v1870, %v1969
      %v1971 = vpop.f32.mrb[0].mxu0
      %v1972 = vpop.f32.mrb[0].mxu0
      %v1973 = vadd.f32 %v1870, %v1972
      %v1974 = vpop.f32.mrb[0].mxu0
      %1975 = vmatprep.mubr.bf16.mxu0 0
      %1976 = vmatmul.mubr.bf16.gmra.mrb[0].mxu0 %v1893
      %v1977 = vpop.f32.mrb[0].mxu0
      %v1978 = vadd.f32 %v1870, %v1977
      %v1979 = vpop.f32.mrb[0].mxu0
      %v1980 = vpop.f32.mrb[0].mxu0
      %v1981 = vadd.f32 %v1870, %v1980
      %v1982 = vpop.f32.mrb[0].mxu0
      %1983 = vmatprep.mubr.bf16.mxu0 0
      %1984 = vmatmul.mubr.bf16.gmra.mrb[0].mxu0 %v1896
      %v1985 = vpop.f32.mrb[0].mxu0
      %v1986 = vadd.f32 %v1870, %v1985
      %v1987 = vpop.f32.mrb[0].mxu0
      %v1988 = vpop.f32.mrb[0].mxu0
      %v1989 = vadd.f32 %v1870, %v1988
      %v1990 = vpop.f32.mrb[0].mxu0
      %1991 = vmatprep.mubr.bf16.mxu0 0
      %1992 = vmatmul.mubr.bf16.gmra.mrb[0].mxu0 %v1899
      %v1993 = vpop.f32.mrb[0].mxu0
      %v1994 = vadd.f32 %v1870, %v1993
      %v1995 = vpop.f32.mrb[0].mxu0
      %v1996 = vpop.f32.mrb[0].mxu0
      %v1997 = vadd.f32 %v1870, %v1996
      %v1998 = vpop.f32.mrb[0].mxu0
      %1999 = vmatprep.mubr.bf16.mxu0 0
      %2000 = vmatmul.mubr.bf16.gmra.mrb[0].mxu0 %v1902
      %v2001 = vpop.f32.mrb[0].mxu0
      %v2002 = vadd.f32 %v1870, %v2001
      %v2003 = vpop.f32.mrb[0].mxu0
      %v2004 = vpop.f32.mrb[0].mxu0
      %v2005 = vadd.f32 %v1870, %v2004
      %v2006 = vpop.f32.mrb[0].mxu0
      %2007 = vmatprep.mubr.bf16.mxu0 0
      %2008 = vmatmul.mubr.bf16.gmra.mrb[0].mxu0 %v1905
      %v2009 = vpop.f32.mrb[0].mxu0
      %v2010 = vadd.f32 %v1870, %v2009
      %v2011 = vpop.f32.mrb[0].mxu0
      %v2012 = vpop.f32.mrb[0].mxu0
      %v2013 = vadd.f32 %v1870, %v2012
      %v2014 = vpop.f32.mrb[0].mxu0
      %2015 = vmatprep.mubr.bf16.mxu0 0
      %2016 = vmatmul.mubr.bf16.gmra.mrb[0].mxu0 %v1908
      %v2017 = vpop.f32.mrb[0].mxu0
      %v2018 = vadd.f32 %v1870, %v2017
      %v2019 = vpop.f32.mrb[0].mxu0
      %v2020 = vpop.f32.mrb[0].mxu0
      %v2021 = vadd.f32 %v1870, %v2020
      %v2022 = vpop.f32.mrb[0].mxu0
      %2023 = vmatprep.mubr.bf16.mxu0 0
      %2024 = vmatmul.mubr.bf16.gmra.mrb[0].mxu0 %v1911
      %v2025 = vpop.f32.mrb[0].mxu0
      %v2026 = vadd.f32 %v1870, %v2025
      %v2027 = vpop.f32.mrb[0].mxu0
      %v2028 = vpop.f32.mrb[0].mxu0
      %v2029 = vadd.f32 %v1870, %v2028
      %v2030 = vpop.f32.mrb[0].mxu0
      %2031 = vmatprep.mubr.bf16.mxu0 0
      %2032 = vmatmul.mubr.bf16.gmra.mrb[0].mxu0 %v1914
      %v2033 = vpop.f32.mrb[0].mxu0
      %v2034 = vadd.f32 %v1870, %v2033
      %v2035 = vpop.f32.mrb[0].mxu0
      %v2036 = vpop.f32.mrb[0].mxu0
      %v2037 = vadd.f32 %v1870, %v2036
      %v2038 = vpop.f32.mrb[0].mxu0
      %2039 = vmatprep.mubr.bf16.mxu0 0
      %2040 = vmatmul.mubr.bf16.gmra.mrb[0].mxu0 %v1917
      %v2041 = vpop.f32.mrb[0].mxu0
      %v2042 = vadd.f32 %v1870, %v2041
      %v2043 = vpop.f32.mrb[0].mxu0
      %v2044 = vpop.f32.mrb[0].mxu0
      %v2045 = vadd.f32 %v1870, %v2044
      %v2046 = vpop.f32.mrb[0].mxu0
      %2047 = vdwg.mxu0
      %v2048 = vmax.f32 %v1954, 0.0
      %v2049 = vmax.f32 %v1957, 0.0
      %v2050 = vmax.f32 %v1962, 0.0
      %v2051 = vmax.f32 %v1965, 0.0
      %v2052 = vmax.f32 %v1970, 0.0
      %v2053 = vmax.f32 %v1973, 0.0
      %v2054 = vmax.f32 %v1978, 0.0
      %v2055 = vmax.f32 %v1981, 0.0
      %v2056 = vmax.f32 %v1986, 0.0
      %v2057 = vmax.f32 %v1989, 0.0
      %v2058 = vmax.f32 %v1994, 0.0
      %v2059 = vmax.f32 %v1997, 0.0
      %v2060 = vmax.f32 %v2002, 0.0
      %v2061 = vmax.f32 %v2005, 0.0
      %v2062 = vmax.f32 %v2010, 0.0
      %v2063 = vmax.f32 %v2013, 0.0
      %v2064 = vmax.f32 %v2018, 0.0
      %v2065 = vmax.f32 %v2021, 0.0
      %v2066 = vmax.f32 %v2026, 0.0
      %v2067 = vmax.f32 %v2029, 0.0
      %v2068 = vmax.f32 %v2034, 0.0
      %v2069 = vmax.f32 %v2037, 0.0
      %v2070 = vmax.f32 %v2042, 0.0
      %v2071 = vmax.f32 %v2045, 0.0
      %v2072 = vpack.c.bf16 %v2049, %v2048
      %v2073 = vpack.c.bf16 %v2051, %v2050
      %v2074 = vpack.c.bf16 %v2053, %v2052
      %v2075 = vpack.c.bf16 %v2055, %v2054
      %v2076 = vpack.c.bf16 %v2057, %v2056
      %v2077 = vpack.c.bf16 %v2059, %v2058
      %v2078 = vpack.c.bf16 %v2061, %v2060
      %v2079 = vpack.c.bf16 %v2063, %v2062
      %v2080 = vpack.c.bf16 %v2065, %v2064
      %v2081 = vpack.c.bf16 %v2067, %v2066
      %v2082 = vpack.c.bf16 %v2069, %v2068
      %v2083 = vpack.c.bf16 %v2071, %v2070
      %s2084 = scalar_lea.vmem %s4, 16
      %v2085 = vld [vmem:[%s2084] sm:$0xf]
      %v2086 = vld [vmem:[%s2084 + $0x4] sm:$0xf]
      %v2087 = vld [vmem:[%s2084 + $0x8] sm:$0xf]
      %v2088 = vld [vmem:[%s2084 + $0xc] sm:$0xf]
      %v2089 = vld [vmem:[%s7 + $0x3] sm:$0x1]
      %v2090 = vlaneseq
      %v2091 = vshrl.u32 %v2090, 7
      %v2092 = vsub.s32 0, %v2091
      %v2093 = vrot.slane %v2089, %v2092
      %v2098 = vunpack.c.l.b16 %v2085
      %v2099 = vunpack.c.l.b16 %v2086
      %v2100 = vunpack.c.l.b16 %v2087
      %v2101 = vunpack.c.l.b16 %v2088
      %v2102 = vpack.c.b16 %v2099, %v2098
      %v2103 = vpack.c.b16 %v2101, %v2100
      %v2107 = vsel %vm430, %v2072, 0
      %v2110 = vsel %vm430, %v2073, 0
      %v2113 = vsel %vm430, %v2074, 0
      %v2116 = vsel %vm430, %v2075, 0
      %v2119 = vsel %vm430, %v2076, 0
      %v2122 = vsel %vm430, %v2077, 0
      %v2125 = vsel %vm430, %v2078, 0
      %v2128 = vsel %vm430, %v2079, 0
      %v2131 = vsel %vm430, %v2080, 0
      %v2134 = vsel %vm430, %v2081, 0
      %v2137 = vsel %vm430, %v2082, 0
      %v2140 = vsel %vm430, %v2083, 0
      %2142 = vmatprep.subr.bf16.mxu0 0
      %2143 = vmatpush1.bf16.msra.mxu0 %v2102
      %2144 = vmatprep.subr.bf16.mxu0 0
      %2145 = vmatpush1.bf16.msra.mxu0 %v2103
      %2146 = vmatprep.subr.bf16.mxu0 0
      %2147 = vmatpush1.bf16.msra.mxu0 0
      %2148 = vmatprep.subr.bf16.mxu0 0
      %2149 = vmatpush1.bf16.msra.mxu0 0
      %2150 = vmatprep.subr.bf16.mxu0 0
      %2151 = vmatpush1.bf16.msra.mxu0 0
      %2152 = vmatprep.subr.bf16.mxu0 0
      %2153 = vmatpush1.bf16.msra.mxu0 0
      %2154 = vmatprep.subr.bf16.mxu0 0
      %2155 = vmatpush1.bf16.msra.mxu0 0
      %2156 = vmatprep.subr.bf16.mxu0 0
      %2157 = vmatpush1.bf16.msra.mxu0 0
      %2158 = vmatprep.subr.bf16.mxu0 0
      %2159 = vmatpush1.bf16.msra.mxu0 0
      %2160 = vmatprep.subr.bf16.mxu0 0
      %2161 = vmatpush1.bf16.msra.mxu0 0
      %2162 = vmatprep.subr.bf16.mxu0 0
      %2163 = vmatpush1.bf16.msra.mxu0 0
      %2164 = vmatprep.subr.bf16.mxu0 0
      %2165 = vmatpush1.bf16.msra.mxu0 0
      %2166 = vmatprep.subr.bf16.mxu0 0
      %2167 = vmatpush1.bf16.msra.mxu0 0
      %2168 = vmatprep.subr.bf16.mxu0 0
      %2169 = vmatpush1.bf16.msra.mxu0 0
      %2170 = vmatprep.subr.bf16.mxu0 0
      %2171 = vmatpush1.bf16.msra.mxu0 0
      %2172 = vmatprep.subr.bf16.mxu0 0
      %2173 = vmatpush1.bf16.msra.mxu0 0
      %2174 = vmatprep.mubr.bf16.mxu0 0
      %2175 = vmatmul.mubr.bf16.gmra.mrb[0].mxu0 %v2107
      %v2176 = vpop.f32.mrb[0].mxu0
      %v2177 = vadd.f32 %v2093, %v2176
      %v2178 = vpop.f32.mrb[0].mxu0
      %v2179 = vpop.f32.mrb[0].mxu0
      %v2180 = vadd.f32 %v2093, %v2179
      %v2181 = vpop.f32.mrb[0].mxu0
      %2182 = vmatprep.mubr.bf16.mxu0 0
      %2183 = vmatmul.mubr.bf16.gmra.mrb[0].mxu0 %v2110
      %v2184 = vpop.f32.mrb[0].mxu0
      %v2185 = vadd.f32 %v2093, %v2184
      %v2186 = vpop.f32.mrb[0].mxu0
      %v2187 = vpop.f32.mrb[0].mxu0
      %v2188 = vadd.f32 %v2093, %v2187
      %v2189 = vpop.f32.mrb[0].mxu0
      %2190 = vmatprep.mubr.bf16.mxu0 0
      %2191 = vmatmul.mubr.bf16.gmra.mrb[0].mxu0 %v2113
      %v2192 = vpop.f32.mrb[0].mxu0
      %v2193 = vadd.f32 %v2093, %v2192
      %v2194 = vpop.f32.mrb[0].mxu0
      %v2195 = vpop.f32.mrb[0].mxu0
      %v2196 = vadd.f32 %v2093, %v2195
      %v2197 = vpop.f32.mrb[0].mxu0
      %2198 = vmatprep.mubr.bf16.mxu0 0
      %2199 = vmatmul.mubr.bf16.gmra.mrb[0].mxu0 %v2116
      %v2200 = vpop.f32.mrb[0].mxu0
      %v2201 = vadd.f32 %v2093, %v2200
      %v2202 = vpop.f32.mrb[0].mxu0
      %v2203 = vpop.f32.mrb[0].mxu0
      %v2204 = vadd.f32 %v2093, %v2203
      %v2205 = vpop.f32.mrb[0].mxu0
      %2206 = vmatprep.mubr.bf16.mxu0 0
      %2207 = vmatmul.mubr.bf16.gmra.mrb[0].mxu0 %v2119
      %v2208 = vpop.f32.mrb[0].mxu0
      %v2209 = vadd.f32 %v2093, %v2208
      %v2210 = vpop.f32.mrb[0].mxu0
      %v2211 = vpop.f32.mrb[0].mxu0
      %v2212 = vadd.f32 %v2093, %v2211
      %v2213 = vpop.f32.mrb[0].mxu0
      %2214 = vmatprep.mubr.bf16.mxu0 0
      %2215 = vmatmul.mubr.bf16.gmra.mrb[0].mxu0 %v2122
      %v2216 = vpop.f32.mrb[0].mxu0
      %v2217 = vadd.f32 %v2093, %v2216
      %v2218 = vpop.f32.mrb[0].mxu0
      %v2219 = vpop.f32.mrb[0].mxu0
      %v2220 = vadd.f32 %v2093, %v2219
      %v2221 = vpop.f32.mrb[0].mxu0
      %2222 = vmatprep.mubr.bf16.mxu0 0
      %2223 = vmatmul.mubr.bf16.gmra.mrb[0].mxu0 %v2125
      %v2224 = vpop.f32.mrb[0].mxu0
      %v2225 = vadd.f32 %v2093, %v2224
      %v2226 = vpop.f32.mrb[0].mxu0
      %v2227 = vpop.f32.mrb[0].mxu0
      %v2228 = vadd.f32 %v2093, %v2227
      %v2229 = vpop.f32.mrb[0].mxu0
      %2230 = vmatprep.mubr.bf16.mxu0 0
      %2231 = vmatmul.mubr.bf16.gmra.mrb[0].mxu0 %v2128
      %v2232 = vpop.f32.mrb[0].mxu0
      %v2233 = vadd.f32 %v2093, %v2232
      %v2234 = vpop.f32.mrb[0].mxu0
      %v2235 = vpop.f32.mrb[0].mxu0
      %v2236 = vadd.f32 %v2093, %v2235
      %v2237 = vpop.f32.mrb[0].mxu0
      %2238 = vmatprep.mubr.bf16.mxu0 0
      %2239 = vmatmul.mubr.bf16.gmra.mrb[0].mxu0 %v2131
      %v2240 = vpop.f32.mrb[0].mxu0
      %v2241 = vadd.f32 %v2093, %v2240
      %v2242 = vpop.f32.mrb[0].mxu0
      %v2243 = vpop.f32.mrb[0].mxu0
      %v2244 = vadd.f32 %v2093, %v2243
      %v2245 = vpop.f32.mrb[0].mxu0
      %2246 = vmatprep.mubr.bf16.mxu0 0
      %2247 = vmatmul.mubr.bf16.gmra.mrb[0].mxu0 %v2134
      %v2248 = vpop.f32.mrb[0].mxu0
      %v2249 = vadd.f32 %v2093, %v2248
      %v2250 = vpop.f32.mrb[0].mxu0
      %v2251 = vpop.f32.mrb[0].mxu0
      %v2252 = vadd.f32 %v2093, %v2251
      %v2253 = vpop.f32.mrb[0].mxu0
      %2254 = vmatprep.mubr.bf16.mxu0 0
      %2255 = vmatmul.mubr.bf16.gmra.mrb[0].mxu0 %v2137
      %v2256 = vpop.f32.mrb[0].mxu0
      %v2257 = vadd.f32 %v2093, %v2256
      %v2258 = vpop.f32.mrb[0].mxu0
      %v2259 = vpop.f32.mrb[0].mxu0
      %v2260 = vadd.f32 %v2093, %v2259
      %v2261 = vpop.f32.mrb[0].mxu0
      %2262 = vmatprep.mubr.bf16.mxu0 0
      %2263 = vmatmul.mubr.bf16.gmra.mrb[0].mxu0 %v2140
      %v2264 = vpop.f32.mrb[0].mxu0
      %v2265 = vadd.f32 %v2093, %v2264
      %v2266 = vpop.f32.mrb[0].mxu0
      %v2267 = vpop.f32.mrb[0].mxu0
      %v2268 = vadd.f32 %v2093, %v2267
      %v2269 = vpop.f32.mrb[0].mxu0
      %2270 = vdwg.mxu0
      %v2271 = vsel %vm430, %v2177, -inf
      %v2272 = vrot.slane %v2271, 4
      %v2273 = vmax.f32 %v2271, %v2272
      %v2274 = vrot.slane %v2273, 2
      %v2275 = vmax.f32 %v2273, %v2274
      %v2276 = vrot.slane %v2275, 1
      %v2277 = vmax.f32 %v2275, %v2276
      %v2278 = vsel %vm430, %v2180, -inf
      %v2279 = vrot.slane %v2278, 4
      %v2280 = vmax.f32 %v2278, %v2279
      %v2281 = vrot.slane %v2280, 2
      %v2282 = vmax.f32 %v2280, %v2281
      %v2283 = vrot.slane %v2282, 1
      %v2284 = vmax.f32 %v2282, %v2283
      %v2285 = vsel %vm430, %v2185, -inf
      %v2286 = vrot.slane %v2285, 4
      %v2287 = vmax.f32 %v2285, %v2286
      %v2288 = vrot.slane %v2287, 2
      %v2289 = vmax.f32 %v2287, %v2288
      %v2290 = vrot.slane %v2289, 1
      %v2291 = vmax.f32 %v2289, %v2290
      %v2292 = vsel %vm430, %v2188, -inf
      %v2293 = vrot.slane %v2292, 4
      %v2294 = vmax.f32 %v2292, %v2293
      %v2295 = vrot.slane %v2294, 2
      %v2296 = vmax.f32 %v2294, %v2295
      %v2297 = vrot.slane %v2296, 1
      %v2298 = vmax.f32 %v2296, %v2297
      %v2299 = vsel %vm430, %v2193, -inf
      %v2300 = vrot.slane %v2299, 4
      %v2301 = vmax.f32 %v2299, %v2300
      %v2302 = vrot.slane %v2301, 2
      %v2303 = vmax.f32 %v2301, %v2302
      %v2304 = vrot.slane %v2303, 1
      %v2305 = vmax.f32 %v2303, %v2304
      %v2306 = vsel %vm430, %v2196, -inf
      %v2307 = vrot.slane %v2306, 4
      %v2308 = vmax.f32 %v2306, %v2307
      %v2309 = vrot.slane %v2308, 2
      %v2310 = vmax.f32 %v2308, %v2309
      %v2311 = vrot.slane %v2310, 1
      %v2312 = vmax.f32 %v2310, %v2311
      %v2313 = vsel %vm430, %v2201, -inf
      %v2314 = vrot.slane %v2313, 4
      %v2315 = vmax.f32 %v2313, %v2314
      %v2316 = vrot.slane %v2315, 2
      %v2317 = vmax.f32 %v2315, %v2316
      %v2318 = vrot.slane %v2317, 1
      %v2319 = vmax.f32 %v2317, %v2318
      %v2320 = vsel %vm430, %v2204, -inf
      %v2321 = vrot.slane %v2320, 4
      %v2322 = vmax.f32 %v2320, %v2321
      %v2323 = vrot.slane %v2322, 2
      %v2324 = vmax.f32 %v2322, %v2323
      %v2325 = vrot.slane %v2324, 1
      %v2326 = vmax.f32 %v2324, %v2325
      %v2327 = vsel %vm430, %v2209, -inf
      %v2328 = vrot.slane %v2327, 4
      %v2329 = vmax.f32 %v2327, %v2328
      %v2330 = vrot.slane %v2329, 2
      %v2331 = vmax.f32 %v2329, %v2330
      %v2332 = vrot.slane %v2331, 1
      %v2333 = vmax.f32 %v2331, %v2332
      %v2334 = vsel %vm430, %v2212, -inf
      %v2335 = vrot.slane %v2334, 4
      %v2336 = vmax.f32 %v2334, %v2335
      %v2337 = vrot.slane %v2336, 2
      %v2338 = vmax.f32 %v2336, %v2337
      %v2339 = vrot.slane %v2338, 1
      %v2340 = vmax.f32 %v2338, %v2339
      %v2341 = vsel %vm430, %v2217, -inf
      %v2342 = vrot.slane %v2341, 4
      %v2343 = vmax.f32 %v2341, %v2342
      %v2344 = vrot.slane %v2343, 2
      %v2345 = vmax.f32 %v2343, %v2344
      %v2346 = vrot.slane %v2345, 1
      %v2347 = vmax.f32 %v2345, %v2346
      %v2348 = vsel %vm430, %v2220, -inf
      %v2349 = vrot.slane %v2348, 4
      %v2350 = vmax.f32 %v2348, %v2349
      %v2351 = vrot.slane %v2350, 2
      %v2352 = vmax.f32 %v2350, %v2351
      %v2353 = vrot.slane %v2352, 1
      %v2354 = vmax.f32 %v2352, %v2353
      %v2355 = vsel %vm430, %v2225, -inf
      %v2356 = vrot.slane %v2355, 4
      %v2357 = vmax.f32 %v2355, %v2356
      %v2358 = vrot.slane %v2357, 2
      %v2359 = vmax.f32 %v2357, %v2358
      %v2360 = vrot.slane %v2359, 1
      %v2361 = vmax.f32 %v2359, %v2360
      %v2362 = vsel %vm430, %v2228, -inf
      %v2363 = vrot.slane %v2362, 4
      %v2364 = vmax.f32 %v2362, %v2363
      %v2365 = vrot.slane %v2364, 2
      %v2366 = vmax.f32 %v2364, %v2365
      %v2367 = vrot.slane %v2366, 1
      %v2368 = vmax.f32 %v2366, %v2367
      %v2369 = vsel %vm430, %v2233, -inf
      %v2370 = vrot.slane %v2369, 4
      %v2371 = vmax.f32 %v2369, %v2370
      %v2372 = vrot.slane %v2371, 2
      %v2373 = vmax.f32 %v2371, %v2372
      %v2374 = vrot.slane %v2373, 1
      %v2375 = vmax.f32 %v2373, %v2374
      %v2376 = vsel %vm430, %v2236, -inf
      %v2377 = vrot.slane %v2376, 4
      %v2378 = vmax.f32 %v2376, %v2377
      %v2379 = vrot.slane %v2378, 2
      %v2380 = vmax.f32 %v2378, %v2379
      %v2381 = vrot.slane %v2380, 1
      %v2382 = vmax.f32 %v2380, %v2381
      %v2383 = vsel %vm430, %v2241, -inf
      %v2384 = vrot.slane %v2383, 4
      %v2385 = vmax.f32 %v2383, %v2384
      %v2386 = vrot.slane %v2385, 2
      %v2387 = vmax.f32 %v2385, %v2386
      %v2388 = vrot.slane %v2387, 1
      %v2389 = vmax.f32 %v2387, %v2388
      %v2390 = vsel %vm430, %v2244, -inf
      %v2391 = vrot.slane %v2390, 4
      %v2392 = vmax.f32 %v2390, %v2391
      %v2393 = vrot.slane %v2392, 2
      %v2394 = vmax.f32 %v2392, %v2393
      %v2395 = vrot.slane %v2394, 1
      %v2396 = vmax.f32 %v2394, %v2395
      %v2397 = vsel %vm430, %v2249, -inf
      %v2398 = vrot.slane %v2397, 4
      %v2399 = vmax.f32 %v2397, %v2398
      %v2400 = vrot.slane %v2399, 2
      %v2401 = vmax.f32 %v2399, %v2400
      %v2402 = vrot.slane %v2401, 1
      %v2403 = vmax.f32 %v2401, %v2402
      %v2404 = vsel %vm430, %v2252, -inf
      %v2405 = vrot.slane %v2404, 4
      %v2406 = vmax.f32 %v2404, %v2405
      %v2407 = vrot.slane %v2406, 2
      %v2408 = vmax.f32 %v2406, %v2407
      %v2409 = vrot.slane %v2408, 1
      %v2410 = vmax.f32 %v2408, %v2409
      %v2411 = vsel %vm430, %v2257, -inf
      %v2412 = vrot.slane %v2411, 4
      %v2413 = vmax.f32 %v2411, %v2412
      %v2414 = vrot.slane %v2413, 2
      %v2415 = vmax.f32 %v2413, %v2414
      %v2416 = vrot.slane %v2415, 1
      %v2417 = vmax.f32 %v2415, %v2416
      %v2418 = vsel %vm430, %v2260, -inf
      %v2419 = vrot.slane %v2418, 4
      %v2420 = vmax.f32 %v2418, %v2419
      %v2421 = vrot.slane %v2420, 2
      %v2422 = vmax.f32 %v2420, %v2421
      %v2423 = vrot.slane %v2422, 1
      %v2424 = vmax.f32 %v2422, %v2423
      %v2425 = vsel %vm430, %v2265, -inf
      %v2426 = vrot.slane %v2425, 4
      %v2427 = vmax.f32 %v2425, %v2426
      %v2428 = vrot.slane %v2427, 2
      %v2429 = vmax.f32 %v2427, %v2428
      %v2430 = vrot.slane %v2429, 1
      %v2431 = vmax.f32 %v2429, %v2430
      %v2432 = vsel %vm430, %v2268, -inf
      %v2433 = vrot.slane %v2432, 4
      %v2434 = vmax.f32 %v2432, %v2433
      %v2435 = vrot.slane %v2434, 2
      %v2436 = vmax.f32 %v2434, %v2435
      %v2437 = vrot.slane %v2436, 1
      %v2438 = vmax.f32 %v2436, %v2437
      %v2439 = vsub.f32 %v2177, %v2277
      %v2440 = vsub.f32 %v2180, %v2284
      %v2441 = vsub.f32 %v2185, %v2291
      %v2442 = vsub.f32 %v2188, %v2298
      %v2443 = vsub.f32 %v2193, %v2305
      %v2444 = vsub.f32 %v2196, %v2312
      %v2445 = vsub.f32 %v2201, %v2319
      %v2446 = vsub.f32 %v2204, %v2326
      %v2447 = vsub.f32 %v2209, %v2333
      %v2448 = vsub.f32 %v2212, %v2340
      %v2449 = vsub.f32 %v2217, %v2347
      %v2450 = vsub.f32 %v2220, %v2354
      %v2451 = vsub.f32 %v2225, %v2361
      %v2452 = vsub.f32 %v2228, %v2368
      %v2453 = vsub.f32 %v2233, %v2375
      %v2454 = vsub.f32 %v2236, %v2382
      %v2455 = vsub.f32 %v2241, %v2389
      %v2456 = vsub.f32 %v2244, %v2396
      %v2457 = vsub.f32 %v2249, %v2403
      %v2458 = vsub.f32 %v2252, %v2410
      %v2459 = vsub.f32 %v2257, %v2417
      %v2460 = vsub.f32 %v2260, %v2424
      %v2461 = vsub.f32 %v2265, %v2431
      %v2462 = vsub.f32 %v2268, %v2438
      %v2463 = vmul.f32 %v2439, 1.442695
      %v2464 = vpow.pop %v2463
      %v2465 = vmul.f32 %v2440, 1.442695
      %v2466 = vpow.pop %v2465
      %v2467 = vmul.f32 %v2441, 1.442695
      %v2468 = vpow.pop %v2467
      %v2469 = vmul.f32 %v2442, 1.442695
      %v2470 = vpow.pop %v2469
      %v2471 = vmul.f32 %v2443, 1.442695
      %v2472 = vpow.pop %v2471
      %v2473 = vmul.f32 %v2444, 1.442695
      %v2474 = vpow.pop %v2473
      %v2475 = vmul.f32 %v2445, 1.442695
      %v2476 = vpow.pop %v2475
      %v2477 = vmul.f32 %v2446, 1.442695
      %v2478 = vpow.pop %v2477
      %v2479 = vmul.f32 %v2447, 1.442695
      %v2480 = vpow.pop %v2479
      %v2481 = vmul.f32 %v2448, 1.442695
      %v2482 = vpow.pop %v2481
      %v2483 = vmul.f32 %v2449, 1.442695
      %v2484 = vpow.pop %v2483
      %v2485 = vmul.f32 %v2450, 1.442695
      %v2486 = vpow.pop %v2485
      %v2487 = vmul.f32 %v2451, 1.442695
      %v2488 = vpow.pop %v2487
      %v2489 = vmul.f32 %v2452, 1.442695
      %v2490 = vpow.pop %v2489
      %v2491 = vmul.f32 %v2453, 1.442695
      %v2492 = vpow.pop %v2491
      %v2493 = vmul.f32 %v2454, 1.442695
      %v2494 = vpow.pop %v2493
      %v2495 = vmul.f32 %v2455, 1.442695
      %v2496 = vpow.pop %v2495
      %v2497 = vmul.f32 %v2456, 1.442695
      %v2498 = vpow.pop %v2497
      %v2499 = vmul.f32 %v2457, 1.442695
      %v2500 = vpow.pop %v2499
      %v2501 = vmul.f32 %v2458, 1.442695
      %v2502 = vpow.pop %v2501
      %v2503 = vmul.f32 %v2459, 1.442695
      %v2504 = vpow.pop %v2503
      %v2505 = vmul.f32 %v2460, 1.442695
      %v2506 = vpow.pop %v2505
      %v2507 = vmul.f32 %v2461, 1.442695
      %v2508 = vpow.pop %v2507
      %v2509 = vmul.f32 %v2462, 1.442695
      %v2510 = vpow.pop %v2509
      %v2511 = vsel %vm430, %v2464, 0.0
      %v2512 = vrot.slane %v2511, 4
      %v2513 = vadd.f32 %v2511, %v2512
      %v2514 = vrot.slane %v2513, 2
      %v2515 = vadd.f32 %v2513, %v2514
      %v2516 = vrot.slane %v2515, 1
      %v2517 = vadd.f32 %v2515, %v2516
      %v2518 = vsel %vm430, %v2466, 0.0
      %v2519 = vrot.slane %v2518, 4
      %v2520 = vadd.f32 %v2518, %v2519
      %v2521 = vrot.slane %v2520, 2
      %v2522 = vadd.f32 %v2520, %v2521
      %v2523 = vrot.slane %v2522, 1
      %v2524 = vadd.f32 %v2522, %v2523
      %v2525 = vsel %vm430, %v2468, 0.0
      %v2526 = vrot.slane %v2525, 4
      %v2527 = vadd.f32 %v2525, %v2526
      %v2528 = vrot.slane %v2527, 2
      %v2529 = vadd.f32 %v2527, %v2528
      %v2530 = vrot.slane %v2529, 1
      %v2531 = vadd.f32 %v2529, %v2530
      %v2532 = vsel %vm430, %v2470, 0.0
      %v2533 = vrot.slane %v2532, 4
      %v2534 = vadd.f32 %v2532, %v2533
      %v2535 = vrot.slane %v2534, 2
      %v2536 = vadd.f32 %v2534, %v2535
      %v2537 = vrot.slane %v2536, 1
      %v2538 = vadd.f32 %v2536, %v2537
      %v2539 = vsel %vm430, %v2472, 0.0
      %v2540 = vrot.slane %v2539, 4
      %v2541 = vadd.f32 %v2539, %v2540
      %v2542 = vrot.slane %v2541, 2
      %v2543 = vadd.f32 %v2541, %v2542
      %v2544 = vrot.slane %v2543, 1
      %v2545 = vadd.f32 %v2543, %v2544
      %v2546 = vsel %vm430, %v2474, 0.0
      %v2547 = vrot.slane %v2546, 4
      %v2548 = vadd.f32 %v2546, %v2547
      %v2549 = vrot.slane %v2548, 2
      %v2550 = vadd.f32 %v2548, %v2549
      %v2551 = vrot.slane %v2550, 1
      %v2552 = vadd.f32 %v2550, %v2551
      %v2553 = vsel %vm430, %v2476, 0.0
      %v2554 = vrot.slane %v2553, 4
      %v2555 = vadd.f32 %v2553, %v2554
      %v2556 = vrot.slane %v2555, 2
      %v2557 = vadd.f32 %v2555, %v2556
      %v2558 = vrot.slane %v2557, 1
      %v2559 = vadd.f32 %v2557, %v2558
      %v2560 = vsel %vm430, %v2478, 0.0
      %v2561 = vrot.slane %v2560, 4
      %v2562 = vadd.f32 %v2560, %v2561
      %v2563 = vrot.slane %v2562, 2
      %v2564 = vadd.f32 %v2562, %v2563
      %v2565 = vrot.slane %v2564, 1
      %v2566 = vadd.f32 %v2564, %v2565
      %v2567 = vsel %vm430, %v2480, 0.0
      %v2568 = vrot.slane %v2567, 4
      %v2569 = vadd.f32 %v2567, %v2568
      %v2570 = vrot.slane %v2569, 2
      %v2571 = vadd.f32 %v2569, %v2570
      %v2572 = vrot.slane %v2571, 1
      %v2573 = vadd.f32 %v2571, %v2572
      %v2574 = vsel %vm430, %v2482, 0.0
      %v2575 = vrot.slane %v2574, 4
      %v2576 = vadd.f32 %v2574, %v2575
      %v2577 = vrot.slane %v2576, 2
      %v2578 = vadd.f32 %v2576, %v2577
      %v2579 = vrot.slane %v2578, 1
      %v2580 = vadd.f32 %v2578, %v2579
      %v2581 = vsel %vm430, %v2484, 0.0
      %v2582 = vrot.slane %v2581, 4
      %v2583 = vadd.f32 %v2581, %v2582
      %v2584 = vrot.slane %v2583, 2
      %v2585 = vadd.f32 %v2583, %v2584
      %v2586 = vrot.slane %v2585, 1
      %v2587 = vadd.f32 %v2585, %v2586
      %v2588 = vsel %vm430, %v2486, 0.0
      %v2589 = vrot.slane %v2588, 4
      %v2590 = vadd.f32 %v2588, %v2589
      %v2591 = vrot.slane %v2590, 2
      %v2592 = vadd.f32 %v2590, %v2591
      %v2593 = vrot.slane %v2592, 1
      %v2594 = vadd.f32 %v2592, %v2593
      %v2595 = vsel %vm430, %v2488, 0.0
      %v2596 = vrot.slane %v2595, 4
      %v2597 = vadd.f32 %v2595, %v2596
      %v2598 = vrot.slane %v2597, 2
      %v2599 = vadd.f32 %v2597, %v2598
      %v2600 = vrot.slane %v2599, 1
      %v2601 = vadd.f32 %v2599, %v2600
      %v2602 = vsel %vm430, %v2490, 0.0
      %v2603 = vrot.slane %v2602, 4
      %v2604 = vadd.f32 %v2602, %v2603
      %v2605 = vrot.slane %v2604, 2
      %v2606 = vadd.f32 %v2604, %v2605
      %v2607 = vrot.slane %v2606, 1
      %v2608 = vadd.f32 %v2606, %v2607
      %v2609 = vsel %vm430, %v2492, 0.0
      %v2610 = vrot.slane %v2609, 4
      %v2611 = vadd.f32 %v2609, %v2610
      %v2612 = vrot.slane %v2611, 2
      %v2613 = vadd.f32 %v2611, %v2612
      %v2614 = vrot.slane %v2613, 1
      %v2615 = vadd.f32 %v2613, %v2614
      %v2616 = vsel %vm430, %v2494, 0.0
      %v2617 = vrot.slane %v2616, 4
      %v2618 = vadd.f32 %v2616, %v2617
      %v2619 = vrot.slane %v2618, 2
      %v2620 = vadd.f32 %v2618, %v2619
      %v2621 = vrot.slane %v2620, 1
      %v2622 = vadd.f32 %v2620, %v2621
      %v2623 = vsel %vm430, %v2496, 0.0
      %v2624 = vrot.slane %v2623, 4
      %v2625 = vadd.f32 %v2623, %v2624
      %v2626 = vrot.slane %v2625, 2
      %v2627 = vadd.f32 %v2625, %v2626
      %v2628 = vrot.slane %v2627, 1
      %v2629 = vadd.f32 %v2627, %v2628
      %v2630 = vsel %vm430, %v2498, 0.0
      %v2631 = vrot.slane %v2630, 4
      %v2632 = vadd.f32 %v2630, %v2631
      %v2633 = vrot.slane %v2632, 2
      %v2634 = vadd.f32 %v2632, %v2633
      %v2635 = vrot.slane %v2634, 1
      %v2636 = vadd.f32 %v2634, %v2635
      %v2637 = vsel %vm430, %v2500, 0.0
      %v2638 = vrot.slane %v2637, 4
      %v2639 = vadd.f32 %v2637, %v2638
      %v2640 = vrot.slane %v2639, 2
      %v2641 = vadd.f32 %v2639, %v2640
      %v2642 = vrot.slane %v2641, 1
      %v2643 = vadd.f32 %v2641, %v2642
      %v2644 = vsel %vm430, %v2502, 0.0
      %v2645 = vrot.slane %v2644, 4
      %v2646 = vadd.f32 %v2644, %v2645
      %v2647 = vrot.slane %v2646, 2
      %v2648 = vadd.f32 %v2646, %v2647
      %v2649 = vrot.slane %v2648, 1
      %v2650 = vadd.f32 %v2648, %v2649
      %v2651 = vsel %vm430, %v2504, 0.0
      %v2652 = vrot.slane %v2651, 4
      %v2653 = vadd.f32 %v2651, %v2652
      %v2654 = vrot.slane %v2653, 2
      %v2655 = vadd.f32 %v2653, %v2654
      %v2656 = vrot.slane %v2655, 1
      %v2657 = vadd.f32 %v2655, %v2656
      %v2658 = vsel %vm430, %v2506, 0.0
      %v2659 = vrot.slane %v2658, 4
      %v2660 = vadd.f32 %v2658, %v2659
      %v2661 = vrot.slane %v2660, 2
      %v2662 = vadd.f32 %v2660, %v2661
      %v2663 = vrot.slane %v2662, 1
      %v2664 = vadd.f32 %v2662, %v2663
      %v2665 = vsel %vm430, %v2508, 0.0
      %v2666 = vrot.slane %v2665, 4
      %v2667 = vadd.f32 %v2665, %v2666
      %v2668 = vrot.slane %v2667, 2
      %v2669 = vadd.f32 %v2667, %v2668
      %v2670 = vrot.slane %v2669, 1
      %v2671 = vadd.f32 %v2669, %v2670
      %v2672 = vsel %vm430, %v2510, 0.0
      %v2673 = vrot.slane %v2672, 4
      %v2674 = vadd.f32 %v2672, %v2673
      %v2675 = vrot.slane %v2674, 2
      %v2676 = vadd.f32 %v2674, %v2675
      %v2677 = vrot.slane %v2676, 1
      %v2678 = vadd.f32 %v2676, %v2677
      %v2679 = vrcp.pop %v2517
      %v2680 = vrcp.pop %v2524
      %v2681 = vrcp.pop %v2531
      %v2682 = vrcp.pop %v2538
      %v2683 = vrcp.pop %v2545
      %v2684 = vrcp.pop %v2552
      %v2685 = vrcp.pop %v2559
      %v2686 = vrcp.pop %v2566
      %v2687 = vrcp.pop %v2573
      %v2688 = vrcp.pop %v2580
      %v2689 = vrcp.pop %v2587
      %v2690 = vrcp.pop %v2594
      %v2691 = vrcp.pop %v2601
      %v2692 = vrcp.pop %v2608
      %v2693 = vrcp.pop %v2615
      %v2694 = vrcp.pop %v2622
      %v2695 = vrcp.pop %v2629
      %v2696 = vrcp.pop %v2636
      %v2697 = vrcp.pop %v2643
      %v2698 = vrcp.pop %v2650
      %v2699 = vrcp.pop %v2657
      %v2700 = vrcp.pop %v2664
      %v2701 = vrcp.pop %v2671
      %v2702 = vrcp.pop %v2678
      %v2703 = vmul.f32 %v2464, %v2679
      %v2704 = vmul.f32 %v2466, %v2680
      %v2705 = vmul.f32 %v2468, %v2681
      %v2706 = vmul.f32 %v2470, %v2682
      %v2707 = vmul.f32 %v2472, %v2683
      %v2708 = vmul.f32 %v2474, %v2684
      %v2709 = vmul.f32 %v2476, %v2685
      %v2710 = vmul.f32 %v2478, %v2686
      %v2711 = vmul.f32 %v2480, %v2687
      %v2712 = vmul.f32 %v2482, %v2688
      %v2713 = vmul.f32 %v2484, %v2689
      %v2714 = vmul.f32 %v2486, %v2690
      %v2715 = vmul.f32 %v2488, %v2691
      %v2716 = vmul.f32 %v2490, %v2692
      %v2717 = vmul.f32 %v2492, %v2693
      %v2718 = vmul.f32 %v2494, %v2694
      %v2719 = vmul.f32 %v2496, %v2695
      %v2720 = vmul.f32 %v2498, %v2696
      %v2721 = vmul.f32 %v2500, %v2697
      %v2722 = vmul.f32 %v2502, %v2698
      %v2723 = vmul.f32 %v2504, %v2699
      %v2724 = vmul.f32 %v2506, %v2700
      %v2725 = vmul.f32 %v2508, %v2701
      %v2726 = vmul.f32 %v2510, %v2702
      %v2727 = vadd.f32 %v649, %v1318
      %v2728 = vadd.f32 %v650, %v1321
      %v2729 = vadd.f32 %v651, %v1326
      %v2730 = vadd.f32 %v652, %v1329
      %v2731 = vadd.f32 %v653, %v1334
      %v2732 = vadd.f32 %v654, %v1337
      %v2733 = vadd.f32 %v655, %v1342
      %v2734 = vadd.f32 %v656, %v1345
      %v2735 = vadd.f32 %v657, %v1350
      %v2736 = vadd.f32 %v658, %v1353
      %v2737 = vadd.f32 %v659, %v1358
      %v2738 = vadd.f32 %v660, %v1361
      %v2739 = vadd.f32 %v661, %v1366
      %v2740 = vadd.f32 %v662, %v1369
      %v2741 = vadd.f32 %v663, %v1374
      %v2742 = vadd.f32 %v664, %v1377
      %v2743 = vadd.f32 %v665, %v1382
      %v2744 = vadd.f32 %v666, %v1385
      %v2745 = vadd.f32 %v667, %v1390
      %v2746 = vadd.f32 %v668, %v1393
      %v2747 = vadd.f32 %v669, %v1398
      %v2748 = vadd.f32 %v670, %v1401
      %v2749 = vadd.f32 %v671, %v1406
      %v2750 = vadd.f32 %v672, %v1409
      %2775 = vrot.lane.b32.xlu0 %v2703, 32
      %v2776 = vpop.permute.xlu0 %2775
      %2777 = vrot.lane.b32.xlu0 %v2704, 32
      %v2778 = vpop.permute.xlu0 %2777
      %2779 = vrot.lane.b32.xlu0 %v2705, 32
      %v2780 = vpop.permute.xlu0 %2779
      %2781 = vrot.lane.b32.xlu0 %v2706, 32
      %v2782 = vpop.permute.xlu0 %2781
      %2783 = vrot.lane.b32.xlu0 %v2707, 32
      %v2784 = vpop.permute.xlu0 %2783
      %2785 = vrot.lane.b32.xlu0 %v2708, 32
      %v2786 = vpop.permute.xlu0 %2785
      %2787 = vrot.lane.b32.xlu0 %v2709, 32
      %v2788 = vpop.permute.xlu0 %2787
      %2789 = vrot.lane.b32.xlu0 %v2710, 32
      %v2790 = vpop.permute.xlu0 %2789
      %2791 = vrot.lane.b32.xlu0 %v2711, 32
      %v2792 = vpop.permute.xlu0 %2791
      %2793 = vrot.lane.b32.xlu0 %v2712, 32
      %v2794 = vpop.permute.xlu0 %2793
      %2795 = vrot.lane.b32.xlu0 %v2713, 32
      %v2796 = vpop.permute.xlu0 %2795
      %2797 = vrot.lane.b32.xlu0 %v2714, 32
      %v2798 = vpop.permute.xlu0 %2797
      %2799 = vrot.lane.b32.xlu0 %v2715, 32
      %v2800 = vpop.permute.xlu0 %2799
      %2801 = vrot.lane.b32.xlu0 %v2716, 32
      %v2802 = vpop.permute.xlu0 %2801
      %2803 = vrot.lane.b32.xlu0 %v2717, 32
      %v2804 = vpop.permute.xlu0 %2803
      %2805 = vrot.lane.b32.xlu0 %v2718, 32
      %v2806 = vpop.permute.xlu0 %2805
      %2807 = vrot.lane.b32.xlu0 %v2719, 32
      %v2808 = vpop.permute.xlu0 %2807
      %2809 = vrot.lane.b32.xlu0 %v2720, 32
      %v2810 = vpop.permute.xlu0 %2809
      %2811 = vrot.lane.b32.xlu0 %v2721, 32
      %v2812 = vpop.permute.xlu0 %2811
      %2813 = vrot.lane.b32.xlu0 %v2722, 32
      %v2814 = vpop.permute.xlu0 %2813
      %2815 = vrot.lane.b32.xlu0 %v2723, 32
      %v2816 = vpop.permute.xlu0 %2815
      %2817 = vrot.lane.b32.xlu0 %v2724, 32
      %v2818 = vpop.permute.xlu0 %2817
      %2819 = vrot.lane.b32.xlu0 %v2725, 32
      %v2820 = vpop.permute.xlu0 %2819
      %2821 = vrot.lane.b32.xlu0 %v2726, 32
      %v2822 = vpop.permute.xlu0 %2821
      %v2847 = vmul.f32 %v2727, %v2776
      %v2848 = vmul.f32 %v2728, %v2778
      %v2849 = vmul.f32 %v2729, %v2780
      %v2850 = vmul.f32 %v2730, %v2782
      %v2851 = vmul.f32 %v2731, %v2784
      %v2852 = vmul.f32 %v2732, %v2786
      %v2853 = vmul.f32 %v2733, %v2788
      %v2854 = vmul.f32 %v2734, %v2790
      %v2855 = vmul.f32 %v2735, %v2792
      %v2856 = vmul.f32 %v2736, %v2794
      %v2857 = vmul.f32 %v2737, %v2796
      %v2858 = vmul.f32 %v2738, %v2798
      %v2859 = vmul.f32 %v2739, %v2800
      %v2860 = vmul.f32 %v2740, %v2802
      %v2861 = vmul.f32 %v2741, %v2804
      %v2862 = vmul.f32 %v2742, %v2806
      %v2863 = vmul.f32 %v2743, %v2808
      %v2864 = vmul.f32 %v2744, %v2810
      %v2865 = vmul.f32 %v2745, %v2812
      %v2866 = vmul.f32 %v2746, %v2814
      %v2867 = vmul.f32 %v2747, %v2816
      %v2868 = vmul.f32 %v2748, %v2818
      %v2869 = vmul.f32 %v2749, %v2820
      %v2870 = vmul.f32 %v2750, %v2822
      %vm2871 = vcmask 523520
      %v2872 = vsel %vm2871, %v2847, 0.0
      %v2873 = vrot.slane %v2872, 4
      %v2874 = vadd.f32 %v2872, %v2873
      %v2875 = vrot.slane %v2874, 2
      %v2876 = vadd.f32 %v2874, %v2875
      %v2877 = vrot.slane %v2876, 1
      %v2878 = vadd.f32 %v2876, %v2877
      %v2879 = vsel %vm2871, %v2848, 0.0
      %v2880 = vrot.slane %v2879, 4
      %v2881 = vadd.f32 %v2879, %v2880
      %v2882 = vrot.slane %v2881, 2
      %v2883 = vadd.f32 %v2881, %v2882
      %v2884 = vrot.slane %v2883, 1
      %v2885 = vadd.f32 %v2883, %v2884
      %v2886 = vsel %vm2871, %v2849, 0.0
      %v2887 = vrot.slane %v2886, 4
      %v2888 = vadd.f32 %v2886, %v2887
      %v2889 = vrot.slane %v2888, 2
      %v2890 = vadd.f32 %v2888, %v2889
      %v2891 = vrot.slane %v2890, 1
      %v2892 = vadd.f32 %v2890, %v2891
      %v2893 = vsel %vm2871, %v2850, 0.0
      %v2894 = vrot.slane %v2893, 4
      %v2895 = vadd.f32 %v2893, %v2894
      %v2896 = vrot.slane %v2895, 2
      %v2897 = vadd.f32 %v2895, %v2896
      %v2898 = vrot.slane %v2897, 1
      %v2899 = vadd.f32 %v2897, %v2898
      %v2900 = vsel %vm2871, %v2851, 0.0
      %v2901 = vrot.slane %v2900, 4
      %v2902 = vadd.f32 %v2900, %v2901
      %v2903 = vrot.slane %v2902, 2
      %v2904 = vadd.f32 %v2902, %v2903
      %v2905 = vrot.slane %v2904, 1
      %v2906 = vadd.f32 %v2904, %v2905
      %v2907 = vsel %vm2871, %v2852, 0.0
      %v2908 = vrot.slane %v2907, 4
      %v2909 = vadd.f32 %v2907, %v2908
      %v2910 = vrot.slane %v2909, 2
      %v2911 = vadd.f32 %v2909, %v2910
      %v2912 = vrot.slane %v2911, 1
      %v2913 = vadd.f32 %v2911, %v2912
      %v2914 = vsel %vm2871, %v2853, 0.0
      %v2915 = vrot.slane %v2914, 4
      %v2916 = vadd.f32 %v2914, %v2915
      %v2917 = vrot.slane %v2916, 2
      %v2918 = vadd.f32 %v2916, %v2917
      %v2919 = vrot.slane %v2918, 1
      %v2920 = vadd.f32 %v2918, %v2919
      %v2921 = vsel %vm2871, %v2854, 0.0
      %v2922 = vrot.slane %v2921, 4
      %v2923 = vadd.f32 %v2921, %v2922
      %v2924 = vrot.slane %v2923, 2
      %v2925 = vadd.f32 %v2923, %v2924
      %v2926 = vrot.slane %v2925, 1
      %v2927 = vadd.f32 %v2925, %v2926
      %v2928 = vsel %vm2871, %v2855, 0.0
      %v2929 = vrot.slane %v2928, 4
      %v2930 = vadd.f32 %v2928, %v2929
      %v2931 = vrot.slane %v2930, 2
      %v2932 = vadd.f32 %v2930, %v2931
      %v2933 = vrot.slane %v2932, 1
      %v2934 = vadd.f32 %v2932, %v2933
      %v2935 = vsel %vm2871, %v2856, 0.0
      %v2936 = vrot.slane %v2935, 4
      %v2937 = vadd.f32 %v2935, %v2936
      %v2938 = vrot.slane %v2937, 2
      %v2939 = vadd.f32 %v2937, %v2938
      %v2940 = vrot.slane %v2939, 1
      %v2941 = vadd.f32 %v2939, %v2940
      %v2942 = vsel %vm2871, %v2857, 0.0
      %v2943 = vrot.slane %v2942, 4
      %v2944 = vadd.f32 %v2942, %v2943
      %v2945 = vrot.slane %v2944, 2
      %v2946 = vadd.f32 %v2944, %v2945
      %v2947 = vrot.slane %v2946, 1
      %v2948 = vadd.f32 %v2946, %v2947
      %v2949 = vsel %vm2871, %v2858, 0.0
      %v2950 = vrot.slane %v2949, 4
      %v2951 = vadd.f32 %v2949, %v2950
      %v2952 = vrot.slane %v2951, 2
      %v2953 = vadd.f32 %v2951, %v2952
      %v2954 = vrot.slane %v2953, 1
      %v2955 = vadd.f32 %v2953, %v2954
      %v2956 = vsel %vm2871, %v2859, 0.0
      %v2957 = vrot.slane %v2956, 4
      %v2958 = vadd.f32 %v2956, %v2957
      %v2959 = vrot.slane %v2958, 2
      %v2960 = vadd.f32 %v2958, %v2959
      %v2961 = vrot.slane %v2960, 1
      %v2962 = vadd.f32 %v2960, %v2961
      %v2963 = vsel %vm2871, %v2860, 0.0
      %v2964 = vrot.slane %v2963, 4
      %v2965 = vadd.f32 %v2963, %v2964
      %v2966 = vrot.slane %v2965, 2
      %v2967 = vadd.f32 %v2965, %v2966
      %v2968 = vrot.slane %v2967, 1
      %v2969 = vadd.f32 %v2967, %v2968
      %v2970 = vsel %vm2871, %v2861, 0.0
      %v2971 = vrot.slane %v2970, 4
      %v2972 = vadd.f32 %v2970, %v2971
      %v2973 = vrot.slane %v2972, 2
      %v2974 = vadd.f32 %v2972, %v2973
      %v2975 = vrot.slane %v2974, 1
      %v2976 = vadd.f32 %v2974, %v2975
      %v2977 = vsel %vm2871, %v2862, 0.0
      %v2978 = vrot.slane %v2977, 4
      %v2979 = vadd.f32 %v2977, %v2978
      %v2980 = vrot.slane %v2979, 2
      %v2981 = vadd.f32 %v2979, %v2980
      %v2982 = vrot.slane %v2981, 1
      %v2983 = vadd.f32 %v2981, %v2982
      %v2984 = vsel %vm2871, %v2863, 0.0
      %v2985 = vrot.slane %v2984, 4
      %v2986 = vadd.f32 %v2984, %v2985
      %v2987 = vrot.slane %v2986, 2
      %v2988 = vadd.f32 %v2986, %v2987
      %v2989 = vrot.slane %v2988, 1
      %v2990 = vadd.f32 %v2988, %v2989
      %v2991 = vsel %vm2871, %v2864, 0.0
      %v2992 = vrot.slane %v2991, 4
      %v2993 = vadd.f32 %v2991, %v2992
      %v2994 = vrot.slane %v2993, 2
      %v2995 = vadd.f32 %v2993, %v2994
      %v2996 = vrot.slane %v2995, 1
      %v2997 = vadd.f32 %v2995, %v2996
      %v2998 = vsel %vm2871, %v2865, 0.0
      %v2999 = vrot.slane %v2998, 4
      %v3000 = vadd.f32 %v2998, %v2999
      %v3001 = vrot.slane %v3000, 2
      %v3002 = vadd.f32 %v3000, %v3001
      %v3003 = vrot.slane %v3002, 1
      %v3004 = vadd.f32 %v3002, %v3003
      %v3005 = vsel %vm2871, %v2866, 0.0
      %v3006 = vrot.slane %v3005, 4
      %v3007 = vadd.f32 %v3005, %v3006
      %v3008 = vrot.slane %v3007, 2
      %v3009 = vadd.f32 %v3007, %v3008
      %v3010 = vrot.slane %v3009, 1
      %v3011 = vadd.f32 %v3009, %v3010
      %v3012 = vsel %vm2871, %v2867, 0.0
      %v3013 = vrot.slane %v3012, 4
      %v3014 = vadd.f32 %v3012, %v3013
      %v3015 = vrot.slane %v3014, 2
      %v3016 = vadd.f32 %v3014, %v3015
      %v3017 = vrot.slane %v3016, 1
      %v3018 = vadd.f32 %v3016, %v3017
      %v3019 = vsel %vm2871, %v2868, 0.0
      %v3020 = vrot.slane %v3019, 4
      %v3021 = vadd.f32 %v3019, %v3020
      %v3022 = vrot.slane %v3021, 2
      %v3023 = vadd.f32 %v3021, %v3022
      %v3024 = vrot.slane %v3023, 1
      %v3025 = vadd.f32 %v3023, %v3024
      %v3026 = vsel %vm2871, %v2869, 0.0
      %v3027 = vrot.slane %v3026, 4
      %v3028 = vadd.f32 %v3026, %v3027
      %v3029 = vrot.slane %v3028, 2
      %v3030 = vadd.f32 %v3028, %v3029
      %v3031 = vrot.slane %v3030, 1
      %v3032 = vadd.f32 %v3030, %v3031
      %v3033 = vsel %vm2871, %v2870, 0.0
      %v3034 = vrot.slane %v3033, 4
      %v3035 = vadd.f32 %v3033, %v3034
      %v3036 = vrot.slane %v3035, 2
      %v3037 = vadd.f32 %v3035, %v3036
      %v3038 = vrot.slane %v3037, 1
      %v3039 = vadd.f32 %v3037, %v3038
      %v3040 = vld [vmem:[%s7 + $0x4] sm:$0x1]
      %v3041 = vlaneseq
      %v3042 = vshrl.u32 %v3041, 7
      %v3043 = vsub.s32 0, %v3042
      %v3044 = vrot.slane %v3040, %v3043
      %3046 = vrot.lane.b32.xlu0 %v3044, 32
      %v3047 = vpop.permute.xlu0 %3046
      %v3049 = vmul.f32 %v2878, %v3047
      %v3050 = vmul.f32 %v2885, %v3047
      %v3051 = vmul.f32 %v2892, %v3047
      %v3052 = vmul.f32 %v2899, %v3047
      %v3053 = vmul.f32 %v2906, %v3047
      %v3054 = vmul.f32 %v2913, %v3047
      %v3055 = vmul.f32 %v2920, %v3047
      %v3056 = vmul.f32 %v2927, %v3047
      %v3057 = vmul.f32 %v2934, %v3047
      %v3058 = vmul.f32 %v2941, %v3047
      %v3059 = vmul.f32 %v2948, %v3047
      %v3060 = vmul.f32 %v2955, %v3047
      %v3061 = vmul.f32 %v2962, %v3047
      %v3062 = vmul.f32 %v2969, %v3047
      %v3063 = vmul.f32 %v2976, %v3047
      %v3064 = vmul.f32 %v2983, %v3047
      %v3065 = vmul.f32 %v2990, %v3047
      %v3066 = vmul.f32 %v2997, %v3047
      %v3067 = vmul.f32 %v3004, %v3047
      %v3068 = vmul.f32 %v3011, %v3047
      %v3069 = vmul.f32 %v3018, %v3047
      %v3070 = vmul.f32 %v3025, %v3047
      %v3071 = vmul.f32 %v3032, %v3047
      %v3072 = vmul.f32 %v3039, %v3047
      %v3073 = vld [vmem:[%s7 + $0x5] sm:$0x1]
      %v3074 = vlaneseq
      %v3075 = vshrl.u32 %v3074, 7
      %v3076 = vsub.s32 0, %v3075
      %v3077 = vrot.slane %v3073, %v3076
      %3079 = vrot.lane.b32.xlu0 %v3077, 32
      %v3080 = vpop.permute.xlu0 %3079
      %v3082 = vadd.f32 %v3049, %v3080
      %v3083 = vadd.f32 %v3050, %v3080
      %v3084 = vadd.f32 %v3051, %v3080
      %v3085 = vadd.f32 %v3052, %v3080
      %v3086 = vadd.f32 %v3053, %v3080
      %v3087 = vadd.f32 %v3054, %v3080
      %v3088 = vadd.f32 %v3055, %v3080
      %v3089 = vadd.f32 %v3056, %v3080
      %v3090 = vadd.f32 %v3057, %v3080
      %v3091 = vadd.f32 %v3058, %v3080
      %v3092 = vadd.f32 %v3059, %v3080
      %v3093 = vadd.f32 %v3060, %v3080
      %v3094 = vadd.f32 %v3061, %v3080
      %v3095 = vadd.f32 %v3062, %v3080
      %v3096 = vadd.f32 %v3063, %v3080
      %v3097 = vadd.f32 %v3064, %v3080
      %v3098 = vadd.f32 %v3065, %v3080
      %v3099 = vadd.f32 %v3066, %v3080
      %v3100 = vadd.f32 %v3067, %v3080
      %v3101 = vadd.f32 %v3068, %v3080
      %v3102 = vadd.f32 %v3069, %v3080
      %v3103 = vadd.f32 %v3070, %v3080
      %v3104 = vadd.f32 %v3071, %v3080
      %v3105 = vadd.f32 %v3072, %v3080
      %v3106 = vmax.f32 %v3082, 0.0
      %v3107 = vmax.f32 %v3083, 0.0
      %v3108 = vmax.f32 %v3084, 0.0
      %v3109 = vmax.f32 %v3085, 0.0
      %v3110 = vmax.f32 %v3086, 0.0
      %v3111 = vmax.f32 %v3087, 0.0
      %v3112 = vmax.f32 %v3088, 0.0
      %v3113 = vmax.f32 %v3089, 0.0
      %v3114 = vmax.f32 %v3090, 0.0
      %v3115 = vmax.f32 %v3091, 0.0
      %v3116 = vmax.f32 %v3092, 0.0
      %v3117 = vmax.f32 %v3093, 0.0
      %v3118 = vmax.f32 %v3094, 0.0
      %v3119 = vmax.f32 %v3095, 0.0
      %v3120 = vmax.f32 %v3096, 0.0
      %v3121 = vmax.f32 %v3097, 0.0
      %v3122 = vmax.f32 %v3098, 0.0
      %v3123 = vmax.f32 %v3099, 0.0
      %v3124 = vmax.f32 %v3100, 0.0
      %v3125 = vmax.f32 %v3101, 0.0
      %v3126 = vmax.f32 %v3102, 0.0
      %v3127 = vmax.f32 %v3103, 0.0
      %v3128 = vmax.f32 %v3104, 0.0
      %v3129 = vmax.f32 %v3105, 0.0
      %s3130 = scalar_lea.vmem %s3, 64
      %v3131 = vld [vmem:[%s3130] sm:$0xff]
      %v3132 = vld [vmem:[%s3130 + $0x8] sm:$0xff]
      %v3133 = vld [vmem:[%s3130 + $0x10] sm:$0xff]
      %v3134 = vld [vmem:[%s3130 + $0x18] sm:$0xff]
      %v3135 = vld [vmem:[%s7 + $0x6] sm:$0x1]
      %v3136 = vlaneseq
      %v3137 = vshrl.u32 %v3136, 7
      %v3138 = vsub.s32 0, %v3137
      %v3139 = vrot.slane %v3135, %v3138
      %v3164 = vrot.slane %v3107, 7
      %vm3165 = vcmask 1041409
      %v3166 = vsel %vm3165, %v3164, %v3106
      %v3167 = vrot.slane %v3108, 6
      %vm3168 = vcmask 1042434
      %v3169 = vsel %vm3168, %v3167, %v3166
      %v3170 = vrot.slane %v3109, 5
      %vm3171 = vcmask 1043459
      %v3172 = vsel %vm3171, %v3170, %v3169
      %v3173 = vrot.slane %v3110, 4
      %vm3174 = vcmask 1044484
      %v3175 = vsel %vm3174, %v3173, %v3172
      %v3176 = vrot.slane %v3111, 3
      %vm3177 = vcmask 1045509
      %v3178 = vsel %vm3177, %v3176, %v3175
      %v3179 = vrot.slane %v3112, 2
      %vm3180 = vcmask 1046534
      %v3181 = vsel %vm3180, %v3179, %v3178
      %v3182 = vrot.slane %v3113, 1
      %vm3183 = vcmask 1047559
      %v3184 = vsel %vm3183, %v3182, %v3181
      %v3185 = vrot.slane %v3115, 7
      %v3186 = vsel %vm3165, %v3185, %v3114
      %v3187 = vrot.slane %v3116, 6
      %v3188 = vsel %vm3168, %v3187, %v3186
      %v3189 = vrot.slane %v3117, 5
      %v3190 = vsel %vm3171, %v3189, %v3188
      %v3191 = vrot.slane %v3118, 4
      %v3192 = vsel %vm3174, %v3191, %v3190
      %v3193 = vrot.slane %v3119, 3
      %v3194 = vsel %vm3177, %v3193, %v3192
      %v3195 = vrot.slane %v3120, 2
      %v3196 = vsel %vm3180, %v3195, %v3194
      %v3197 = vrot.slane %v3121, 1
      %v3198 = vsel %vm3183, %v3197, %v3196
      %v3199 = vrot.slane %v3123, 7
      %v3200 = vsel %vm3165, %v3199, %v3122
      %v3201 = vrot.slane %v3124, 6
      %v3202 = vsel %vm3168, %v3201, %v3200
      %v3203 = vrot.slane %v3125, 5
      %v3204 = vsel %vm3171, %v3203, %v3202
      %v3205 = vrot.slane %v3126, 4
      %v3206 = vsel %vm3174, %v3205, %v3204
      %v3207 = vrot.slane %v3127, 3
      %v3208 = vsel %vm3177, %v3207, %v3206
      %v3209 = vrot.slane %v3128, 2
      %v3210 = vsel %vm3180, %v3209, %v3208
      %v3211 = vrot.slane %v3129, 1
      %v3212 = vsel %vm3183, %v3211, %v3210
      %3213 = vrot.lane.b32.xlu0 %v3184, 96
      %v3214 = vpop.permute.xlu0 %3213
      %3215 = vrot.lane.b32.xlu0 %v3198, 96
      %v3216 = vpop.permute.xlu0 %3215
      %3217 = vrot.lane.b32.xlu0 %v3212, 96
      %v3218 = vpop.permute.xlu0 %3217
      %v3219 = vsel %vm430, %v3214, 0
      %v3221 = vsel %vm430, %v3216, 0
      %v3223 = vsel %vm430, %v3218, 0
      %3225 = vmatprep.subr.mxu0 0.0
      %3226 = vmatpush1.msra.mxu0 %v3131
      %3227 = vmatprep.subr.mxu0 0.0
      %3228 = vmatpush1.msra.mxu0 %v3132
      %3229 = vmatprep.subr.mxu0 0.0
      %3230 = vmatpush1.msra.mxu0 %v3133
      %3231 = vmatprep.subr.mxu0 0.0
      %3232 = vmatpush1.msra.mxu0 %v3134
      %3233 = vmatprep.subr.mxu0 0.0
      %3234 = vmatpush1.msra.mxu0 0.0
      %3235 = vmatprep.subr.mxu0 0.0
      %3236 = vmatpush1.msra.mxu0 0.0
      %3237 = vmatprep.subr.mxu0 0.0
      %3238 = vmatpush1.msra.mxu0 0.0
      %3239 = vmatprep.subr.mxu0 0.0
      %3240 = vmatpush1.msra.mxu0 0.0
      %3241 = vmatprep.subr.mxu0 0.0
      %3242 = vmatpush1.msra.mxu0 0.0
      %3243 = vmatprep.subr.mxu0 0.0
      %3244 = vmatpush1.msra.mxu0 0.0
      %3245 = vmatprep.subr.mxu0 0.0
      %3246 = vmatpush1.msra.mxu0 0.0
      %3247 = vmatprep.subr.mxu0 0.0
      %3248 = vmatpush1.msra.mxu0 0.0
      %3249 = vmatprep.subr.mxu0 0.0
      %3250 = vmatpush1.msra.mxu0 0.0
      %3251 = vmatprep.subr.mxu0 0.0
      %3252 = vmatpush1.msra.mxu0 0.0
      %3253 = vmatprep.subr.mxu0 0.0
      %3254 = vmatpush1.msra.mxu0 0.0
      %3255 = vmatprep.subr.mxu0 0.0
      %3256 = vmatpush1.msra.mxu0 0.0
      %3257 = vmatprep.subr.mxu0 0.0
      %3258 = vmatpush1.msra.mxu0 0.0
      %3259 = vmatprep.subr.mxu0 0.0
      %3260 = vmatpush1.msra.mxu0 0.0
      %3261 = vmatprep.subr.mxu0 0.0
      %3262 = vmatpush1.msra.mxu0 0.0
      %3263 = vmatprep.subr.mxu0 0.0
      %3264 = vmatpush1.msra.mxu0 0.0
      %3265 = vmatprep.subr.mxu0 0.0
      %3266 = vmatpush1.msra.mxu0 0.0
      %3267 = vmatprep.subr.mxu0 0.0
      %3268 = vmatpush1.msra.mxu0 0.0
      %3269 = vmatprep.subr.mxu0 0.0
      %3270 = vmatpush1.msra.mxu0 0.0
      %3271 = vmatprep.subr.mxu0 0.0
      %3272 = vmatpush1.msra.mxu0 0.0
      %3273 = vmatprep.subr.mxu0 0.0
      %3274 = vmatpush1.msra.mxu0 0.0
      %3275 = vmatprep.subr.mxu0 0.0
      %3276 = vmatpush1.msra.mxu0 0.0
      %3277 = vmatprep.subr.mxu0 0.0
      %3278 = vmatpush1.msra.mxu0 0.0
      %3279 = vmatprep.subr.mxu0 0.0
      %3280 = vmatpush1.msra.mxu0 0.0
      %3281 = vmatprep.subr.mxu0 0.0
      %3282 = vmatpush1.msra.mxu0 0.0
      %3283 = vmatprep.subr.mxu0 0.0
      %3284 = vmatpush1.msra.mxu0 0.0
      %3285 = vmatprep.subr.mxu0 0.0
      %3286 = vmatpush1.msra.mxu0 0.0
      %3287 = vmatprep.subr.mxu0 0.0
      %3288 = vmatpush1.msra.mxu0 0.0
      %3289 = vmatprep.mubr.f32.mxu0 0.0
      %3290 = vmatmul.mubr.f32.gmra.mrb[0].mxu0 %v3219
      %v3291 = vpop.f32.mrb[0].mxu0
      %v3292 = vadd.f32 %v3139, %v3291
      %v3293 = vpop.f32.mrb[0].mxu0
      %3294 = vmatprep.mubr.f32.mxu0 0.0
      %3295 = vmatmul.mubr.f32.gmra.mrb[0].mxu0 %v3221
      %v3296 = vpop.f32.mrb[0].mxu0
      %v3297 = vadd.f32 %v3139, %v3296
      %v3298 = vpop.f32.mrb[0].mxu0
      %3299 = vmatprep.mubr.f32.mxu0 0.0
      %3300 = vmatmul.mubr.f32.gmra.mrb[0].mxu0 %v3223
      %v3301 = vpop.f32.mrb[0].mxu0
      %v3302 = vadd.f32 %v3139, %v3301
      %v3303 = vpop.f32.mrb[0].mxu0
      %3304 = vdwg.mxu0
      %v3305 = vadd.f32 %v418, %v3292
      %v3306 = vadd.f32 %v419, %v3297
      %v3307 = vadd.f32 %v420, %v3302
      %v3308 = vmax.f32 %v3305, 0.0
      %v3309 = vmax.f32 %v3306, 0.0
      %v3310 = vmax.f32 %v3307, 0.0
      %3311 = vst.msk [vmem:[%s415] sm:$0xff] %vm430, %v3308
      %3312 = vst.msk [vmem:[%s415 + $0x8] sm:$0xff] %vm430, %v3309
      %3313 = vst.msk [vmem:[%s415 + $0x10] sm:$0xff] %vm430, %v3310
      %s3314 = smul.u32 3, %s24
      %p3315 = scmp.lt.s32.totalorder %s23, 1
      %s3316 = scalar_select %p3315, %s23, 1
      %p3317 = scmp.lt.s32.totalorder %s3314, 2
      %s3318 = scalar_select %p3317, %s3314, 2
      %s3319 = smul.addr %s3316, 3
      %s3320 = sadd.s32 %s3318, %s3319
      %s3321 = smul.addr %s3320, 8
      %s3322 = scalar_lea.vmem %s8, %s3321
      // Predicated region
      $region53: #{run.3} parent=51 // pred_check
        %p3323 = pneg %p240
      $region54: #{run.3} parent=51 // pred_check_branch
        %3325 = sbr.rel (%p3323) target = $region56
      $region55: #{run.3} parent=51 // pred_region
        %s3326 = smul.u32 3, %s24
      $region56: #{run.3} parent=51 // pred_fallthru
        _
    $region52: #{run.3} parent=5 // pred_fallthru
      _
    %p3327 = scmp.le.s32.totalorder 2, %s14
    // Predicated region
    $region57: #{run.3} parent=5 // pred_check
      %p3328 = pneg %p3327
    $region58: #{run.3} parent=5 // pred_check_branch
      %3330 = sbr.rel (%p3328) target = $region60
    $region59: #{run.3} parent=5 // pred_region
      %s3331 = ssub.s32 %s14, 2
      // Predicated region
      $region61: #{run.3} parent=59 // pred_check
        %p3332 = pneg %p246
      $region62: #{run.3} parent=59 // pred_check_branch
        %3334 = sbr.rel (%p3332) target = $region64
      $region63: #{run.3} parent=59 // pred_region
        %s3335 = smul.u32 3, %s26
        %p3336 = scmp.lt.s32.totalorder %s25, 1
        %s3337 = scalar_select %p3336, %s25, 1
        %p3338 = scmp.lt.s32.totalorder %s3335, 2
        %s3339 = scalar_select %p3338, %s3335, 2
        %s3340 = smul.addr %s3337, 3
        %s3341 = sadd.s32 %s3339, %s3340
        %s3342 = smul.addr %s3341, 8
        %s3343 = scalar_lea.vmem %s8, %s3342
      $region64: #{run.3} parent=59 // pred_fallthru
        _
    $region60: #{run.3} parent=5 // pred_fallthru
      _
  $region6: #{run.3} parent=0 // loop_footer
    %s18 = sadd.s32 1, %s14
  $region7: #{run.3} parent=0 // loop_footer_branch
    %13 = sbr.rel target = $region3
  $region8: #{run.3} parent=0 // loop_exit
    _

</llo_original>
